<compile_context>
chip_gen: v7x
topology: tpu7x:2x2x1
jax: 0.10.0
libtpu: 0.0.40
codegen_flags: <defaults>
</compile_context>

<pallas_src>
import functools

import jax
import jax.numpy as jnp
from jax.experimental import pallas as pl
from jax.experimental.pallas import tpu as pltpu


# ---------------------------------------------------------------------------
# Fused Pallas kernel:
#   per (patch, channel): mean/std over spatial S, normalize, style affine, ReLU.
# ---------------------------------------------------------------------------
def ppin_fused_kernel(x_ref, sstd_ref, smean_ref, o_ref, mean_ref, std_ref,
                      *, eps, spatial):
    x = x_ref[...].astype(jnp.float32)                     # (TN, C, S)
    mean = jnp.mean(x, axis=-1, keepdims=True)             # (TN, C, 1)
    centered = x - mean
    # torch .var(dim=2) is unbiased (ddof=1); eps is added to var before sqrt.
    denom = 1.0 / (spatial - 1) if spatial > 1 else 1.0
    var = jnp.sum(centered * centered, axis=-1, keepdims=True) * denom
    std = jnp.sqrt(var + eps)                              # (TN, C, 1)

    # relu( (x - mean)/std * style_std + style_mean )
    # scale is only (TN, C, 1), so the divide is tiny; it broadcasts over S lanes.
    scale = sstd_ref[...].astype(jnp.float32) / std
    y = centered * scale + smean_ref[...].astype(jnp.float32)
    o_ref[...] = jnp.maximum(y, 0.0).astype(o_ref.dtype)

    mean_ref[...] = mean
    std_ref[...] = std


def _choose_tn(n_patches, c, s, dtype_bytes=4,
               max_block_bytes=2 << 20, min_split_bytes=512 << 10, tn_cap=8):
    """Patches per grid step: divisor of N, block <= ~2 MiB, TN <= 8 (VMEM-safe even on
    v7x), preferring >= 2 grid blocks when blocks stay >= ~512 KiB (2 TensorCores)."""
    per_patch = max(1, c * s * dtype_bytes)
    cap = max(1, min(tn_cap, max_block_bytes // per_patch))
    divisors = [d for d in range(1, n_patches + 1) if n_patches % d == 0 and d <= cap]
    if not divisors:
        divisors = [1]
    split_ok = [d for d in divisors
                if n_patches // d >= 2 and d * per_patch >= min_split_bytes]
    return max(split_ok) if split_ok else max(divisors)


def ppin_forward_fused(patches_raw, style_std, style_mean, eps=1e-5):
    """Fused init-normalization + forward.

    patches_raw: (N, C, k, k) raw (un-normalized) selected patches.
    style_std, style_mean: (N, C, 1, 1) style parameters (at module init these equal the
        per-patch stats; they are trainable nn.Parameters so any values are valid).
    Returns (patches_prime, mean, std): (N, C, k, k), (N, C, 1, 1), (N, C, 1, 1).
    """
    N, C, k, _ = patches_raw.shape
    S = k * k
    x = patches_raw.reshape(N, C, S)
    sstd = style_std.reshape(N, C, 1).astype(jnp.float32)
    smean = style_mean.reshape(N, C, 1).astype(jnp.float32)

    TN = _choose_tn(N, C, S, dtype_bytes=jnp.dtype(patches_raw.dtype).itemsize)
    grid = (N // TN,)

    kernel = functools.partial(ppin_fused_kernel, eps=eps, spatial=S)

    out, mean, std = pl.pallas_call(
        kernel,
        out_shape=(
            jax.ShapeDtypeStruct((N, C, S), patches_raw.dtype),
            jax.ShapeDtypeStruct((N, C, 1), jnp.float32),
            jax.ShapeDtypeStruct((N, C, 1), jnp.float32),
        ),
        grid_spec=pltpu.PrefetchScalarGridSpec(
            num_scalar_prefetch=0,
            grid=grid,
            in_specs=[
                pl.BlockSpec((TN, C, S), lambda i: (i, 0, 0)),
                pl.BlockSpec((TN, C, 1), lambda i: (i, 0, 0)),
                pl.BlockSpec((TN, C, 1), lambda i: (i, 0, 0)),
            ],
            out_specs=(
                pl.BlockSpec((TN, C, S), lambda i: (i, 0, 0)),
                pl.BlockSpec((TN, C, 1), lambda i: (i, 0, 0)),
                pl.BlockSpec((TN, C, 1), lambda i: (i, 0, 0)),
            ),
        ),
        compiler_params=pltpu.CompilerParams(
            dimension_semantics=("parallel",)),
    )(x, sstd, smean)

    return (out.reshape(N, C, k, k),
            mean.reshape(N, C, 1, 1),
            std.reshape(N, C, 1, 1))


# ---------------------------------------------------------------------------
# Patch extraction (unfold + permute + reshape + index select) — plain JAX glue.
# ---------------------------------------------------------------------------
def extract_patches(content_feat, div, ind):
    """torch: unfold(kernel=k, stride=k).permute(-1,0,1).reshape(-1, 256, k, k)[ind]
    == non-overlapping k x k tiling with flat patch index p = (lh*div + lw)*B + b."""
    B, C, H, W = content_feat.shape
    k = H // div
    x = content_feat.reshape(B, C, div, k, div, k)
    x = jnp.transpose(x, (2, 4, 0, 1, 3, 5)).reshape(div * div * B, C, k, k)
    return x[jnp.asarray(ind)]


if __name__ == "__main__":
    key = jax.random.PRNGKey(0)

    # The module hardcodes 256 channels in its reshape, so C must be 256.
    B, C, side, div = 2, 256, 48, 3          # k = new_side = 16, 18 patches total
    ind = [0, 4, 8]                          # selected patch indices, N = 3

    content_feat = jax.random.normal(key, (B, C, side, side), dtype=jnp.float32)
    patches_raw = extract_patches(content_feat, div, ind)          # (3, 256, 16, 16)

    # Reference per-patch instance-norm stats (what the module stores as parameters).
    N, _, k, _ = patches_raw.shape
    flat = patches_raw.reshape(N, C, -1)
    mean_ref = jnp.mean(flat, axis=2).reshape(N, C, 1, 1)
    std_ref = jnp.sqrt(jnp.var(flat, axis=2, ddof=1) + 1e-5).reshape(N, C, 1, 1)

    # Permute the style parameters across patches so the affine path is non-trivial
    # (at exact init the affine would cancel the normalization and reduce to relu(raw)).
    # style_mean/std are trainable nn.Parameters, so arbitrary values are valid inputs.
    style_mean = jnp.roll(mean_ref, shift=1, axis=0)
    style_std = jnp.roll(std_ref, shift=1, axis=0)

    # Fused Pallas pass: stats + normalize + affine + ReLU.
    out, mean_k, std_k = ppin_forward_fused(patches_raw, style_std, style_mean)
    out = jax.block_until_ready(out)

    # Pure-JAX reference of the module semantics.
    patches_norm = (patches_raw - mean_ref) / std_ref
    ref = jnp.maximum(patches_norm * style_std + style_mean, 0.0)

    assert out.shape == (N, C, k, k)
    assert out.dtype == jnp.float32
    assert jnp.allclose(mean_k, mean_ref, atol=1e-5, rtol=1e-5)
    assert jnp.allclose(std_k, std_ref, atol=1e-5, rtol=1e-5)
    assert jnp.allclose(out, ref, atol=1e-4, rtol=1e-4)

    # TODO(synk): autograd/training of style_mean/style_std (nn.Parameter) is out of
    # scope for this forward-only kernel.
    print("KERNEL_OK")
</pallas_src>

<mosaic_0001>
module attributes {stable_mosaic.version = 11 : i64} {
  func.func @ppin_fused_kernel(%arg0: i32, %arg1: memref<3x256x256xf32, #tpu.memory_space<vmem>>, %arg2: memref<3x256x1xf32, #tpu.memory_space<vmem>>, %arg3: memref<3x256x1xf32, #tpu.memory_space<vmem>>, %arg4: memref<3x256x256xf32, #tpu.memory_space<vmem>>, %arg5: memref<3x256x1xf32, #tpu.memory_space<vmem>>, %arg6: memref<3x256x1xf32, #tpu.memory_space<vmem>>) attributes {dimension_semantics = [#tpu.dimension_semantics<parallel>], iteration_bounds = array<i64: 1>, scalar_prefetch = 0 : i64, scratch_operands = 0 : i64, tpu.core_type = #tpu.core_type<tc>, window_params = [{transform_indices = @transform_0, window_bounds = array<i64: 3, 256, 256>}, {transform_indices = @transform_1, window_bounds = array<i64: 3, 256, 1>}, {transform_indices = @transform_2, window_bounds = array<i64: 3, 256, 1>}, {transform_indices = @transform_3, window_bounds = array<i64: 3, 256, 256>}, {transform_indices = @transform_4, window_bounds = array<i64: 3, 256, 1>}, {transform_indices = @transform_5, window_bounds = array<i64: 3, 256, 1>}]} {
    %c0 = arith.constant 0 : index
    %c0_0 = arith.constant 0 : index
    %c0_1 = arith.constant 0 : index
    %0 = vector.load %arg1[%c0, %c0_0, %c0_1] : memref<3x256x256xf32, #tpu.memory_space<vmem>>, vector<3x256x256xf32>
    %cst = arith.constant dense<0.000000e+00> : vector<3x256xf32>
    %1 = vector.multi_reduction <add>, %0, %cst [2] : vector<3x256x256xf32> to vector<3x256xf32>
    %2 = vector.shape_cast %1 : vector<3x256xf32> to vector<3x256x1xf32>
    %cst_2 = arith.constant 2.560000e+02 : f32
    %3 = vector.broadcast %cst_2 : f32 to vector<3x256x1xf32>
    %4 = arith.divf %2, %3 : vector<3x256x1xf32>
    %5 = vector.broadcast %4 : vector<3x256x1xf32> to vector<3x256x256xf32>
    %6 = arith.subf %0, %5 : vector<3x256x256xf32>
    %7 = arith.mulf %6, %6 : vector<3x256x256xf32>
    %cst_3 = arith.constant dense<0.000000e+00> : vector<3x256xf32>
    %8 = vector.multi_reduction <add>, %7, %cst_3 [2] : vector<3x256x256xf32> to vector<3x256xf32>
    %9 = vector.shape_cast %8 : vector<3x256xf32> to vector<3x256x1xf32>
    %cst_4 = arith.constant 0.00392156886 : f32
    %10 = vector.broadcast %cst_4 : f32 to vector<3x256x1xf32>
    %11 = arith.mulf %9, %10 : vector<3x256x1xf32>
    %cst_5 = arith.constant 9.99999974E-6 : f32
    %12 = vector.broadcast %cst_5 : f32 to vector<3x256x1xf32>
    %13 = arith.addf %11, %12 : vector<3x256x1xf32>
    %14 = math.sqrt %13 : vector<3x256x1xf32>
    %c0_6 = arith.constant 0 : index
    %c0_7 = arith.constant 0 : index
    %c0_8 = arith.constant 0 : index
    %15 = vector.load %arg2[%c0_6, %c0_7, %c0_8] : memref<3x256x1xf32, #tpu.memory_space<vmem>>, vector<3x256x1xf32>
    %16 = arith.divf %15, %14 : vector<3x256x1xf32>
    %17 = vector.broadcast %16 : vector<3x256x1xf32> to vector<3x256x256xf32>
    %18 = arith.mulf %6, %17 : vector<3x256x256xf32>
    %c0_9 = arith.constant 0 : index
    %c0_10 = arith.constant 0 : index
    %c0_11 = arith.constant 0 : index
    %19 = vector.load %arg3[%c0_9, %c0_10, %c0_11] : memref<3x256x1xf32, #tpu.memory_space<vmem>>, vector<3x256x1xf32>
    %20 = vector.broadcast %19 : vector<3x256x1xf32> to vector<3x256x256xf32>
    %21 = arith.addf %18, %20 : vector<3x256x256xf32>
    %cst_12 = arith.constant 0.000000e+00 : f32
    %22 = vector.broadcast %cst_12 : f32 to vector<3x256x256xf32>
    %23 = arith.maximumf %21, %22 : vector<3x256x256xf32>
    %c0_13 = arith.constant 0 : index
    %c0_14 = arith.constant 0 : index
    %c0_15 = arith.constant 0 : index
    %24 = vector.load %arg4[%c0_13, %c0_14, %c0_15] : memref<3x256x256xf32, #tpu.memory_space<vmem>>, vector<3x256x256xf32>
    tpu.vector_store %arg4[%c0_13, %c0_14, %c0_15], %23 {strides = array<i32>} : memref<3x256x256xf32, #tpu.memory_space<vmem>>, vector<3x256x256xf32>,
    %c0_16 = arith.constant 0 : index
    %c0_17 = arith.constant 0 : index
    %c0_18 = arith.constant 0 : index
    %25 = vector.load %arg5[%c0_16, %c0_17, %c0_18] : memref<3x256x1xf32, #tpu.memory_space<vmem>>, vector<3x256x1xf32>
    tpu.vector_store %arg5[%c0_16, %c0_17, %c0_18], %4 {strides = array<i32>} : memref<3x256x1xf32, #tpu.memory_space<vmem>>, vector<3x256x1xf32>,
    %c0_19 = arith.constant 0 : index
    %c0_20 = arith.constant 0 : index
    %c0_21 = arith.constant 0 : index
    %26 = vector.load %arg6[%c0_19, %c0_20, %c0_21] : memref<3x256x1xf32, #tpu.memory_space<vmem>>, vector<3x256x1xf32>
    tpu.vector_store %arg6[%c0_19, %c0_20, %c0_21], %14 {strides = array<i32>} : memref<3x256x1xf32, #tpu.memory_space<vmem>>, vector<3x256x1xf32>,
    return
  }
  func.func @transform_0(%arg0: i32) -> (i32, i32, i32) {
    %c0_i32 = arith.constant 0 : i32
    %c0_i32_0 = arith.constant 0 : i32
    %c0_i32_1 = arith.constant 0 : i32
    return %arg0, %c0_i32, %c0_i32_0 : i32, i32, i32
  }
  func.func @transform_1(%arg0: i32) -> (i32, i32, i32) {
    %c0_i32 = arith.constant 0 : i32
    %c0_i32_0 = arith.constant 0 : i32
    %c0_i32_1 = arith.constant 0 : i32
    return %arg0, %c0_i32, %c0_i32_0 : i32, i32, i32
  }
  func.func @transform_2(%arg0: i32) -> (i32, i32, i32) {
    %c0_i32 = arith.constant 0 : i32
    %c0_i32_0 = arith.constant 0 : i32
    %c0_i32_1 = arith.constant 0 : i32
    return %arg0, %c0_i32, %c0_i32_0 : i32, i32, i32
  }
  func.func @transform_3(%arg0: i32) -> (i32, i32, i32) {
    %c0_i32 = arith.constant 0 : i32
    %c0_i32_0 = arith.constant 0 : i32
    %c0_i32_1 = arith.constant 0 : i32
    return %arg0, %c0_i32, %c0_i32_0 : i32, i32, i32
  }
  func.func @transform_4(%arg0: i32) -> (i32, i32, i32) {
    %c0_i32 = arith.constant 0 : i32
    %c0_i32_0 = arith.constant 0 : i32
    %c0_i32_1 = arith.constant 0 : i32
    return %arg0, %c0_i32, %c0_i32_0 : i32, i32, i32
  }
  func.func @transform_5(%arg0: i32) -> (i32, i32, i32) {
    %c0_i32 = arith.constant 0 : i32
    %c0_i32_0 = arith.constant 0 : i32
    %c0_i32_1 = arith.constant 0 : i32
    return %arg0, %c0_i32, %c0_i32_0 : i32, i32, i32
  }
}

</mosaic_0001>

<llo_original>
// kernel: tpu_custom_call.1
$region0: #{tpu_custom_call.1}
  #allocation0 [shape = 'u32[]', space=smem, size = 0x4, offset = 0x4, fixed_abs, tag = 'smem constant byte address 0x4 - core index']
  #allocation1 [shape = 'u32[144,128]{1,0:T(1,128)}', space=vmem, size = 0x12000, scoped, tag = 'internal scratch']
  %s0 = inlined_call_operand.vmem [shape: f32[3,256,256], index: 0, kind: input, shape index: {}]
  %s1 = inlined_call_operand.vmem [shape: f32[3,256,1], index: 1, kind: input, shape index: {}]
  %s2 = inlined_call_operand.vmem [shape: f32[3,256,1], index: 2, kind: input, shape index: {}]
  %s3 = inlined_call_operand.hbm [shape: f32[3,256,256], index: 3, kind: output, shape index: {0}]
  %s4 = inlined_call_operand.vmem [shape: f32[3,256,1], index: 4, kind: output, shape index: {1}]
  %s5 = inlined_call_operand.vmem [shape: f32[3,256,1], index: 5, kind: output, shape index: {2}]
  %6 = xla_tuple %s3, %s4, %s5
  %s7 = sld [smem:[#allocation0]]
  $region38: #{tpu_custom_call.1} parent=0
    _
  %s9 = ssub.s32 1, %s7
  %s10 = scalar_select 0, %s9, %s7
  $region1: #{tpu_custom_call.1} parent=0
    #allocation2 [shape = 'u8[786432]{0}', space=vmem, size = 0xc0000, scoped, tag = 'output window, operand 0, single buffered']
    #allocation3 [shape = 's32[1]{0}', space=sflag, size = 0x4, scoped, tag = 'scoped memory for tpu_custom_call.1']
    %11 = vsyncpa [#allocation3], 0
    // Predicated region
    $region2: #{tpu_custom_call.1} parent=1 // pred_check
      _
    $region3: #{tpu_custom_call.1} parent=1 // pred_check_branch
      %13 = sbr.rel (0) target = $region5
    $region4: #{tpu_custom_call.1} parent=1 // pred_region
      _
    $region5: #{tpu_custom_call.1} parent=1 // pred_fallthru
      _
    // Predicated region
    $region6: #{tpu_custom_call.1} parent=1 // pred_check
      _
    $region7: #{tpu_custom_call.1} parent=1 // pred_check_branch
      %15 = sbr.rel (0) target = $region9
    $region8: #{tpu_custom_call.1} parent=1 // pred_region
      _
    $region9: #{tpu_custom_call.1} parent=1 // pred_fallthru
      _
    // Predicated region
    $region10: #{tpu_custom_call.1} parent=1 // pred_check
      _
    $region11: #{tpu_custom_call.1} parent=1 // pred_check_branch
      %17 = sbr.rel (0) target = $region13
    $region12: #{tpu_custom_call.1} parent=1 // pred_region
      _
    $region13: #{tpu_custom_call.1} parent=1 // pred_fallthru
      _
    %v18 = vld [vmem:[%s0] sm:$0xff]
    %v19 = vld [vmem:[%s0 + $0x8] sm:$0xff]
    %v20 = vld [vmem:[%s0 + $0x10] sm:$0xff]
    %v21 = vld [vmem:[%s0 + $0x18] sm:$0xff]
    %v22 = vld [vmem:[%s0 + $0x20] sm:$0xff]
    %v23 = vld [vmem:[%s0 + $0x28] sm:$0xff]
    %v24 = vld [vmem:[%s0 + $0x30] sm:$0xff]
    %v25 = vld [vmem:[%s0 + $0x38] sm:$0xff]
    %v26 = vld [vmem:[%s0 + $0x40] sm:$0xff]
    %v27 = vld [vmem:[%s0 + $0x48] sm:$0xff]
    %v28 = vld [vmem:[%s0 + $0x50] sm:$0xff]
    %v29 = vld [vmem:[%s0 + $0x58] sm:$0xff]
    %v30 = vld [vmem:[%s0 + $0x60] sm:$0xff]
    %v31 = vld [vmem:[%s0 + $0x68] sm:$0xff]
    %v32 = vld [vmem:[%s0 + $0x70] sm:$0xff]
    %v33 = vld [vmem:[%s0 + $0x78] sm:$0xff]
    %v34 = vld [vmem:[%s0 + $0x80] sm:$0xff]
    %v35 = vld [vmem:[%s0 + $0x88] sm:$0xff]
    %v36 = vld [vmem:[%s0 + $0x90] sm:$0xff]
    %v37 = vld [vmem:[%s0 + $0x98] sm:$0xff]
    %v38 = vld [vmem:[%s0 + $0xa0] sm:$0xff]
    %v39 = vld [vmem:[%s0 + $0xa8] sm:$0xff]
    %v40 = vld [vmem:[%s0 + $0xb0] sm:$0xff]
    %v41 = vld [vmem:[%s0 + $0xb8] sm:$0xff]
    %v42 = vld [vmem:[%s0 + $0xc0] sm:$0xff]
    %v43 = vld [vmem:[%s0 + $0xc8] sm:$0xff]
    %v44 = vld [vmem:[%s0 + $0xd0] sm:$0xff]
    %v45 = vld [vmem:[%s0 + $0xd8] sm:$0xff]
    %v46 = vld [vmem:[%s0 + $0xe0] sm:$0xff]
    %v47 = vld [vmem:[%s0 + $0xe8] sm:$0xff]
    %v48 = vld [vmem:[%s0 + $0xf0] sm:$0xff]
    %v49 = vld [vmem:[%s0 + $0xf8] sm:$0xff]
    %v50 = vld [vmem:[%s0 + $0x100] sm:$0xff]
    %v51 = vld [vmem:[%s0 + $0x108] sm:$0xff]
    %v52 = vld [vmem:[%s0 + $0x110] sm:$0xff]
    %v53 = vld [vmem:[%s0 + $0x118] sm:$0xff]
    %v54 = vld [vmem:[%s0 + $0x120] sm:$0xff]
    %v55 = vld [vmem:[%s0 + $0x128] sm:$0xff]
    %v56 = vld [vmem:[%s0 + $0x130] sm:$0xff]
    %v57 = vld [vmem:[%s0 + $0x138] sm:$0xff]
    %v58 = vld [vmem:[%s0 + $0x140] sm:$0xff]
    %v59 = vld [vmem:[%s0 + $0x148] sm:$0xff]
    %v60 = vld [vmem:[%s0 + $0x150] sm:$0xff]
    %v61 = vld [vmem:[%s0 + $0x158] sm:$0xff]
    %v62 = vld [vmem:[%s0 + $0x160] sm:$0xff]
    %v63 = vld [vmem:[%s0 + $0x168] sm:$0xff]
    %v64 = vld [vmem:[%s0 + $0x170] sm:$0xff]
    %v65 = vld [vmem:[%s0 + $0x178] sm:$0xff]
    %v66 = vld [vmem:[%s0 + $0x180] sm:$0xff]
    %v67 = vld [vmem:[%s0 + $0x188] sm:$0xff]
    %v68 = vld [vmem:[%s0 + $0x190] sm:$0xff]
    %v69 = vld [vmem:[%s0 + $0x198] sm:$0xff]
    %v70 = vld [vmem:[%s0 + $0x1a0] sm:$0xff]
    %v71 = vld [vmem:[%s0 + $0x1a8] sm:$0xff]
    %v72 = vld [vmem:[%s0 + $0x1b0] sm:$0xff]
    %v73 = vld [vmem:[%s0 + $0x1b8] sm:$0xff]
    %v74 = vld [vmem:[%s0 + $0x1c0] sm:$0xff]
    %v75 = vld [vmem:[%s0 + $0x1c8] sm:$0xff]
    %v76 = vld [vmem:[%s0 + $0x1d0] sm:$0xff]
    %v77 = vld [vmem:[%s0 + $0x1d8] sm:$0xff]
    %v78 = vld [vmem:[%s0 + $0x1e0] sm:$0xff]
    %v79 = vld [vmem:[%s0 + $0x1e8] sm:$0xff]
    %v80 = vld [vmem:[%s0 + $0x1f0] sm:$0xff]
    %v81 = vld [vmem:[%s0 + $0x1f8] sm:$0xff]
    %v82 = vld [vmem:[%s0 + $0x200] sm:$0xff]
    %v83 = vld [vmem:[%s0 + $0x208] sm:$0xff]
    %v84 = vld [vmem:[%s0 + $0x210] sm:$0xff]
    %v85 = vld [vmem:[%s0 + $0x218] sm:$0xff]
    %v86 = vld [vmem:[%s0 + $0x220] sm:$0xff]
    %v87 = vld [vmem:[%s0 + $0x228] sm:$0xff]
    %v88 = vld [vmem:[%s0 + $0x230] sm:$0xff]
    %v89 = vld [vmem:[%s0 + $0x238] sm:$0xff]
    %v90 = vld [vmem:[%s0 + $0x240] sm:$0xff]
    %v91 = vld [vmem:[%s0 + $0x248] sm:$0xff]
    %v92 = vld [vmem:[%s0 + $0x250] sm:$0xff]
    %v93 = vld [vmem:[%s0 + $0x258] sm:$0xff]
    %v94 = vld [vmem:[%s0 + $0x260] sm:$0xff]
    %v95 = vld [vmem:[%s0 + $0x268] sm:$0xff]
    %v96 = vld [vmem:[%s0 + $0x270] sm:$0xff]
    %v97 = vld [vmem:[%s0 + $0x278] sm:$0xff]
    %v98 = vld [vmem:[%s0 + $0x280] sm:$0xff]
    %v99 = vld [vmem:[%s0 + $0x288] sm:$0xff]
    %v100 = vld [vmem:[%s0 + $0x290] sm:$0xff]
    %v101 = vld [vmem:[%s0 + $0x298] sm:$0xff]
    %v102 = vld [vmem:[%s0 + $0x2a0] sm:$0xff]
    %v103 = vld [vmem:[%s0 + $0x2a8] sm:$0xff]
    %v104 = vld [vmem:[%s0 + $0x2b0] sm:$0xff]
    %v105 = vld [vmem:[%s0 + $0x2b8] sm:$0xff]
    %v106 = vld [vmem:[%s0 + $0x2c0] sm:$0xff]
    %v107 = vld [vmem:[%s0 + $0x2c8] sm:$0xff]
    %v108 = vld [vmem:[%s0 + $0x2d0] sm:$0xff]
    %v109 = vld [vmem:[%s0 + $0x2d8] sm:$0xff]
    %v110 = vld [vmem:[%s0 + $0x2e0] sm:$0xff]
    %v111 = vld [vmem:[%s0 + $0x2e8] sm:$0xff]
    %v112 = vld [vmem:[%s0 + $0x2f0] sm:$0xff]
    %v113 = vld [vmem:[%s0 + $0x2f8] sm:$0xff]
    %v114 = vld [vmem:[%s0 + $0x300] sm:$0xff]
    %v115 = vld [vmem:[%s0 + $0x308] sm:$0xff]
    %v116 = vld [vmem:[%s0 + $0x310] sm:$0xff]
    %v117 = vld [vmem:[%s0 + $0x318] sm:$0xff]
    %v118 = vld [vmem:[%s0 + $0x320] sm:$0xff]
    %v119 = vld [vmem:[%s0 + $0x328] sm:$0xff]
    %v120 = vld [vmem:[%s0 + $0x330] sm:$0xff]
    %v121 = vld [vmem:[%s0 + $0x338] sm:$0xff]
    %v122 = vld [vmem:[%s0 + $0x340] sm:$0xff]
    %v123 = vld [vmem:[%s0 + $0x348] sm:$0xff]
    %v124 = vld [vmem:[%s0 + $0x350] sm:$0xff]
    %v125 = vld [vmem:[%s0 + $0x358] sm:$0xff]
    %v126 = vld [vmem:[%s0 + $0x360] sm:$0xff]
    %v127 = vld [vmem:[%s0 + $0x368] sm:$0xff]
    %v128 = vld [vmem:[%s0 + $0x370] sm:$0xff]
    %v129 = vld [vmem:[%s0 + $0x378] sm:$0xff]
    %v130 = vld [vmem:[%s0 + $0x380] sm:$0xff]
    %v131 = vld [vmem:[%s0 + $0x388] sm:$0xff]
    %v132 = vld [vmem:[%s0 + $0x390] sm:$0xff]
    %v133 = vld [vmem:[%s0 + $0x398] sm:$0xff]
    %v134 = vld [vmem:[%s0 + $0x3a0] sm:$0xff]
    %v135 = vld [vmem:[%s0 + $0x3a8] sm:$0xff]
    %v136 = vld [vmem:[%s0 + $0x3b0] sm:$0xff]
    %v137 = vld [vmem:[%s0 + $0x3b8] sm:$0xff]
    %v138 = vld [vmem:[%s0 + $0x3c0] sm:$0xff]
    %v139 = vld [vmem:[%s0 + $0x3c8] sm:$0xff]
    %v140 = vld [vmem:[%s0 + $0x3d0] sm:$0xff]
    %v141 = vld [vmem:[%s0 + $0x3d8] sm:$0xff]
    %v142 = vld [vmem:[%s0 + $0x3e0] sm:$0xff]
    %v143 = vld [vmem:[%s0 + $0x3e8] sm:$0xff]
    %v144 = vld [vmem:[%s0 + $0x3f0] sm:$0xff]
    %v145 = vld [vmem:[%s0 + $0x3f8] sm:$0xff]
    %v146 = vld [vmem:[%s0 + $0x400] sm:$0xff]
    %v147 = vld [vmem:[%s0 + $0x408] sm:$0xff]
    %v148 = vld [vmem:[%s0 + $0x410] sm:$0xff]
    %v149 = vld [vmem:[%s0 + $0x418] sm:$0xff]
    %v150 = vld [vmem:[%s0 + $0x420] sm:$0xff]
    %v151 = vld [vmem:[%s0 + $0x428] sm:$0xff]
    %v152 = vld [vmem:[%s0 + $0x430] sm:$0xff]
    %v153 = vld [vmem:[%s0 + $0x438] sm:$0xff]
    %v154 = vld [vmem:[%s0 + $0x440] sm:$0xff]
    %v155 = vld [vmem:[%s0 + $0x448] sm:$0xff]
    %v156 = vld [vmem:[%s0 + $0x450] sm:$0xff]
    %v157 = vld [vmem:[%s0 + $0x458] sm:$0xff]
    %v158 = vld [vmem:[%s0 + $0x460] sm:$0xff]
    %v159 = vld [vmem:[%s0 + $0x468] sm:$0xff]
    %v160 = vld [vmem:[%s0 + $0x470] sm:$0xff]
    %v161 = vld [vmem:[%s0 + $0x478] sm:$0xff]
    %v162 = vld [vmem:[%s0 + $0x480] sm:$0xff]
    %v163 = vld [vmem:[%s0 + $0x488] sm:$0xff]
    %v164 = vld [vmem:[%s0 + $0x490] sm:$0xff]
    %v165 = vld [vmem:[%s0 + $0x498] sm:$0xff]
    %v166 = vld [vmem:[%s0 + $0x4a0] sm:$0xff]
    %v167 = vld [vmem:[%s0 + $0x4a8] sm:$0xff]
    %v168 = vld [vmem:[%s0 + $0x4b0] sm:$0xff]
    %v169 = vld [vmem:[%s0 + $0x4b8] sm:$0xff]
    %v170 = vld [vmem:[%s0 + $0x4c0] sm:$0xff]
    %v171 = vld [vmem:[%s0 + $0x4c8] sm:$0xff]
    %v172 = vld [vmem:[%s0 + $0x4d0] sm:$0xff]
    %v173 = vld [vmem:[%s0 + $0x4d8] sm:$0xff]
    %v174 = vld [vmem:[%s0 + $0x4e0] sm:$0xff]
    %v175 = vld [vmem:[%s0 + $0x4e8] sm:$0xff]
    %v176 = vld [vmem:[%s0 + $0x4f0] sm:$0xff]
    %v177 = vld [vmem:[%s0 + $0x4f8] sm:$0xff]
    %v178 = vld [vmem:[%s0 + $0x500] sm:$0xff]
    %v179 = vld [vmem:[%s0 + $0x508] sm:$0xff]
    %v180 = vld [vmem:[%s0 + $0x510] sm:$0xff]
    %v181 = vld [vmem:[%s0 + $0x518] sm:$0xff]
    %v182 = vld [vmem:[%s0 + $0x520] sm:$0xff]
    %v183 = vld [vmem:[%s0 + $0x528] sm:$0xff]
    %v184 = vld [vmem:[%s0 + $0x530] sm:$0xff]
    %v185 = vld [vmem:[%s0 + $0x538] sm:$0xff]
    %v186 = vld [vmem:[%s0 + $0x540] sm:$0xff]
    %v187 = vld [vmem:[%s0 + $0x548] sm:$0xff]
    %v188 = vld [vmem:[%s0 + $0x550] sm:$0xff]
    %v189 = vld [vmem:[%s0 + $0x558] sm:$0xff]
    %v190 = vld [vmem:[%s0 + $0x560] sm:$0xff]
    %v191 = vld [vmem:[%s0 + $0x568] sm:$0xff]
    %v192 = vld [vmem:[%s0 + $0x570] sm:$0xff]
    %v193 = vld [vmem:[%s0 + $0x578] sm:$0xff]
    %v194 = vld [vmem:[%s0 + $0x580] sm:$0xff]
    %v195 = vld [vmem:[%s0 + $0x588] sm:$0xff]
    %v196 = vld [vmem:[%s0 + $0x590] sm:$0xff]
    %v197 = vld [vmem:[%s0 + $0x598] sm:$0xff]
    %v198 = vld [vmem:[%s0 + $0x5a0] sm:$0xff]
    %v199 = vld [vmem:[%s0 + $0x5a8] sm:$0xff]
    %v200 = vld [vmem:[%s0 + $0x5b0] sm:$0xff]
    %v201 = vld [vmem:[%s0 + $0x5b8] sm:$0xff]
    %v202 = vld [vmem:[%s0 + $0x5c0] sm:$0xff]
    %v203 = vld [vmem:[%s0 + $0x5c8] sm:$0xff]
    %v204 = vld [vmem:[%s0 + $0x5d0] sm:$0xff]
    %v205 = vld [vmem:[%s0 + $0x5d8] sm:$0xff]
    %v206 = vld [vmem:[%s0 + $0x5e0] sm:$0xff]
    %v207 = vld [vmem:[%s0 + $0x5e8] sm:$0xff]
    %v208 = vld [vmem:[%s0 + $0x5f0] sm:$0xff]
    %v209 = vld [vmem:[%s0 + $0x5f8] sm:$0xff]
    %v210 = vadd.f32 %v18, %v19
    %211 = vadd.xlane.f32.xlu0 %v210
    %v212 = vpop.xlane.xlu0 %211
    %v213 = vadd.f32 %v20, %v21
    %214 = vadd.xlane.f32.xlu0 %v213
    %v215 = vpop.xlane.xlu0 %214
    %v216 = vadd.f32 %v22, %v23
    %217 = vadd.xlane.f32.xlu0 %v216
    %v218 = vpop.xlane.xlu0 %217
    %v219 = vadd.f32 %v24, %v25
    %220 = vadd.xlane.f32.xlu0 %v219
    %v221 = vpop.xlane.xlu0 %220
    %v222 = vadd.f32 %v26, %v27
    %223 = vadd.xlane.f32.xlu0 %v222
    %v224 = vpop.xlane.xlu0 %223
    %v225 = vadd.f32 %v28, %v29
    %226 = vadd.xlane.f32.xlu0 %v225
    %v227 = vpop.xlane.xlu0 %226
    %v228 = vadd.f32 %v30, %v31
    %229 = vadd.xlane.f32.xlu0 %v228
    %v230 = vpop.xlane.xlu0 %229
    %v231 = vadd.f32 %v32, %v33
    %232 = vadd.xlane.f32.xlu0 %v231
    %v233 = vpop.xlane.xlu0 %232
    %v234 = vadd.f32 %v34, %v35
    %235 = vadd.xlane.f32.xlu0 %v234
    %v236 = vpop.xlane.xlu0 %235
    %v237 = vadd.f32 %v36, %v37
    %238 = vadd.xlane.f32.xlu0 %v237
    %v239 = vpop.xlane.xlu0 %238
    %v240 = vadd.f32 %v38, %v39
    %241 = vadd.xlane.f32.xlu0 %v240
    %v242 = vpop.xlane.xlu0 %241
    %v243 = vadd.f32 %v40, %v41
    %244 = vadd.xlane.f32.xlu0 %v243
    %v245 = vpop.xlane.xlu0 %244
    %v246 = vadd.f32 %v42, %v43
    %247 = vadd.xlane.f32.xlu0 %v246
    %v248 = vpop.xlane.xlu0 %247
    %v249 = vadd.f32 %v44, %v45
    %250 = vadd.xlane.f32.xlu0 %v249
    %v251 = vpop.xlane.xlu0 %250
    %v252 = vadd.f32 %v46, %v47
    %253 = vadd.xlane.f32.xlu0 %v252
    %v254 = vpop.xlane.xlu0 %253
    %v255 = vadd.f32 %v48, %v49
    %256 = vadd.xlane.f32.xlu0 %v255
    %v257 = vpop.xlane.xlu0 %256
    %v258 = vadd.f32 %v50, %v51
    %259 = vadd.xlane.f32.xlu0 %v258
    %v260 = vpop.xlane.xlu0 %259
    %v261 = vadd.f32 %v52, %v53
    %262 = vadd.xlane.f32.xlu0 %v261
    %v263 = vpop.xlane.xlu0 %262
    %v264 = vadd.f32 %v54, %v55
    %265 = vadd.xlane.f32.xlu0 %v264
    %v266 = vpop.xlane.xlu0 %265
    %v267 = vadd.f32 %v56, %v57
    %268 = vadd.xlane.f32.xlu0 %v267
    %v269 = vpop.xlane.xlu0 %268
    %v270 = vadd.f32 %v58, %v59
    %271 = vadd.xlane.f32.xlu0 %v270
    %v272 = vpop.xlane.xlu0 %271
    %v273 = vadd.f32 %v60, %v61
    %274 = vadd.xlane.f32.xlu0 %v273
    %v275 = vpop.xlane.xlu0 %274
    %v276 = vadd.f32 %v62, %v63
    %277 = vadd.xlane.f32.xlu0 %v276
    %v278 = vpop.xlane.xlu0 %277
    %v279 = vadd.f32 %v64, %v65
    %280 = vadd.xlane.f32.xlu0 %v279
    %v281 = vpop.xlane.xlu0 %280
    %v282 = vadd.f32 %v66, %v67
    %283 = vadd.xlane.f32.xlu0 %v282
    %v284 = vpop.xlane.xlu0 %283
    %v285 = vadd.f32 %v68, %v69
    %286 = vadd.xlane.f32.xlu0 %v285
    %v287 = vpop.xlane.xlu0 %286
    %v288 = vadd.f32 %v70, %v71
    %289 = vadd.xlane.f32.xlu0 %v288
    %v290 = vpop.xlane.xlu0 %289
    %v291 = vadd.f32 %v72, %v73
    %292 = vadd.xlane.f32.xlu0 %v291
    %v293 = vpop.xlane.xlu0 %292
    %v294 = vadd.f32 %v74, %v75
    %295 = vadd.xlane.f32.xlu0 %v294
    %v296 = vpop.xlane.xlu0 %295
    %v297 = vadd.f32 %v76, %v77
    %298 = vadd.xlane.f32.xlu0 %v297
    %v299 = vpop.xlane.xlu0 %298
    %v300 = vadd.f32 %v78, %v79
    %301 = vadd.xlane.f32.xlu0 %v300
    %v302 = vpop.xlane.xlu0 %301
    %v303 = vadd.f32 %v80, %v81
    %304 = vadd.xlane.f32.xlu0 %v303
    %v305 = vpop.xlane.xlu0 %304
    %v306 = vadd.f32 %v82, %v83
    %307 = vadd.xlane.f32.xlu0 %v306
    %v308 = vpop.xlane.xlu0 %307
    %v309 = vadd.f32 %v84, %v85
    %310 = vadd.xlane.f32.xlu0 %v309
    %v311 = vpop.xlane.xlu0 %310
    %v312 = vadd.f32 %v86, %v87
    %313 = vadd.xlane.f32.xlu0 %v312
    %v314 = vpop.xlane.xlu0 %313
    %v315 = vadd.f32 %v88, %v89
    %316 = vadd.xlane.f32.xlu0 %v315
    %v317 = vpop.xlane.xlu0 %316
    %v318 = vadd.f32 %v90, %v91
    %319 = vadd.xlane.f32.xlu0 %v318
    %v320 = vpop.xlane.xlu0 %319
    %v321 = vadd.f32 %v92, %v93
    %322 = vadd.xlane.f32.xlu0 %v321
    %v323 = vpop.xlane.xlu0 %322
    %v324 = vadd.f32 %v94, %v95
    %325 = vadd.xlane.f32.xlu0 %v324
    %v326 = vpop.xlane.xlu0 %325
    %v327 = vadd.f32 %v96, %v97
    %328 = vadd.xlane.f32.xlu0 %v327
    %v329 = vpop.xlane.xlu0 %328
    %v330 = vadd.f32 %v98, %v99
    %331 = vadd.xlane.f32.xlu0 %v330
    %v332 = vpop.xlane.xlu0 %331
    %v333 = vadd.f32 %v100, %v101
    %334 = vadd.xlane.f32.xlu0 %v333
    %v335 = vpop.xlane.xlu0 %334
    %v336 = vadd.f32 %v102, %v103
    %337 = vadd.xlane.f32.xlu0 %v336
    %v338 = vpop.xlane.xlu0 %337
    %v339 = vadd.f32 %v104, %v105
    %340 = vadd.xlane.f32.xlu0 %v339
    %v341 = vpop.xlane.xlu0 %340
    %v342 = vadd.f32 %v106, %v107
    %343 = vadd.xlane.f32.xlu0 %v342
    %v344 = vpop.xlane.xlu0 %343
    %v345 = vadd.f32 %v108, %v109
    %346 = vadd.xlane.f32.xlu0 %v345
    %v347 = vpop.xlane.xlu0 %346
    %v348 = vadd.f32 %v110, %v111
    %349 = vadd.xlane.f32.xlu0 %v348
    %v350 = vpop.xlane.xlu0 %349
    %v351 = vadd.f32 %v112, %v113
    %352 = vadd.xlane.f32.xlu0 %v351
    %v353 = vpop.xlane.xlu0 %352
    %v354 = vadd.f32 %v114, %v115
    %355 = vadd.xlane.f32.xlu0 %v354
    %v356 = vpop.xlane.xlu0 %355
    %v357 = vadd.f32 %v116, %v117
    %358 = vadd.xlane.f32.xlu0 %v357
    %v359 = vpop.xlane.xlu0 %358
    %v360 = vadd.f32 %v118, %v119
    %361 = vadd.xlane.f32.xlu0 %v360
    %v362 = vpop.xlane.xlu0 %361
    %v363 = vadd.f32 %v120, %v121
    %364 = vadd.xlane.f32.xlu0 %v363
    %v365 = vpop.xlane.xlu0 %364
    %v366 = vadd.f32 %v122, %v123
    %367 = vadd.xlane.f32.xlu0 %v366
    %v368 = vpop.xlane.xlu0 %367
    %v369 = vadd.f32 %v124, %v125
    %370 = vadd.xlane.f32.xlu0 %v369
    %v371 = vpop.xlane.xlu0 %370
    %v372 = vadd.f32 %v126, %v127
    %373 = vadd.xlane.f32.xlu0 %v372
    %v374 = vpop.xlane.xlu0 %373
    %v375 = vadd.f32 %v128, %v129
    %376 = vadd.xlane.f32.xlu0 %v375
    %v377 = vpop.xlane.xlu0 %376
    %v378 = vadd.f32 %v130, %v131
    %379 = vadd.xlane.f32.xlu0 %v378
    %v380 = vpop.xlane.xlu0 %379
    %v381 = vadd.f32 %v132, %v133
    %382 = vadd.xlane.f32.xlu0 %v381
    %v383 = vpop.xlane.xlu0 %382
    %v384 = vadd.f32 %v134, %v135
    %385 = vadd.xlane.f32.xlu0 %v384
    %v386 = vpop.xlane.xlu0 %385
    %v387 = vadd.f32 %v136, %v137
    %388 = vadd.xlane.f32.xlu0 %v387
    %v389 = vpop.xlane.xlu0 %388
    %v390 = vadd.f32 %v138, %v139
    %391 = vadd.xlane.f32.xlu0 %v390
    %v392 = vpop.xlane.xlu0 %391
    %v393 = vadd.f32 %v140, %v141
    %394 = vadd.xlane.f32.xlu0 %v393
    %v395 = vpop.xlane.xlu0 %394
    %v396 = vadd.f32 %v142, %v143
    %397 = vadd.xlane.f32.xlu0 %v396
    %v398 = vpop.xlane.xlu0 %397
    %v399 = vadd.f32 %v144, %v145
    %400 = vadd.xlane.f32.xlu0 %v399
    %v401 = vpop.xlane.xlu0 %400
    %v402 = vadd.f32 %v146, %v147
    %403 = vadd.xlane.f32.xlu0 %v402
    %v404 = vpop.xlane.xlu0 %403
    %v405 = vadd.f32 %v148, %v149
    %406 = vadd.xlane.f32.xlu0 %v405
    %v407 = vpop.xlane.xlu0 %406
    %v408 = vadd.f32 %v150, %v151
    %409 = vadd.xlane.f32.xlu0 %v408
    %v410 = vpop.xlane.xlu0 %409
    %v411 = vadd.f32 %v152, %v153
    %412 = vadd.xlane.f32.xlu0 %v411
    %v413 = vpop.xlane.xlu0 %412
    %v414 = vadd.f32 %v154, %v155
    %415 = vadd.xlane.f32.xlu0 %v414
    %v416 = vpop.xlane.xlu0 %415
    %v417 = vadd.f32 %v156, %v157
    %418 = vadd.xlane.f32.xlu0 %v417
    %v419 = vpop.xlane.xlu0 %418
    %v420 = vadd.f32 %v158, %v159
    %421 = vadd.xlane.f32.xlu0 %v420
    %v422 = vpop.xlane.xlu0 %421
    %v423 = vadd.f32 %v160, %v161
    %424 = vadd.xlane.f32.xlu0 %v423
    %v425 = vpop.xlane.xlu0 %424
    %v426 = vadd.f32 %v162, %v163
    %427 = vadd.xlane.f32.xlu0 %v426
    %v428 = vpop.xlane.xlu0 %427
    %v429 = vadd.f32 %v164, %v165
    %430 = vadd.xlane.f32.xlu0 %v429
    %v431 = vpop.xlane.xlu0 %430
    %v432 = vadd.f32 %v166, %v167
    %433 = vadd.xlane.f32.xlu0 %v432
    %v434 = vpop.xlane.xlu0 %433
    %v435 = vadd.f32 %v168, %v169
    %436 = vadd.xlane.f32.xlu0 %v435
    %v437 = vpop.xlane.xlu0 %436
    %v438 = vadd.f32 %v170, %v171
    %439 = vadd.xlane.f32.xlu0 %v438
    %v440 = vpop.xlane.xlu0 %439
    %v441 = vadd.f32 %v172, %v173
    %442 = vadd.xlane.f32.xlu0 %v441
    %v443 = vpop.xlane.xlu0 %442
    %v444 = vadd.f32 %v174, %v175
    %445 = vadd.xlane.f32.xlu0 %v444
    %v446 = vpop.xlane.xlu0 %445
    %v447 = vadd.f32 %v176, %v177
    %448 = vadd.xlane.f32.xlu0 %v447
    %v449 = vpop.xlane.xlu0 %448
    %v450 = vadd.f32 %v178, %v179
    %451 = vadd.xlane.f32.xlu0 %v450
    %v452 = vpop.xlane.xlu0 %451
    %v453 = vadd.f32 %v180, %v181
    %454 = vadd.xlane.f32.xlu0 %v453
    %v455 = vpop.xlane.xlu0 %454
    %v456 = vadd.f32 %v182, %v183
    %457 = vadd.xlane.f32.xlu0 %v456
    %v458 = vpop.xlane.xlu0 %457
    %v459 = vadd.f32 %v184, %v185
    %460 = vadd.xlane.f32.xlu0 %v459
    %v461 = vpop.xlane.xlu0 %460
    %v462 = vadd.f32 %v186, %v187
    %463 = vadd.xlane.f32.xlu0 %v462
    %v464 = vpop.xlane.xlu0 %463
    %v465 = vadd.f32 %v188, %v189
    %466 = vadd.xlane.f32.xlu0 %v465
    %v467 = vpop.xlane.xlu0 %466
    %v468 = vadd.f32 %v190, %v191
    %469 = vadd.xlane.f32.xlu0 %v468
    %v470 = vpop.xlane.xlu0 %469
    %v471 = vadd.f32 %v192, %v193
    %472 = vadd.xlane.f32.xlu0 %v471
    %v473 = vpop.xlane.xlu0 %472
    %v474 = vadd.f32 %v194, %v195
    %475 = vadd.xlane.f32.xlu0 %v474
    %v476 = vpop.xlane.xlu0 %475
    %v477 = vadd.f32 %v196, %v197
    %478 = vadd.xlane.f32.xlu0 %v477
    %v479 = vpop.xlane.xlu0 %478
    %v480 = vadd.f32 %v198, %v199
    %481 = vadd.xlane.f32.xlu0 %v480
    %v482 = vpop.xlane.xlu0 %481
    %v483 = vadd.f32 %v200, %v201
    %484 = vadd.xlane.f32.xlu0 %v483
    %v485 = vpop.xlane.xlu0 %484
    %v486 = vadd.f32 %v202, %v203
    %487 = vadd.xlane.f32.xlu0 %v486
    %v488 = vpop.xlane.xlu0 %487
    %v489 = vadd.f32 %v204, %v205
    %490 = vadd.xlane.f32.xlu0 %v489
    %v491 = vpop.xlane.xlu0 %490
    %v492 = vadd.f32 %v206, %v207
    %493 = vadd.xlane.f32.xlu0 %v492
    %v494 = vpop.xlane.xlu0 %493
    %v495 = vadd.f32 %v208, %v209
    %496 = vadd.xlane.f32.xlu0 %v495
    %v497 = vpop.xlane.xlu0 %496
    %v498 = vrcp.pop 256.0
    %v499 = vmul.f32 %v212, %v498
    %v500 = vmul.f32 %v215, %v498
    %v501 = vmul.f32 %v218, %v498
    %v502 = vmul.f32 %v221, %v498
    %v503 = vmul.f32 %v224, %v498
    %v504 = vmul.f32 %v227, %v498
    %v505 = vmul.f32 %v230, %v498
    %v506 = vmul.f32 %v233, %v498
    %v507 = vmul.f32 %v236, %v498
    %v508 = vmul.f32 %v239, %v498
    %v509 = vmul.f32 %v242, %v498
    %v510 = vmul.f32 %v245, %v498
    %v511 = vmul.f32 %v248, %v498
    %v512 = vmul.f32 %v251, %v498
    %v513 = vmul.f32 %v254, %v498
    %v514 = vmul.f32 %v257, %v498
    %v515 = vmul.f32 %v260, %v498
    %v516 = vmul.f32 %v263, %v498
    %v517 = vmul.f32 %v266, %v498
    %v518 = vmul.f32 %v269, %v498
    %v519 = vmul.f32 %v272, %v498
    %v520 = vmul.f32 %v275, %v498
    %v521 = vmul.f32 %v278, %v498
    %v522 = vmul.f32 %v281, %v498
    %v523 = vmul.f32 %v284, %v498
    %v524 = vmul.f32 %v287, %v498
    %v525 = vmul.f32 %v290, %v498
    %v526 = vmul.f32 %v293, %v498
    %v527 = vmul.f32 %v296, %v498
    %v528 = vmul.f32 %v299, %v498
    %v529 = vmul.f32 %v302, %v498
    %v530 = vmul.f32 %v305, %v498
    %v531 = vmul.f32 %v308, %v498
    %v532 = vmul.f32 %v311, %v498
    %v533 = vmul.f32 %v314, %v498
    %v534 = vmul.f32 %v317, %v498
    %v535 = vmul.f32 %v320, %v498
    %v536 = vmul.f32 %v323, %v498
    %v537 = vmul.f32 %v326, %v498
    %v538 = vmul.f32 %v329, %v498
    %v539 = vmul.f32 %v332, %v498
    %v540 = vmul.f32 %v335, %v498
    %v541 = vmul.f32 %v338, %v498
    %v542 = vmul.f32 %v341, %v498
    %v543 = vmul.f32 %v344, %v498
    %v544 = vmul.f32 %v347, %v498
    %v545 = vmul.f32 %v350, %v498
    %v546 = vmul.f32 %v353, %v498
    %v547 = vmul.f32 %v356, %v498
    %v548 = vmul.f32 %v359, %v498
    %v549 = vmul.f32 %v362, %v498
    %v550 = vmul.f32 %v365, %v498
    %v551 = vmul.f32 %v368, %v498
    %v552 = vmul.f32 %v371, %v498
    %v553 = vmul.f32 %v374, %v498
    %v554 = vmul.f32 %v377, %v498
    %v555 = vmul.f32 %v380, %v498
    %v556 = vmul.f32 %v383, %v498
    %v557 = vmul.f32 %v386, %v498
    %v558 = vmul.f32 %v389, %v498
    %v559 = vmul.f32 %v392, %v498
    %v560 = vmul.f32 %v395, %v498
    %v561 = vmul.f32 %v398, %v498
    %v562 = vmul.f32 %v401, %v498
    %v563 = vmul.f32 %v404, %v498
    %v564 = vmul.f32 %v407, %v498
    %v565 = vmul.f32 %v410, %v498
    %v566 = vmul.f32 %v413, %v498
    %v567 = vmul.f32 %v416, %v498
    %v568 = vmul.f32 %v419, %v498
    %v569 = vmul.f32 %v422, %v498
    %v570 = vmul.f32 %v425, %v498
    %v571 = vmul.f32 %v428, %v498
    %v572 = vmul.f32 %v431, %v498
    %v573 = vmul.f32 %v434, %v498
    %v574 = vmul.f32 %v437, %v498
    %v575 = vmul.f32 %v440, %v498
    %v576 = vmul.f32 %v443, %v498
    %v577 = vmul.f32 %v446, %v498
    %v578 = vmul.f32 %v449, %v498
    %v579 = vmul.f32 %v452, %v498
    %v580 = vmul.f32 %v455, %v498
    %v581 = vmul.f32 %v458, %v498
    %v582 = vmul.f32 %v461, %v498
    %v583 = vmul.f32 %v464, %v498
    %v584 = vmul.f32 %v467, %v498
    %v585 = vmul.f32 %v470, %v498
    %v586 = vmul.f32 %v473, %v498
    %v587 = vmul.f32 %v476, %v498
    %v588 = vmul.f32 %v479, %v498
    %v589 = vmul.f32 %v482, %v498
    %v590 = vmul.f32 %v485, %v498
    %v591 = vmul.f32 %v488, %v498
    %v592 = vmul.f32 %v491, %v498
    %v593 = vmul.f32 %v494, %v498
    %v594 = vmul.f32 %v497, %v498
    %v595 = vsub.f32 %v18, %v499
    %v596 = vsub.f32 %v19, %v499
    %v597 = vsub.f32 %v20, %v500
    %v598 = vsub.f32 %v21, %v500
    %v599 = vsub.f32 %v22, %v501
    %v600 = vsub.f32 %v23, %v501
    %v601 = vsub.f32 %v24, %v502
    %v602 = vsub.f32 %v25, %v502
    %v603 = vsub.f32 %v26, %v503
    %v604 = vsub.f32 %v27, %v503
    %v605 = vsub.f32 %v28, %v504
    %v606 = vsub.f32 %v29, %v504
    %v607 = vsub.f32 %v30, %v505
    %v608 = vsub.f32 %v31, %v505
    %v609 = vsub.f32 %v32, %v506
    %v610 = vsub.f32 %v33, %v506
    %v611 = vsub.f32 %v34, %v507
    %v612 = vsub.f32 %v35, %v507
    %v613 = vsub.f32 %v36, %v508
    %v614 = vsub.f32 %v37, %v508
    %v615 = vsub.f32 %v38, %v509
    %v616 = vsub.f32 %v39, %v509
    %v617 = vsub.f32 %v40, %v510
    %v618 = vsub.f32 %v41, %v510
    %v619 = vsub.f32 %v42, %v511
    %v620 = vsub.f32 %v43, %v511
    %v621 = vsub.f32 %v44, %v512
    %v622 = vsub.f32 %v45, %v512
    %v623 = vsub.f32 %v46, %v513
    %v624 = vsub.f32 %v47, %v513
    %v625 = vsub.f32 %v48, %v514
    %v626 = vsub.f32 %v49, %v514
    %v627 = vsub.f32 %v50, %v515
    %v628 = vsub.f32 %v51, %v515
    %v629 = vsub.f32 %v52, %v516
    %v630 = vsub.f32 %v53, %v516
    %v631 = vsub.f32 %v54, %v517
    %v632 = vsub.f32 %v55, %v517
    %v633 = vsub.f32 %v56, %v518
    %v634 = vsub.f32 %v57, %v518
    %v635 = vsub.f32 %v58, %v519
    %v636 = vsub.f32 %v59, %v519
    %v637 = vsub.f32 %v60, %v520
    %v638 = vsub.f32 %v61, %v520
    %v639 = vsub.f32 %v62, %v521
    %v640 = vsub.f32 %v63, %v521
    %v641 = vsub.f32 %v64, %v522
    %v642 = vsub.f32 %v65, %v522
    %v643 = vsub.f32 %v66, %v523
    %v644 = vsub.f32 %v67, %v523
    %v645 = vsub.f32 %v68, %v524
    %v646 = vsub.f32 %v69, %v524
    %v647 = vsub.f32 %v70, %v525
    %v648 = vsub.f32 %v71, %v525
    %v649 = vsub.f32 %v72, %v526
    %v650 = vsub.f32 %v73, %v526
    %v651 = vsub.f32 %v74, %v527
    %v652 = vsub.f32 %v75, %v527
    %v653 = vsub.f32 %v76, %v528
    %v654 = vsub.f32 %v77, %v528
    %v655 = vsub.f32 %v78, %v529
    %v656 = vsub.f32 %v79, %v529
    %v657 = vsub.f32 %v80, %v530
    %v658 = vsub.f32 %v81, %v530
    %v659 = vsub.f32 %v82, %v531
    %v660 = vsub.f32 %v83, %v531
    %v661 = vsub.f32 %v84, %v532
    %v662 = vsub.f32 %v85, %v532
    %v663 = vsub.f32 %v86, %v533
    %v664 = vsub.f32 %v87, %v533
    %v665 = vsub.f32 %v88, %v534
    %v666 = vsub.f32 %v89, %v534
    %v667 = vsub.f32 %v90, %v535
    %v668 = vsub.f32 %v91, %v535
    %v669 = vsub.f32 %v92, %v536
    %v670 = vsub.f32 %v93, %v536
    %v671 = vsub.f32 %v94, %v537
    %v672 = vsub.f32 %v95, %v537
    %v673 = vsub.f32 %v96, %v538
    %v674 = vsub.f32 %v97, %v538
    %v675 = vsub.f32 %v98, %v539
    %v676 = vsub.f32 %v99, %v539
    %v677 = vsub.f32 %v100, %v540
    %v678 = vsub.f32 %v101, %v540
    %v679 = vsub.f32 %v102, %v541
    %v680 = vsub.f32 %v103, %v541
    %v681 = vsub.f32 %v104, %v542
    %v682 = vsub.f32 %v105, %v542
    %v683 = vsub.f32 %v106, %v543
    %v684 = vsub.f32 %v107, %v543
    %v685 = vsub.f32 %v108, %v544
    %v686 = vsub.f32 %v109, %v544
    %v687 = vsub.f32 %v110, %v545
    %v688 = vsub.f32 %v111, %v545
    %v689 = vsub.f32 %v112, %v546
    %v690 = vsub.f32 %v113, %v546
    %v691 = vsub.f32 %v114, %v547
    %v692 = vsub.f32 %v115, %v547
    %v693 = vsub.f32 %v116, %v548
    %v694 = vsub.f32 %v117, %v548
    %v695 = vsub.f32 %v118, %v549
    %v696 = vsub.f32 %v119, %v549
    %v697 = vsub.f32 %v120, %v550
    %v698 = vsub.f32 %v121, %v550
    %v699 = vsub.f32 %v122, %v551
    %v700 = vsub.f32 %v123, %v551
    %v701 = vsub.f32 %v124, %v552
    %v702 = vsub.f32 %v125, %v552
    %v703 = vsub.f32 %v126, %v553
    %v704 = vsub.f32 %v127, %v553
    %v705 = vsub.f32 %v128, %v554
    %v706 = vsub.f32 %v129, %v554
    %v707 = vsub.f32 %v130, %v555
    %v708 = vsub.f32 %v131, %v555
    %v709 = vsub.f32 %v132, %v556
    %v710 = vsub.f32 %v133, %v556
    %v711 = vsub.f32 %v134, %v557
    %v712 = vsub.f32 %v135, %v557
    %v713 = vsub.f32 %v136, %v558
    %v714 = vsub.f32 %v137, %v558
    %v715 = vsub.f32 %v138, %v559
    %v716 = vsub.f32 %v139, %v559
    %v717 = vsub.f32 %v140, %v560
    %v718 = vsub.f32 %v141, %v560
    %v719 = vsub.f32 %v142, %v561
    %v720 = vsub.f32 %v143, %v561
    %v721 = vsub.f32 %v144, %v562
    %v722 = vsub.f32 %v145, %v562
    %v723 = vsub.f32 %v146, %v563
    %v724 = vsub.f32 %v147, %v563
    %v725 = vsub.f32 %v148, %v564
    %v726 = vsub.f32 %v149, %v564
    %v727 = vsub.f32 %v150, %v565
    %v728 = vsub.f32 %v151, %v565
    %v729 = vsub.f32 %v152, %v566
    %v730 = vsub.f32 %v153, %v566
    %v731 = vsub.f32 %v154, %v567
    %v732 = vsub.f32 %v155, %v567
    %v733 = vsub.f32 %v156, %v568
    %v734 = vsub.f32 %v157, %v568
    %v735 = vsub.f32 %v158, %v569
    %v736 = vsub.f32 %v159, %v569
    %v737 = vsub.f32 %v160, %v570
    %v738 = vsub.f32 %v161, %v570
    %v739 = vsub.f32 %v162, %v571
    %v740 = vsub.f32 %v163, %v571
    %v741 = vsub.f32 %v164, %v572
    %v742 = vsub.f32 %v165, %v572
    %v743 = vsub.f32 %v166, %v573
    %v744 = vsub.f32 %v167, %v573
    %v745 = vsub.f32 %v168, %v574
    %v746 = vsub.f32 %v169, %v574
    %v747 = vsub.f32 %v170, %v575
    %v748 = vsub.f32 %v171, %v575
    %v749 = vsub.f32 %v172, %v576
    %v750 = vsub.f32 %v173, %v576
    %v751 = vsub.f32 %v174, %v577
    %v752 = vsub.f32 %v175, %v577
    %v753 = vsub.f32 %v176, %v578
    %v754 = vsub.f32 %v177, %v578
    %v755 = vsub.f32 %v178, %v579
    %v756 = vsub.f32 %v179, %v579
    %v757 = vsub.f32 %v180, %v580
    %v758 = vsub.f32 %v181, %v580
    %v759 = vsub.f32 %v182, %v581
    %v760 = vsub.f32 %v183, %v581
    %v761 = vsub.f32 %v184, %v582
    %v762 = vsub.f32 %v185, %v582
    %v763 = vsub.f32 %v186, %v583
    %v764 = vsub.f32 %v187, %v583
    %v765 = vsub.f32 %v188, %v584
    %v766 = vsub.f32 %v189, %v584
    %v767 = vsub.f32 %v190, %v585
    %v768 = vsub.f32 %v191, %v585
    %v769 = vsub.f32 %v192, %v586
    %v770 = vsub.f32 %v193, %v586
    %v771 = vsub.f32 %v194, %v587
    %v772 = vsub.f32 %v195, %v587
    %v773 = vsub.f32 %v196, %v588
    %v774 = vsub.f32 %v197, %v588
    %v775 = vsub.f32 %v198, %v589
    %v776 = vsub.f32 %v199, %v589
    %v777 = vsub.f32 %v200, %v590
    %v778 = vsub.f32 %v201, %v590
    %v779 = vsub.f32 %v202, %v591
    %v780 = vsub.f32 %v203, %v591
    %v781 = vsub.f32 %v204, %v592
    %v782 = vsub.f32 %v205, %v592
    %v783 = vsub.f32 %v206, %v593
    %v784 = vsub.f32 %v207, %v593
    %v785 = vsub.f32 %v208, %v594
    %v786 = vsub.f32 %v209, %v594
    %v787 = vmul.f32 %v595, %v595
    %v788 = vmul.f32 %v596, %v596
    %v789 = vmul.f32 %v597, %v597
    %v790 = vmul.f32 %v598, %v598
    %v791 = vmul.f32 %v599, %v599
    %v792 = vmul.f32 %v600, %v600
    %v793 = vmul.f32 %v601, %v601
    %v794 = vmul.f32 %v602, %v602
    %v795 = vmul.f32 %v603, %v603
    %v796 = vmul.f32 %v604, %v604
    %v797 = vmul.f32 %v605, %v605
    %v798 = vmul.f32 %v606, %v606
    %v799 = vmul.f32 %v607, %v607
    %v800 = vmul.f32 %v608, %v608
    %v801 = vmul.f32 %v609, %v609
    %v802 = vmul.f32 %v610, %v610
    %v803 = vmul.f32 %v611, %v611
    %v804 = vmul.f32 %v612, %v612
    %v805 = vmul.f32 %v613, %v613
    %v806 = vmul.f32 %v614, %v614
    %v807 = vmul.f32 %v615, %v615
    %v808 = vmul.f32 %v616, %v616
    %v809 = vmul.f32 %v617, %v617
    %v810 = vmul.f32 %v618, %v618
    %v811 = vmul.f32 %v619, %v619
    %v812 = vmul.f32 %v620, %v620
    %v813 = vmul.f32 %v621, %v621
    %v814 = vmul.f32 %v622, %v622
    %v815 = vmul.f32 %v623, %v623
    %v816 = vmul.f32 %v624, %v624
    %v817 = vmul.f32 %v625, %v625
    %v818 = vmul.f32 %v626, %v626
    %v819 = vmul.f32 %v627, %v627
    %v820 = vmul.f32 %v628, %v628
    %v821 = vmul.f32 %v629, %v629
    %v822 = vmul.f32 %v630, %v630
    %v823 = vmul.f32 %v631, %v631
    %v824 = vmul.f32 %v632, %v632
    %v825 = vmul.f32 %v633, %v633
    %v826 = vmul.f32 %v634, %v634
    %v827 = vmul.f32 %v635, %v635
    %v828 = vmul.f32 %v636, %v636
    %v829 = vmul.f32 %v637, %v637
    %v830 = vmul.f32 %v638, %v638
    %v831 = vmul.f32 %v639, %v639
    %v832 = vmul.f32 %v640, %v640
    %v833 = vmul.f32 %v641, %v641
    %v834 = vmul.f32 %v642, %v642
    %v835 = vmul.f32 %v643, %v643
    %v836 = vmul.f32 %v644, %v644
    %v837 = vmul.f32 %v645, %v645
    %v838 = vmul.f32 %v646, %v646
    %v839 = vmul.f32 %v647, %v647
    %v840 = vmul.f32 %v648, %v648
    %v841 = vmul.f32 %v649, %v649
    %v842 = vmul.f32 %v650, %v650
    %v843 = vmul.f32 %v651, %v651
    %v844 = vmul.f32 %v652, %v652
    %v845 = vmul.f32 %v653, %v653
    %v846 = vmul.f32 %v654, %v654
    %v847 = vmul.f32 %v655, %v655
    %v848 = vmul.f32 %v656, %v656
    %v849 = vmul.f32 %v657, %v657
    %v850 = vmul.f32 %v658, %v658
    %v851 = vmul.f32 %v659, %v659
    %v852 = vmul.f32 %v660, %v660
    %v853 = vmul.f32 %v661, %v661
    %v854 = vmul.f32 %v662, %v662
    %v855 = vmul.f32 %v663, %v663
    %v856 = vmul.f32 %v664, %v664
    %v857 = vmul.f32 %v665, %v665
    %v858 = vmul.f32 %v666, %v666
    %v859 = vmul.f32 %v667, %v667
    %v860 = vmul.f32 %v668, %v668
    %v861 = vmul.f32 %v669, %v669
    %v862 = vmul.f32 %v670, %v670
    %v863 = vmul.f32 %v671, %v671
    %v864 = vmul.f32 %v672, %v672
    %v865 = vmul.f32 %v673, %v673
    %v866 = vmul.f32 %v674, %v674
    %v867 = vmul.f32 %v675, %v675
    %v868 = vmul.f32 %v676, %v676
    %v869 = vmul.f32 %v677, %v677
    %v870 = vmul.f32 %v678, %v678
    %v871 = vmul.f32 %v679, %v679
    %v872 = vmul.f32 %v680, %v680
    %v873 = vmul.f32 %v681, %v681
    %v874 = vmul.f32 %v682, %v682
    %v875 = vmul.f32 %v683, %v683
    %v876 = vmul.f32 %v684, %v684
    %v877 = vmul.f32 %v685, %v685
    %v878 = vmul.f32 %v686, %v686
    %v879 = vmul.f32 %v687, %v687
    %v880 = vmul.f32 %v688, %v688
    %v881 = vmul.f32 %v689, %v689
    %v882 = vmul.f32 %v690, %v690
    %v883 = vmul.f32 %v691, %v691
    %v884 = vmul.f32 %v692, %v692
    %v885 = vmul.f32 %v693, %v693
    %v886 = vmul.f32 %v694, %v694
    %v887 = vmul.f32 %v695, %v695
    %v888 = vmul.f32 %v696, %v696
    %v889 = vmul.f32 %v697, %v697
    %v890 = vmul.f32 %v698, %v698
    %v891 = vmul.f32 %v699, %v699
    %v892 = vmul.f32 %v700, %v700
    %v893 = vmul.f32 %v701, %v701
    %v894 = vmul.f32 %v702, %v702
    %v895 = vmul.f32 %v703, %v703
    %v896 = vmul.f32 %v704, %v704
    %v897 = vmul.f32 %v705, %v705
    %v898 = vmul.f32 %v706, %v706
    %v899 = vmul.f32 %v707, %v707
    %v900 = vmul.f32 %v708, %v708
    %v901 = vmul.f32 %v709, %v709
    %v902 = vmul.f32 %v710, %v710
    %v903 = vmul.f32 %v711, %v711
    %v904 = vmul.f32 %v712, %v712
    %v905 = vmul.f32 %v713, %v713
    %v906 = vmul.f32 %v714, %v714
    %v907 = vmul.f32 %v715, %v715
    %v908 = vmul.f32 %v716, %v716
    %v909 = vmul.f32 %v717, %v717
    %v910 = vmul.f32 %v718, %v718
    %v911 = vmul.f32 %v719, %v719
    %v912 = vmul.f32 %v720, %v720
    %v913 = vmul.f32 %v721, %v721
    %v914 = vmul.f32 %v722, %v722
    %v915 = vmul.f32 %v723, %v723
    %v916 = vmul.f32 %v724, %v724
    %v917 = vmul.f32 %v725, %v725
    %v918 = vmul.f32 %v726, %v726
    %v919 = vmul.f32 %v727, %v727
    %v920 = vmul.f32 %v728, %v728
    %v921 = vmul.f32 %v729, %v729
    %v922 = vmul.f32 %v730, %v730
    %v923 = vmul.f32 %v731, %v731
    %v924 = vmul.f32 %v732, %v732
    %v925 = vmul.f32 %v733, %v733
    %v926 = vmul.f32 %v734, %v734
    %v927 = vmul.f32 %v735, %v735
    %v928 = vmul.f32 %v736, %v736
    %v929 = vmul.f32 %v737, %v737
    %v930 = vmul.f32 %v738, %v738
    %v931 = vmul.f32 %v739, %v739
    %v932 = vmul.f32 %v740, %v740
    %v933 = vmul.f32 %v741, %v741
    %v934 = vmul.f32 %v742, %v742
    %v935 = vmul.f32 %v743, %v743
    %v936 = vmul.f32 %v744, %v744
    %v937 = vmul.f32 %v745, %v745
    %v938 = vmul.f32 %v746, %v746
    %v939 = vmul.f32 %v747, %v747
    %v940 = vmul.f32 %v748, %v748
    %v941 = vmul.f32 %v749, %v749
    %v942 = vmul.f32 %v750, %v750
    %v943 = vmul.f32 %v751, %v751
    %v944 = vmul.f32 %v752, %v752
    %v945 = vmul.f32 %v753, %v753
    %v946 = vmul.f32 %v754, %v754
    %v947 = vmul.f32 %v755, %v755
    %v948 = vmul.f32 %v756, %v756
    %v949 = vmul.f32 %v757, %v757
    %v950 = vmul.f32 %v758, %v758
    %v951 = vmul.f32 %v759, %v759
    %v952 = vmul.f32 %v760, %v760
    %v953 = vmul.f32 %v761, %v761
    %v954 = vmul.f32 %v762, %v762
    %v955 = vmul.f32 %v763, %v763
    %v956 = vmul.f32 %v764, %v764
    %v957 = vmul.f32 %v765, %v765
    %v958 = vmul.f32 %v766, %v766
    %v959 = vmul.f32 %v767, %v767
    %v960 = vmul.f32 %v768, %v768
    %v961 = vmul.f32 %v769, %v769
    %v962 = vmul.f32 %v770, %v770
    %v963 = vmul.f32 %v771, %v771
    %v964 = vmul.f32 %v772, %v772
    %v965 = vmul.f32 %v773, %v773
    %v966 = vmul.f32 %v774, %v774
    %v967 = vmul.f32 %v775, %v775
    %v968 = vmul.f32 %v776, %v776
    %v969 = vmul.f32 %v777, %v777
    %v970 = vmul.f32 %v778, %v778
    %v971 = vmul.f32 %v779, %v779
    %v972 = vmul.f32 %v780, %v780
    %v973 = vmul.f32 %v781, %v781
    %v974 = vmul.f32 %v782, %v782
    %v975 = vmul.f32 %v783, %v783
    %v976 = vmul.f32 %v784, %v784
    %v977 = vmul.f32 %v785, %v785
    %v978 = vmul.f32 %v786, %v786
    %v979 = vadd.f32 %v787, %v788
    %980 = vadd.xlane.f32.xlu0 %v979
    %v981 = vpop.xlane.xlu0 %980
    %v982 = vadd.f32 %v789, %v790
    %983 = vadd.xlane.f32.xlu0 %v982
    %v984 = vpop.xlane.xlu0 %983
    %v985 = vadd.f32 %v791, %v792
    %986 = vadd.xlane.f32.xlu0 %v985
    %v987 = vpop.xlane.xlu0 %986
    %v988 = vadd.f32 %v793, %v794
    %989 = vadd.xlane.f32.xlu0 %v988
    %v990 = vpop.xlane.xlu0 %989
    %v991 = vadd.f32 %v795, %v796
    %992 = vadd.xlane.f32.xlu0 %v991
    %v993 = vpop.xlane.xlu0 %992
    %v994 = vadd.f32 %v797, %v798
    %995 = vadd.xlane.f32.xlu0 %v994
    %v996 = vpop.xlane.xlu0 %995
    %v997 = vadd.f32 %v799, %v800
    %998 = vadd.xlane.f32.xlu0 %v997
    %v999 = vpop.xlane.xlu0 %998
    %v1000 = vadd.f32 %v801, %v802
    %1001 = vadd.xlane.f32.xlu0 %v1000
    %v1002 = vpop.xlane.xlu0 %1001
    %v1003 = vadd.f32 %v803, %v804
    %1004 = vadd.xlane.f32.xlu0 %v1003
    %v1005 = vpop.xlane.xlu0 %1004
    %v1006 = vadd.f32 %v805, %v806
    %1007 = vadd.xlane.f32.xlu0 %v1006
    %v1008 = vpop.xlane.xlu0 %1007
    %v1009 = vadd.f32 %v807, %v808
    %1010 = vadd.xlane.f32.xlu0 %v1009
    %v1011 = vpop.xlane.xlu0 %1010
    %v1012 = vadd.f32 %v809, %v810
    %1013 = vadd.xlane.f32.xlu0 %v1012
    %v1014 = vpop.xlane.xlu0 %1013
    %v1015 = vadd.f32 %v811, %v812
    %1016 = vadd.xlane.f32.xlu0 %v1015
    %v1017 = vpop.xlane.xlu0 %1016
    %v1018 = vadd.f32 %v813, %v814
    %1019 = vadd.xlane.f32.xlu0 %v1018
    %v1020 = vpop.xlane.xlu0 %1019
    %v1021 = vadd.f32 %v815, %v816
    %1022 = vadd.xlane.f32.xlu0 %v1021
    %v1023 = vpop.xlane.xlu0 %1022
    %v1024 = vadd.f32 %v817, %v818
    %1025 = vadd.xlane.f32.xlu0 %v1024
    %v1026 = vpop.xlane.xlu0 %1025
    %v1027 = vadd.f32 %v819, %v820
    %1028 = vadd.xlane.f32.xlu0 %v1027
    %v1029 = vpop.xlane.xlu0 %1028
    %v1030 = vadd.f32 %v821, %v822
    %1031 = vadd.xlane.f32.xlu0 %v1030
    %v1032 = vpop.xlane.xlu0 %1031
    %v1033 = vadd.f32 %v823, %v824
    %1034 = vadd.xlane.f32.xlu0 %v1033
    %v1035 = vpop.xlane.xlu0 %1034
    %v1036 = vadd.f32 %v825, %v826
    %1037 = vadd.xlane.f32.xlu0 %v1036
    %v1038 = vpop.xlane.xlu0 %1037
    %v1039 = vadd.f32 %v827, %v828
    %1040 = vadd.xlane.f32.xlu0 %v1039
    %v1041 = vpop.xlane.xlu0 %1040
    %v1042 = vadd.f32 %v829, %v830
    %1043 = vadd.xlane.f32.xlu0 %v1042
    %v1044 = vpop.xlane.xlu0 %1043
    %v1045 = vadd.f32 %v831, %v832
    %1046 = vadd.xlane.f32.xlu0 %v1045
    %v1047 = vpop.xlane.xlu0 %1046
    %v1048 = vadd.f32 %v833, %v834
    %1049 = vadd.xlane.f32.xlu0 %v1048
    %v1050 = vpop.xlane.xlu0 %1049
    %v1051 = vadd.f32 %v835, %v836
    %1052 = vadd.xlane.f32.xlu0 %v1051
    %v1053 = vpop.xlane.xlu0 %1052
    %v1054 = vadd.f32 %v837, %v838
    %1055 = vadd.xlane.f32.xlu0 %v1054
    %v1056 = vpop.xlane.xlu0 %1055
    %v1057 = vadd.f32 %v839, %v840
    %1058 = vadd.xlane.f32.xlu0 %v1057
    %v1059 = vpop.xlane.xlu0 %1058
    %v1060 = vadd.f32 %v841, %v842
    %1061 = vadd.xlane.f32.xlu0 %v1060
    %v1062 = vpop.xlane.xlu0 %1061
    %v1063 = vadd.f32 %v843, %v844
    %1064 = vadd.xlane.f32.xlu0 %v1063
    %v1065 = vpop.xlane.xlu0 %1064
    %v1066 = vadd.f32 %v845, %v846
    %1067 = vadd.xlane.f32.xlu0 %v1066
    %v1068 = vpop.xlane.xlu0 %1067
    %v1069 = vadd.f32 %v847, %v848
    %1070 = vadd.xlane.f32.xlu0 %v1069
    %v1071 = vpop.xlane.xlu0 %1070
    %v1072 = vadd.f32 %v849, %v850
    %1073 = vadd.xlane.f32.xlu0 %v1072
    %v1074 = vpop.xlane.xlu0 %1073
    %v1075 = vadd.f32 %v851, %v852
    %1076 = vadd.xlane.f32.xlu0 %v1075
    %v1077 = vpop.xlane.xlu0 %1076
    %v1078 = vadd.f32 %v853, %v854
    %1079 = vadd.xlane.f32.xlu0 %v1078
    %v1080 = vpop.xlane.xlu0 %1079
    %v1081 = vadd.f32 %v855, %v856
    %1082 = vadd.xlane.f32.xlu0 %v1081
    %v1083 = vpop.xlane.xlu0 %1082
    %v1084 = vadd.f32 %v857, %v858
    %1085 = vadd.xlane.f32.xlu0 %v1084
    %v1086 = vpop.xlane.xlu0 %1085
    %v1087 = vadd.f32 %v859, %v860
    %1088 = vadd.xlane.f32.xlu0 %v1087
    %v1089 = vpop.xlane.xlu0 %1088
    %v1090 = vadd.f32 %v861, %v862
    %1091 = vadd.xlane.f32.xlu0 %v1090
    %v1092 = vpop.xlane.xlu0 %1091
    %v1093 = vadd.f32 %v863, %v864
    %1094 = vadd.xlane.f32.xlu0 %v1093
    %v1095 = vpop.xlane.xlu0 %1094
    %v1096 = vadd.f32 %v865, %v866
    %1097 = vadd.xlane.f32.xlu0 %v1096
    %v1098 = vpop.xlane.xlu0 %1097
    %v1099 = vadd.f32 %v867, %v868
    %1100 = vadd.xlane.f32.xlu0 %v1099
    %v1101 = vpop.xlane.xlu0 %1100
    %v1102 = vadd.f32 %v869, %v870
    %1103 = vadd.xlane.f32.xlu0 %v1102
    %v1104 = vpop.xlane.xlu0 %1103
    %v1105 = vadd.f32 %v871, %v872
    %1106 = vadd.xlane.f32.xlu0 %v1105
    %v1107 = vpop.xlane.xlu0 %1106
    %v1108 = vadd.f32 %v873, %v874
    %1109 = vadd.xlane.f32.xlu0 %v1108
    %v1110 = vpop.xlane.xlu0 %1109
    %v1111 = vadd.f32 %v875, %v876
    %1112 = vadd.xlane.f32.xlu0 %v1111
    %v1113 = vpop.xlane.xlu0 %1112
    %v1114 = vadd.f32 %v877, %v878
    %1115 = vadd.xlane.f32.xlu0 %v1114
    %v1116 = vpop.xlane.xlu0 %1115
    %v1117 = vadd.f32 %v879, %v880
    %1118 = vadd.xlane.f32.xlu0 %v1117
    %v1119 = vpop.xlane.xlu0 %1118
    %v1120 = vadd.f32 %v881, %v882
    %1121 = vadd.xlane.f32.xlu0 %v1120
    %v1122 = vpop.xlane.xlu0 %1121
    %v1123 = vadd.f32 %v883, %v884
    %1124 = vadd.xlane.f32.xlu0 %v1123
    %v1125 = vpop.xlane.xlu0 %1124
    %v1126 = vadd.f32 %v885, %v886
    %1127 = vadd.xlane.f32.xlu0 %v1126
    %v1128 = vpop.xlane.xlu0 %1127
    %v1129 = vadd.f32 %v887, %v888
    %1130 = vadd.xlane.f32.xlu0 %v1129
    %v1131 = vpop.xlane.xlu0 %1130
    %v1132 = vadd.f32 %v889, %v890
    %1133 = vadd.xlane.f32.xlu0 %v1132
    %v1134 = vpop.xlane.xlu0 %1133
    %v1135 = vadd.f32 %v891, %v892
    %1136 = vadd.xlane.f32.xlu0 %v1135
    %v1137 = vpop.xlane.xlu0 %1136
    %v1138 = vadd.f32 %v893, %v894
    %1139 = vadd.xlane.f32.xlu0 %v1138
    %v1140 = vpop.xlane.xlu0 %1139
    %v1141 = vadd.f32 %v895, %v896
    %1142 = vadd.xlane.f32.xlu0 %v1141
    %v1143 = vpop.xlane.xlu0 %1142
    %v1144 = vadd.f32 %v897, %v898
    %1145 = vadd.xlane.f32.xlu0 %v1144
    %v1146 = vpop.xlane.xlu0 %1145
    %v1147 = vadd.f32 %v899, %v900
    %1148 = vadd.xlane.f32.xlu0 %v1147
    %v1149 = vpop.xlane.xlu0 %1148
    %v1150 = vadd.f32 %v901, %v902
    %1151 = vadd.xlane.f32.xlu0 %v1150
    %v1152 = vpop.xlane.xlu0 %1151
    %v1153 = vadd.f32 %v903, %v904
    %1154 = vadd.xlane.f32.xlu0 %v1153
    %v1155 = vpop.xlane.xlu0 %1154
    %v1156 = vadd.f32 %v905, %v906
    %1157 = vadd.xlane.f32.xlu0 %v1156
    %v1158 = vpop.xlane.xlu0 %1157
    %v1159 = vadd.f32 %v907, %v908
    %1160 = vadd.xlane.f32.xlu0 %v1159
    %v1161 = vpop.xlane.xlu0 %1160
    %v1162 = vadd.f32 %v909, %v910
    %1163 = vadd.xlane.f32.xlu0 %v1162
    %v1164 = vpop.xlane.xlu0 %1163
    %v1165 = vadd.f32 %v911, %v912
    %1166 = vadd.xlane.f32.xlu0 %v1165
    %v1167 = vpop.xlane.xlu0 %1166
    %v1168 = vadd.f32 %v913, %v914
    %1169 = vadd.xlane.f32.xlu0 %v1168
    %v1170 = vpop.xlane.xlu0 %1169
    %v1171 = vadd.f32 %v915, %v916
    %1172 = vadd.xlane.f32.xlu0 %v1171
    %v1173 = vpop.xlane.xlu0 %1172
    %v1174 = vadd.f32 %v917, %v918
    %1175 = vadd.xlane.f32.xlu0 %v1174
    %v1176 = vpop.xlane.xlu0 %1175
    %v1177 = vadd.f32 %v919, %v920
    %1178 = vadd.xlane.f32.xlu0 %v1177
    %v1179 = vpop.xlane.xlu0 %1178
    %v1180 = vadd.f32 %v921, %v922
    %1181 = vadd.xlane.f32.xlu0 %v1180
    %v1182 = vpop.xlane.xlu0 %1181
    %v1183 = vadd.f32 %v923, %v924
    %1184 = vadd.xlane.f32.xlu0 %v1183
    %v1185 = vpop.xlane.xlu0 %1184
    %v1186 = vadd.f32 %v925, %v926
    %1187 = vadd.xlane.f32.xlu0 %v1186
    %v1188 = vpop.xlane.xlu0 %1187
    %v1189 = vadd.f32 %v927, %v928
    %1190 = vadd.xlane.f32.xlu0 %v1189
    %v1191 = vpop.xlane.xlu0 %1190
    %v1192 = vadd.f32 %v929, %v930
    %1193 = vadd.xlane.f32.xlu0 %v1192
    %v1194 = vpop.xlane.xlu0 %1193
    %v1195 = vadd.f32 %v931, %v932
    %1196 = vadd.xlane.f32.xlu0 %v1195
    %v1197 = vpop.xlane.xlu0 %1196
    %v1198 = vadd.f32 %v933, %v934
    %1199 = vadd.xlane.f32.xlu0 %v1198
    %v1200 = vpop.xlane.xlu0 %1199
    %v1201 = vadd.f32 %v935, %v936
    %1202 = vadd.xlane.f32.xlu0 %v1201
    %v1203 = vpop.xlane.xlu0 %1202
    %v1204 = vadd.f32 %v937, %v938
    %1205 = vadd.xlane.f32.xlu0 %v1204
    %v1206 = vpop.xlane.xlu0 %1205
    %v1207 = vadd.f32 %v939, %v940
    %1208 = vadd.xlane.f32.xlu0 %v1207
    %v1209 = vpop.xlane.xlu0 %1208
    %v1210 = vadd.f32 %v941, %v942
    %1211 = vadd.xlane.f32.xlu0 %v1210
    %v1212 = vpop.xlane.xlu0 %1211
    %v1213 = vadd.f32 %v943, %v944
    %1214 = vadd.xlane.f32.xlu0 %v1213
    %v1215 = vpop.xlane.xlu0 %1214
    %v1216 = vadd.f32 %v945, %v946
    %1217 = vadd.xlane.f32.xlu0 %v1216
    %v1218 = vpop.xlane.xlu0 %1217
    %v1219 = vadd.f32 %v947, %v948
    %1220 = vadd.xlane.f32.xlu0 %v1219
    %v1221 = vpop.xlane.xlu0 %1220
    %v1222 = vadd.f32 %v949, %v950
    %1223 = vadd.xlane.f32.xlu0 %v1222
    %v1224 = vpop.xlane.xlu0 %1223
    %v1225 = vadd.f32 %v951, %v952
    %1226 = vadd.xlane.f32.xlu0 %v1225
    %v1227 = vpop.xlane.xlu0 %1226
    %v1228 = vadd.f32 %v953, %v954
    %1229 = vadd.xlane.f32.xlu0 %v1228
    %v1230 = vpop.xlane.xlu0 %1229
    %v1231 = vadd.f32 %v955, %v956
    %1232 = vadd.xlane.f32.xlu0 %v1231
    %v1233 = vpop.xlane.xlu0 %1232
    %v1234 = vadd.f32 %v957, %v958
    %1235 = vadd.xlane.f32.xlu0 %v1234
    %v1236 = vpop.xlane.xlu0 %1235
    %v1237 = vadd.f32 %v959, %v960
    %1238 = vadd.xlane.f32.xlu0 %v1237
    %v1239 = vpop.xlane.xlu0 %1238
    %v1240 = vadd.f32 %v961, %v962
    %1241 = vadd.xlane.f32.xlu0 %v1240
    %v1242 = vpop.xlane.xlu0 %1241
    %v1243 = vadd.f32 %v963, %v964
    %1244 = vadd.xlane.f32.xlu0 %v1243
    %v1245 = vpop.xlane.xlu0 %1244
    %v1246 = vadd.f32 %v965, %v966
    %1247 = vadd.xlane.f32.xlu0 %v1246
    %v1248 = vpop.xlane.xlu0 %1247
    %v1249 = vadd.f32 %v967, %v968
    %1250 = vadd.xlane.f32.xlu0 %v1249
    %v1251 = vpop.xlane.xlu0 %1250
    %v1252 = vadd.f32 %v969, %v970
    %1253 = vadd.xlane.f32.xlu0 %v1252
    %v1254 = vpop.xlane.xlu0 %1253
    %v1255 = vadd.f32 %v971, %v972
    %1256 = vadd.xlane.f32.xlu0 %v1255
    %v1257 = vpop.xlane.xlu0 %1256
    %v1258 = vadd.f32 %v973, %v974
    %1259 = vadd.xlane.f32.xlu0 %v1258
    %v1260 = vpop.xlane.xlu0 %1259
    %v1261 = vadd.f32 %v975, %v976
    %1262 = vadd.xlane.f32.xlu0 %v1261
    %v1263 = vpop.xlane.xlu0 %1262
    %v1264 = vadd.f32 %v977, %v978
    %1265 = vadd.xlane.f32.xlu0 %v1264
    %v1266 = vpop.xlane.xlu0 %1265
    %v1267 = vmul.f32 %v981, 0.003921569
    %v1268 = vmul.f32 %v984, 0.003921569
    %v1269 = vmul.f32 %v987, 0.003921569
    %v1270 = vmul.f32 %v990, 0.003921569
    %v1271 = vmul.f32 %v993, 0.003921569
    %v1272 = vmul.f32 %v996, 0.003921569
    %v1273 = vmul.f32 %v999, 0.003921569
    %v1274 = vmul.f32 %v1002, 0.003921569
    %v1275 = vmul.f32 %v1005, 0.003921569
    %v1276 = vmul.f32 %v1008, 0.003921569
    %v1277 = vmul.f32 %v1011, 0.003921569
    %v1278 = vmul.f32 %v1014, 0.003921569
    %v1279 = vmul.f32 %v1017, 0.003921569
    %v1280 = vmul.f32 %v1020, 0.003921569
    %v1281 = vmul.f32 %v1023, 0.003921569
    %v1282 = vmul.f32 %v1026, 0.003921569
    %v1283 = vmul.f32 %v1029, 0.003921569
    %v1284 = vmul.f32 %v1032, 0.003921569
    %v1285 = vmul.f32 %v1035, 0.003921569
    %v1286 = vmul.f32 %v1038, 0.003921569
    %v1287 = vmul.f32 %v1041, 0.003921569
    %v1288 = vmul.f32 %v1044, 0.003921569
    %v1289 = vmul.f32 %v1047, 0.003921569
    %v1290 = vmul.f32 %v1050, 0.003921569
    %v1291 = vmul.f32 %v1053, 0.003921569
    %v1292 = vmul.f32 %v1056, 0.003921569
    %v1293 = vmul.f32 %v1059, 0.003921569
    %v1294 = vmul.f32 %v1062, 0.003921569
    %v1295 = vmul.f32 %v1065, 0.003921569
    %v1296 = vmul.f32 %v1068, 0.003921569
    %v1297 = vmul.f32 %v1071, 0.003921569
    %v1298 = vmul.f32 %v1074, 0.003921569
    %v1299 = vmul.f32 %v1077, 0.003921569
    %v1300 = vmul.f32 %v1080, 0.003921569
    %v1301 = vmul.f32 %v1083, 0.003921569
    %v1302 = vmul.f32 %v1086, 0.003921569
    %v1303 = vmul.f32 %v1089, 0.003921569
    %v1304 = vmul.f32 %v1092, 0.003921569
    %v1305 = vmul.f32 %v1095, 0.003921569
    %v1306 = vmul.f32 %v1098, 0.003921569
    %v1307 = vmul.f32 %v1101, 0.003921569
    %v1308 = vmul.f32 %v1104, 0.003921569
    %v1309 = vmul.f32 %v1107, 0.003921569
    %v1310 = vmul.f32 %v1110, 0.003921569
    %v1311 = vmul.f32 %v1113, 0.003921569
    %v1312 = vmul.f32 %v1116, 0.003921569
    %v1313 = vmul.f32 %v1119, 0.003921569
    %v1314 = vmul.f32 %v1122, 0.003921569
    %v1315 = vmul.f32 %v1125, 0.003921569
    %v1316 = vmul.f32 %v1128, 0.003921569
    %v1317 = vmul.f32 %v1131, 0.003921569
    %v1318 = vmul.f32 %v1134, 0.003921569
    %v1319 = vmul.f32 %v1137, 0.003921569
    %v1320 = vmul.f32 %v1140, 0.003921569
    %v1321 = vmul.f32 %v1143, 0.003921569
    %v1322 = vmul.f32 %v1146, 0.003921569
    %v1323 = vmul.f32 %v1149, 0.003921569
    %v1324 = vmul.f32 %v1152, 0.003921569
    %v1325 = vmul.f32 %v1155, 0.003921569
    %v1326 = vmul.f32 %v1158, 0.003921569
    %v1327 = vmul.f32 %v1161, 0.003921569
    %v1328 = vmul.f32 %v1164, 0.003921569
    %v1329 = vmul.f32 %v1167, 0.003921569
    %v1330 = vmul.f32 %v1170, 0.003921569
    %v1331 = vmul.f32 %v1173, 0.003921569
    %v1332 = vmul.f32 %v1176, 0.003921569
    %v1333 = vmul.f32 %v1179, 0.003921569
    %v1334 = vmul.f32 %v1182, 0.003921569
    %v1335 = vmul.f32 %v1185, 0.003921569
    %v1336 = vmul.f32 %v1188, 0.003921569
    %v1337 = vmul.f32 %v1191, 0.003921569
    %v1338 = vmul.f32 %v1194, 0.003921569
    %v1339 = vmul.f32 %v1197, 0.003921569
    %v1340 = vmul.f32 %v1200, 0.003921569
    %v1341 = vmul.f32 %v1203, 0.003921569
    %v1342 = vmul.f32 %v1206, 0.003921569
    %v1343 = vmul.f32 %v1209, 0.003921569
    %v1344 = vmul.f32 %v1212, 0.003921569
    %v1345 = vmul.f32 %v1215, 0.003921569
    %v1346 = vmul.f32 %v1218, 0.003921569
    %v1347 = vmul.f32 %v1221, 0.003921569
    %v1348 = vmul.f32 %v1224, 0.003921569
    %v1349 = vmul.f32 %v1227, 0.003921569
    %v1350 = vmul.f32 %v1230, 0.003921569
    %v1351 = vmul.f32 %v1233, 0.003921569
    %v1352 = vmul.f32 %v1236, 0.003921569
    %v1353 = vmul.f32 %v1239, 0.003921569
    %v1354 = vmul.f32 %v1242, 0.003921569
    %v1355 = vmul.f32 %v1245, 0.003921569
    %v1356 = vmul.f32 %v1248, 0.003921569
    %v1357 = vmul.f32 %v1251, 0.003921569
    %v1358 = vmul.f32 %v1254, 0.003921569
    %v1359 = vmul.f32 %v1257, 0.003921569
    %v1360 = vmul.f32 %v1260, 0.003921569
    %v1361 = vmul.f32 %v1263, 0.003921569
    %v1362 = vmul.f32 %v1266, 0.003921569
    %v1363 = vadd.f32 %v1267, 1e-05
    %v1364 = vadd.f32 %v1268, 1e-05
    %v1365 = vadd.f32 %v1269, 1e-05
    %v1366 = vadd.f32 %v1270, 1e-05
    %v1367 = vadd.f32 %v1271, 1e-05
    %v1368 = vadd.f32 %v1272, 1e-05
    %v1369 = vadd.f32 %v1273, 1e-05
    %v1370 = vadd.f32 %v1274, 1e-05
    %v1371 = vadd.f32 %v1275, 1e-05
    %v1372 = vadd.f32 %v1276, 1e-05
    %v1373 = vadd.f32 %v1277, 1e-05
    %v1374 = vadd.f32 %v1278, 1e-05
    %v1375 = vadd.f32 %v1279, 1e-05
    %v1376 = vadd.f32 %v1280, 1e-05
    %v1377 = vadd.f32 %v1281, 1e-05
    %v1378 = vadd.f32 %v1282, 1e-05
    %v1379 = vadd.f32 %v1283, 1e-05
    %v1380 = vadd.f32 %v1284, 1e-05
    %v1381 = vadd.f32 %v1285, 1e-05
    %v1382 = vadd.f32 %v1286, 1e-05
    %v1383 = vadd.f32 %v1287, 1e-05
    %v1384 = vadd.f32 %v1288, 1e-05
    %v1385 = vadd.f32 %v1289, 1e-05
    %v1386 = vadd.f32 %v1290, 1e-05
    %v1387 = vadd.f32 %v1291, 1e-05
    %v1388 = vadd.f32 %v1292, 1e-05
    %v1389 = vadd.f32 %v1293, 1e-05
    %v1390 = vadd.f32 %v1294, 1e-05
    %v1391 = vadd.f32 %v1295, 1e-05
    %v1392 = vadd.f32 %v1296, 1e-05
    %v1393 = vadd.f32 %v1297, 1e-05
    %v1394 = vadd.f32 %v1298, 1e-05
    %v1395 = vadd.f32 %v1299, 1e-05
    %v1396 = vadd.f32 %v1300, 1e-05
    %v1397 = vadd.f32 %v1301, 1e-05
    %v1398 = vadd.f32 %v1302, 1e-05
    %v1399 = vadd.f32 %v1303, 1e-05
    %v1400 = vadd.f32 %v1304, 1e-05
    %v1401 = vadd.f32 %v1305, 1e-05
    %v1402 = vadd.f32 %v1306, 1e-05
    %v1403 = vadd.f32 %v1307, 1e-05
    %v1404 = vadd.f32 %v1308, 1e-05
    %v1405 = vadd.f32 %v1309, 1e-05
    %v1406 = vadd.f32 %v1310, 1e-05
    %v1407 = vadd.f32 %v1311, 1e-05
    %v1408 = vadd.f32 %v1312, 1e-05
    %v1409 = vadd.f32 %v1313, 1e-05
    %v1410 = vadd.f32 %v1314, 1e-05
    %v1411 = vadd.f32 %v1315, 1e-05
    %v1412 = vadd.f32 %v1316, 1e-05
    %v1413 = vadd.f32 %v1317, 1e-05
    %v1414 = vadd.f32 %v1318, 1e-05
    %v1415 = vadd.f32 %v1319, 1e-05
    %v1416 = vadd.f32 %v1320, 1e-05
    %v1417 = vadd.f32 %v1321, 1e-05
    %v1418 = vadd.f32 %v1322, 1e-05
    %v1419 = vadd.f32 %v1323, 1e-05
    %v1420 = vadd.f32 %v1324, 1e-05
    %v1421 = vadd.f32 %v1325, 1e-05
    %v1422 = vadd.f32 %v1326, 1e-05
    %v1423 = vadd.f32 %v1327, 1e-05
    %v1424 = vadd.f32 %v1328, 1e-05
    %v1425 = vadd.f32 %v1329, 1e-05
    %v1426 = vadd.f32 %v1330, 1e-05
    %v1427 = vadd.f32 %v1331, 1e-05
    %v1428 = vadd.f32 %v1332, 1e-05
    %v1429 = vadd.f32 %v1333, 1e-05
    %v1430 = vadd.f32 %v1334, 1e-05
    %v1431 = vadd.f32 %v1335, 1e-05
    %v1432 = vadd.f32 %v1336, 1e-05
    %v1433 = vadd.f32 %v1337, 1e-05
    %v1434 = vadd.f32 %v1338, 1e-05
    %v1435 = vadd.f32 %v1339, 1e-05
    %v1436 = vadd.f32 %v1340, 1e-05
    %v1437 = vadd.f32 %v1341, 1e-05
    %v1438 = vadd.f32 %v1342, 1e-05
    %v1439 = vadd.f32 %v1343, 1e-05
    %v1440 = vadd.f32 %v1344, 1e-05
    %v1441 = vadd.f32 %v1345, 1e-05
    %v1442 = vadd.f32 %v1346, 1e-05
    %v1443 = vadd.f32 %v1347, 1e-05
    %v1444 = vadd.f32 %v1348, 1e-05
    %v1445 = vadd.f32 %v1349, 1e-05
    %v1446 = vadd.f32 %v1350, 1e-05
    %v1447 = vadd.f32 %v1351, 1e-05
    %v1448 = vadd.f32 %v1352, 1e-05
    %v1449 = vadd.f32 %v1353, 1e-05
    %v1450 = vadd.f32 %v1354, 1e-05
    %v1451 = vadd.f32 %v1355, 1e-05
    %v1452 = vadd.f32 %v1356, 1e-05
    %v1453 = vadd.f32 %v1357, 1e-05
    %v1454 = vadd.f32 %v1358, 1e-05
    %v1455 = vadd.f32 %v1359, 1e-05
    %v1456 = vadd.f32 %v1360, 1e-05
    %v1457 = vadd.f32 %v1361, 1e-05
    %v1458 = vadd.f32 %v1362, 1e-05
    %v1459 = vrsqrt.pop %v1363
    %v1460 = vmul.f32 %v1363, %v1459
    %vm1461 = vcmp.eq.f32.partialorder %v1363, inf
    %v1462 = vsel %vm1461, %v1363, %v1460
    %vm1463 = vcmp.eq.f32.partialorder %v1363, 0.0
    %v1464 = vand.u32 %v1363, 2147483648
    %v1465 = vsel %vm1463, %v1464, %v1462
    %v1466 = vrsqrt.pop %v1364
    %v1467 = vmul.f32 %v1364, %v1466
    %vm1468 = vcmp.eq.f32.partialorder %v1364, inf
    %v1469 = vsel %vm1468, %v1364, %v1467
    %vm1470 = vcmp.eq.f32.partialorder %v1364, 0.0
    %v1471 = vand.u32 %v1364, 2147483648
    %v1472 = vsel %vm1470, %v1471, %v1469
    %v1473 = vrsqrt.pop %v1365
    %v1474 = vmul.f32 %v1365, %v1473
    %vm1475 = vcmp.eq.f32.partialorder %v1365, inf
    %v1476 = vsel %vm1475, %v1365, %v1474
    %vm1477 = vcmp.eq.f32.partialorder %v1365, 0.0
    %v1478 = vand.u32 %v1365, 2147483648
    %v1479 = vsel %vm1477, %v1478, %v1476
    %v1480 = vrsqrt.pop %v1366
    %v1481 = vmul.f32 %v1366, %v1480
    %vm1482 = vcmp.eq.f32.partialorder %v1366, inf
    %v1483 = vsel %vm1482, %v1366, %v1481
    %vm1484 = vcmp.eq.f32.partialorder %v1366, 0.0
    %v1485 = vand.u32 %v1366, 2147483648
    %v1486 = vsel %vm1484, %v1485, %v1483
    %v1487 = vrsqrt.pop %v1367
    %v1488 = vmul.f32 %v1367, %v1487
    %vm1489 = vcmp.eq.f32.partialorder %v1367, inf
    %v1490 = vsel %vm1489, %v1367, %v1488
    %vm1491 = vcmp.eq.f32.partialorder %v1367, 0.0
    %v1492 = vand.u32 %v1367, 2147483648
    %v1493 = vsel %vm1491, %v1492, %v1490
    %v1494 = vrsqrt.pop %v1368
    %v1495 = vmul.f32 %v1368, %v1494
    %vm1496 = vcmp.eq.f32.partialorder %v1368, inf
    %v1497 = vsel %vm1496, %v1368, %v1495
    %vm1498 = vcmp.eq.f32.partialorder %v1368, 0.0
    %v1499 = vand.u32 %v1368, 2147483648
    %v1500 = vsel %vm1498, %v1499, %v1497
    %v1501 = vrsqrt.pop %v1369
    %v1502 = vmul.f32 %v1369, %v1501
    %vm1503 = vcmp.eq.f32.partialorder %v1369, inf
    %v1504 = vsel %vm1503, %v1369, %v1502
    %vm1505 = vcmp.eq.f32.partialorder %v1369, 0.0
    %v1506 = vand.u32 %v1369, 2147483648
    %v1507 = vsel %vm1505, %v1506, %v1504
    %v1508 = vrsqrt.pop %v1370
    %v1509 = vmul.f32 %v1370, %v1508
    %vm1510 = vcmp.eq.f32.partialorder %v1370, inf
    %v1511 = vsel %vm1510, %v1370, %v1509
    %vm1512 = vcmp.eq.f32.partialorder %v1370, 0.0
    %v1513 = vand.u32 %v1370, 2147483648
    %v1514 = vsel %vm1512, %v1513, %v1511
    %v1515 = vrsqrt.pop %v1371
    %v1516 = vmul.f32 %v1371, %v1515
    %vm1517 = vcmp.eq.f32.partialorder %v1371, inf
    %v1518 = vsel %vm1517, %v1371, %v1516
    %vm1519 = vcmp.eq.f32.partialorder %v1371, 0.0
    %v1520 = vand.u32 %v1371, 2147483648
    %v1521 = vsel %vm1519, %v1520, %v1518
    %v1522 = vrsqrt.pop %v1372
    %v1523 = vmul.f32 %v1372, %v1522
    %vm1524 = vcmp.eq.f32.partialorder %v1372, inf
    %v1525 = vsel %vm1524, %v1372, %v1523
    %vm1526 = vcmp.eq.f32.partialorder %v1372, 0.0
    %v1527 = vand.u32 %v1372, 2147483648
    %v1528 = vsel %vm1526, %v1527, %v1525
    %v1529 = vrsqrt.pop %v1373
    %v1530 = vmul.f32 %v1373, %v1529
    %vm1531 = vcmp.eq.f32.partialorder %v1373, inf
    %v1532 = vsel %vm1531, %v1373, %v1530
    %vm1533 = vcmp.eq.f32.partialorder %v1373, 0.0
    %v1534 = vand.u32 %v1373, 2147483648
    %v1535 = vsel %vm1533, %v1534, %v1532
    %v1536 = vrsqrt.pop %v1374
    %v1537 = vmul.f32 %v1374, %v1536
    %vm1538 = vcmp.eq.f32.partialorder %v1374, inf
    %v1539 = vsel %vm1538, %v1374, %v1537
    %vm1540 = vcmp.eq.f32.partialorder %v1374, 0.0
    %v1541 = vand.u32 %v1374, 2147483648
    %v1542 = vsel %vm1540, %v1541, %v1539
    %v1543 = vrsqrt.pop %v1375
    %v1544 = vmul.f32 %v1375, %v1543
    %vm1545 = vcmp.eq.f32.partialorder %v1375, inf
    %v1546 = vsel %vm1545, %v1375, %v1544
    %vm1547 = vcmp.eq.f32.partialorder %v1375, 0.0
    %v1548 = vand.u32 %v1375, 2147483648
    %v1549 = vsel %vm1547, %v1548, %v1546
    %v1550 = vrsqrt.pop %v1376
    %v1551 = vmul.f32 %v1376, %v1550
    %vm1552 = vcmp.eq.f32.partialorder %v1376, inf
    %v1553 = vsel %vm1552, %v1376, %v1551
    %vm1554 = vcmp.eq.f32.partialorder %v1376, 0.0
    %v1555 = vand.u32 %v1376, 2147483648
    %v1556 = vsel %vm1554, %v1555, %v1553
    %v1557 = vrsqrt.pop %v1377
    %v1558 = vmul.f32 %v1377, %v1557
    %vm1559 = vcmp.eq.f32.partialorder %v1377, inf
    %v1560 = vsel %vm1559, %v1377, %v1558
    %vm1561 = vcmp.eq.f32.partialorder %v1377, 0.0
    %v1562 = vand.u32 %v1377, 2147483648
    %v1563 = vsel %vm1561, %v1562, %v1560
    %v1564 = vrsqrt.pop %v1378
    %v1565 = vmul.f32 %v1378, %v1564
    %vm1566 = vcmp.eq.f32.partialorder %v1378, inf
    %v1567 = vsel %vm1566, %v1378, %v1565
    %vm1568 = vcmp.eq.f32.partialorder %v1378, 0.0
    %v1569 = vand.u32 %v1378, 2147483648
    %v1570 = vsel %vm1568, %v1569, %v1567
    %v1571 = vrsqrt.pop %v1379
    %v1572 = vmul.f32 %v1379, %v1571
    %vm1573 = vcmp.eq.f32.partialorder %v1379, inf
    %v1574 = vsel %vm1573, %v1379, %v1572
    %vm1575 = vcmp.eq.f32.partialorder %v1379, 0.0
    %v1576 = vand.u32 %v1379, 2147483648
    %v1577 = vsel %vm1575, %v1576, %v1574
    %v1578 = vrsqrt.pop %v1380
    %v1579 = vmul.f32 %v1380, %v1578
    %vm1580 = vcmp.eq.f32.partialorder %v1380, inf
    %v1581 = vsel %vm1580, %v1380, %v1579
    %vm1582 = vcmp.eq.f32.partialorder %v1380, 0.0
    %v1583 = vand.u32 %v1380, 2147483648
    %v1584 = vsel %vm1582, %v1583, %v1581
    %v1585 = vrsqrt.pop %v1381
    %v1586 = vmul.f32 %v1381, %v1585
    %vm1587 = vcmp.eq.f32.partialorder %v1381, inf
    %v1588 = vsel %vm1587, %v1381, %v1586
    %vm1589 = vcmp.eq.f32.partialorder %v1381, 0.0
    %v1590 = vand.u32 %v1381, 2147483648
    %v1591 = vsel %vm1589, %v1590, %v1588
    %v1592 = vrsqrt.pop %v1382
    %v1593 = vmul.f32 %v1382, %v1592
    %vm1594 = vcmp.eq.f32.partialorder %v1382, inf
    %v1595 = vsel %vm1594, %v1382, %v1593
    %vm1596 = vcmp.eq.f32.partialorder %v1382, 0.0
    %v1597 = vand.u32 %v1382, 2147483648
    %v1598 = vsel %vm1596, %v1597, %v1595
    %v1599 = vrsqrt.pop %v1383
    %v1600 = vmul.f32 %v1383, %v1599
    %vm1601 = vcmp.eq.f32.partialorder %v1383, inf
    %v1602 = vsel %vm1601, %v1383, %v1600
    %vm1603 = vcmp.eq.f32.partialorder %v1383, 0.0
    %v1604 = vand.u32 %v1383, 2147483648
    %v1605 = vsel %vm1603, %v1604, %v1602
    %v1606 = vrsqrt.pop %v1384
    %v1607 = vmul.f32 %v1384, %v1606
    %vm1608 = vcmp.eq.f32.partialorder %v1384, inf
    %v1609 = vsel %vm1608, %v1384, %v1607
    %vm1610 = vcmp.eq.f32.partialorder %v1384, 0.0
    %v1611 = vand.u32 %v1384, 2147483648
    %v1612 = vsel %vm1610, %v1611, %v1609
    %v1613 = vrsqrt.pop %v1385
    %v1614 = vmul.f32 %v1385, %v1613
    %vm1615 = vcmp.eq.f32.partialorder %v1385, inf
    %v1616 = vsel %vm1615, %v1385, %v1614
    %vm1617 = vcmp.eq.f32.partialorder %v1385, 0.0
    %v1618 = vand.u32 %v1385, 2147483648
    %v1619 = vsel %vm1617, %v1618, %v1616
    %v1620 = vrsqrt.pop %v1386
    %v1621 = vmul.f32 %v1386, %v1620
    %vm1622 = vcmp.eq.f32.partialorder %v1386, inf
    %v1623 = vsel %vm1622, %v1386, %v1621
    %vm1624 = vcmp.eq.f32.partialorder %v1386, 0.0
    %v1625 = vand.u32 %v1386, 2147483648
    %v1626 = vsel %vm1624, %v1625, %v1623
    %v1627 = vrsqrt.pop %v1387
    %v1628 = vmul.f32 %v1387, %v1627
    %vm1629 = vcmp.eq.f32.partialorder %v1387, inf
    %v1630 = vsel %vm1629, %v1387, %v1628
    %vm1631 = vcmp.eq.f32.partialorder %v1387, 0.0
    %v1632 = vand.u32 %v1387, 2147483648
    %v1633 = vsel %vm1631, %v1632, %v1630
    %v1634 = vrsqrt.pop %v1388
    %v1635 = vmul.f32 %v1388, %v1634
    %vm1636 = vcmp.eq.f32.partialorder %v1388, inf
    %v1637 = vsel %vm1636, %v1388, %v1635
    %vm1638 = vcmp.eq.f32.partialorder %v1388, 0.0
    %v1639 = vand.u32 %v1388, 2147483648
    %v1640 = vsel %vm1638, %v1639, %v1637
    %v1641 = vrsqrt.pop %v1389
    %v1642 = vmul.f32 %v1389, %v1641
    %vm1643 = vcmp.eq.f32.partialorder %v1389, inf
    %v1644 = vsel %vm1643, %v1389, %v1642
    %vm1645 = vcmp.eq.f32.partialorder %v1389, 0.0
    %v1646 = vand.u32 %v1389, 2147483648
    %v1647 = vsel %vm1645, %v1646, %v1644
    %v1648 = vrsqrt.pop %v1390
    %v1649 = vmul.f32 %v1390, %v1648
    %vm1650 = vcmp.eq.f32.partialorder %v1390, inf
    %v1651 = vsel %vm1650, %v1390, %v1649
    %vm1652 = vcmp.eq.f32.partialorder %v1390, 0.0
    %v1653 = vand.u32 %v1390, 2147483648
    %v1654 = vsel %vm1652, %v1653, %v1651
    %v1655 = vrsqrt.pop %v1391
    %v1656 = vmul.f32 %v1391, %v1655
    %vm1657 = vcmp.eq.f32.partialorder %v1391, inf
    %v1658 = vsel %vm1657, %v1391, %v1656
    %vm1659 = vcmp.eq.f32.partialorder %v1391, 0.0
    %v1660 = vand.u32 %v1391, 2147483648
    %v1661 = vsel %vm1659, %v1660, %v1658
    %v1662 = vrsqrt.pop %v1392
    %v1663 = vmul.f32 %v1392, %v1662
    %vm1664 = vcmp.eq.f32.partialorder %v1392, inf
    %v1665 = vsel %vm1664, %v1392, %v1663
    %vm1666 = vcmp.eq.f32.partialorder %v1392, 0.0
    %v1667 = vand.u32 %v1392, 2147483648
    %v1668 = vsel %vm1666, %v1667, %v1665
    %v1669 = vrsqrt.pop %v1393
    %v1670 = vmul.f32 %v1393, %v1669
    %vm1671 = vcmp.eq.f32.partialorder %v1393, inf
    %v1672 = vsel %vm1671, %v1393, %v1670
    %vm1673 = vcmp.eq.f32.partialorder %v1393, 0.0
    %v1674 = vand.u32 %v1393, 2147483648
    %v1675 = vsel %vm1673, %v1674, %v1672
    %v1676 = vrsqrt.pop %v1394
    %v1677 = vmul.f32 %v1394, %v1676
    %vm1678 = vcmp.eq.f32.partialorder %v1394, inf
    %v1679 = vsel %vm1678, %v1394, %v1677
    %vm1680 = vcmp.eq.f32.partialorder %v1394, 0.0
    %v1681 = vand.u32 %v1394, 2147483648
    %v1682 = vsel %vm1680, %v1681, %v1679
    %v1683 = vrsqrt.pop %v1395
    %v1684 = vmul.f32 %v1395, %v1683
    %vm1685 = vcmp.eq.f32.partialorder %v1395, inf
    %v1686 = vsel %vm1685, %v1395, %v1684
    %vm1687 = vcmp.eq.f32.partialorder %v1395, 0.0
    %v1688 = vand.u32 %v1395, 2147483648
    %v1689 = vsel %vm1687, %v1688, %v1686
    %v1690 = vrsqrt.pop %v1396
    %v1691 = vmul.f32 %v1396, %v1690
    %vm1692 = vcmp.eq.f32.partialorder %v1396, inf
    %v1693 = vsel %vm1692, %v1396, %v1691
    %vm1694 = vcmp.eq.f32.partialorder %v1396, 0.0
    %v1695 = vand.u32 %v1396, 2147483648
    %v1696 = vsel %vm1694, %v1695, %v1693
    %v1697 = vrsqrt.pop %v1397
    %v1698 = vmul.f32 %v1397, %v1697
    %vm1699 = vcmp.eq.f32.partialorder %v1397, inf
    %v1700 = vsel %vm1699, %v1397, %v1698
    %vm1701 = vcmp.eq.f32.partialorder %v1397, 0.0
    %v1702 = vand.u32 %v1397, 2147483648
    %v1703 = vsel %vm1701, %v1702, %v1700
    %v1704 = vrsqrt.pop %v1398
    %v1705 = vmul.f32 %v1398, %v1704
    %vm1706 = vcmp.eq.f32.partialorder %v1398, inf
    %v1707 = vsel %vm1706, %v1398, %v1705
    %vm1708 = vcmp.eq.f32.partialorder %v1398, 0.0
    %v1709 = vand.u32 %v1398, 2147483648
    %v1710 = vsel %vm1708, %v1709, %v1707
    %v1711 = vrsqrt.pop %v1399
    %v1712 = vmul.f32 %v1399, %v1711
    %vm1713 = vcmp.eq.f32.partialorder %v1399, inf
    %v1714 = vsel %vm1713, %v1399, %v1712
    %vm1715 = vcmp.eq.f32.partialorder %v1399, 0.0
    %v1716 = vand.u32 %v1399, 2147483648
    %v1717 = vsel %vm1715, %v1716, %v1714
    %v1718 = vrsqrt.pop %v1400
    %v1719 = vmul.f32 %v1400, %v1718
    %vm1720 = vcmp.eq.f32.partialorder %v1400, inf
    %v1721 = vsel %vm1720, %v1400, %v1719
    %vm1722 = vcmp.eq.f32.partialorder %v1400, 0.0
    %v1723 = vand.u32 %v1400, 2147483648
    %v1724 = vsel %vm1722, %v1723, %v1721
    %v1725 = vrsqrt.pop %v1401
    %v1726 = vmul.f32 %v1401, %v1725
    %vm1727 = vcmp.eq.f32.partialorder %v1401, inf
    %v1728 = vsel %vm1727, %v1401, %v1726
    %vm1729 = vcmp.eq.f32.partialorder %v1401, 0.0
    %v1730 = vand.u32 %v1401, 2147483648
    %v1731 = vsel %vm1729, %v1730, %v1728
    %v1732 = vrsqrt.pop %v1402
    %v1733 = vmul.f32 %v1402, %v1732
    %vm1734 = vcmp.eq.f32.partialorder %v1402, inf
    %v1735 = vsel %vm1734, %v1402, %v1733
    %vm1736 = vcmp.eq.f32.partialorder %v1402, 0.0
    %v1737 = vand.u32 %v1402, 2147483648
    %v1738 = vsel %vm1736, %v1737, %v1735
    %v1739 = vrsqrt.pop %v1403
    %v1740 = vmul.f32 %v1403, %v1739
    %vm1741 = vcmp.eq.f32.partialorder %v1403, inf
    %v1742 = vsel %vm1741, %v1403, %v1740
    %vm1743 = vcmp.eq.f32.partialorder %v1403, 0.0
    %v1744 = vand.u32 %v1403, 2147483648
    %v1745 = vsel %vm1743, %v1744, %v1742
    %v1746 = vrsqrt.pop %v1404
    %v1747 = vmul.f32 %v1404, %v1746
    %vm1748 = vcmp.eq.f32.partialorder %v1404, inf
    %v1749 = vsel %vm1748, %v1404, %v1747
    %vm1750 = vcmp.eq.f32.partialorder %v1404, 0.0
    %v1751 = vand.u32 %v1404, 2147483648
    %v1752 = vsel %vm1750, %v1751, %v1749
    %v1753 = vrsqrt.pop %v1405
    %v1754 = vmul.f32 %v1405, %v1753
    %vm1755 = vcmp.eq.f32.partialorder %v1405, inf
    %v1756 = vsel %vm1755, %v1405, %v1754
    %vm1757 = vcmp.eq.f32.partialorder %v1405, 0.0
    %v1758 = vand.u32 %v1405, 2147483648
    %v1759 = vsel %vm1757, %v1758, %v1756
    %v1760 = vrsqrt.pop %v1406
    %v1761 = vmul.f32 %v1406, %v1760
    %vm1762 = vcmp.eq.f32.partialorder %v1406, inf
    %v1763 = vsel %vm1762, %v1406, %v1761
    %vm1764 = vcmp.eq.f32.partialorder %v1406, 0.0
    %v1765 = vand.u32 %v1406, 2147483648
    %v1766 = vsel %vm1764, %v1765, %v1763
    %v1767 = vrsqrt.pop %v1407
    %v1768 = vmul.f32 %v1407, %v1767
    %vm1769 = vcmp.eq.f32.partialorder %v1407, inf
    %v1770 = vsel %vm1769, %v1407, %v1768
    %vm1771 = vcmp.eq.f32.partialorder %v1407, 0.0
    %v1772 = vand.u32 %v1407, 2147483648
    %v1773 = vsel %vm1771, %v1772, %v1770
    %v1774 = vrsqrt.pop %v1408
    %v1775 = vmul.f32 %v1408, %v1774
    %vm1776 = vcmp.eq.f32.partialorder %v1408, inf
    %v1777 = vsel %vm1776, %v1408, %v1775
    %vm1778 = vcmp.eq.f32.partialorder %v1408, 0.0
    %v1779 = vand.u32 %v1408, 2147483648
    %v1780 = vsel %vm1778, %v1779, %v1777
    %v1781 = vrsqrt.pop %v1409
    %v1782 = vmul.f32 %v1409, %v1781
    %vm1783 = vcmp.eq.f32.partialorder %v1409, inf
    %v1784 = vsel %vm1783, %v1409, %v1782
    %vm1785 = vcmp.eq.f32.partialorder %v1409, 0.0
    %v1786 = vand.u32 %v1409, 2147483648
    %v1787 = vsel %vm1785, %v1786, %v1784
    %v1788 = vrsqrt.pop %v1410
    %v1789 = vmul.f32 %v1410, %v1788
    %vm1790 = vcmp.eq.f32.partialorder %v1410, inf
    %v1791 = vsel %vm1790, %v1410, %v1789
    %vm1792 = vcmp.eq.f32.partialorder %v1410, 0.0
    %v1793 = vand.u32 %v1410, 2147483648
    %v1794 = vsel %vm1792, %v1793, %v1791
    %v1795 = vrsqrt.pop %v1411
    %v1796 = vmul.f32 %v1411, %v1795
    %vm1797 = vcmp.eq.f32.partialorder %v1411, inf
    %v1798 = vsel %vm1797, %v1411, %v1796
    %vm1799 = vcmp.eq.f32.partialorder %v1411, 0.0
    %v1800 = vand.u32 %v1411, 2147483648
    %v1801 = vsel %vm1799, %v1800, %v1798
    %v1802 = vrsqrt.pop %v1412
    %v1803 = vmul.f32 %v1412, %v1802
    %vm1804 = vcmp.eq.f32.partialorder %v1412, inf
    %v1805 = vsel %vm1804, %v1412, %v1803
    %vm1806 = vcmp.eq.f32.partialorder %v1412, 0.0
    %v1807 = vand.u32 %v1412, 2147483648
    %v1808 = vsel %vm1806, %v1807, %v1805
    %v1809 = vrsqrt.pop %v1413
    %v1810 = vmul.f32 %v1413, %v1809
    %vm1811 = vcmp.eq.f32.partialorder %v1413, inf
    %v1812 = vsel %vm1811, %v1413, %v1810
    %vm1813 = vcmp.eq.f32.partialorder %v1413, 0.0
    %v1814 = vand.u32 %v1413, 2147483648
    %v1815 = vsel %vm1813, %v1814, %v1812
    %v1816 = vrsqrt.pop %v1414
    %v1817 = vmul.f32 %v1414, %v1816
    %vm1818 = vcmp.eq.f32.partialorder %v1414, inf
    %v1819 = vsel %vm1818, %v1414, %v1817
    %vm1820 = vcmp.eq.f32.partialorder %v1414, 0.0
    %v1821 = vand.u32 %v1414, 2147483648
    %v1822 = vsel %vm1820, %v1821, %v1819
    %v1823 = vrsqrt.pop %v1415
    %v1824 = vmul.f32 %v1415, %v1823
    %vm1825 = vcmp.eq.f32.partialorder %v1415, inf
    %v1826 = vsel %vm1825, %v1415, %v1824
    %vm1827 = vcmp.eq.f32.partialorder %v1415, 0.0
    %v1828 = vand.u32 %v1415, 2147483648
    %v1829 = vsel %vm1827, %v1828, %v1826
    %v1830 = vrsqrt.pop %v1416
    %v1831 = vmul.f32 %v1416, %v1830
    %vm1832 = vcmp.eq.f32.partialorder %v1416, inf
    %v1833 = vsel %vm1832, %v1416, %v1831
    %vm1834 = vcmp.eq.f32.partialorder %v1416, 0.0
    %v1835 = vand.u32 %v1416, 2147483648
    %v1836 = vsel %vm1834, %v1835, %v1833
    %v1837 = vrsqrt.pop %v1417
    %v1838 = vmul.f32 %v1417, %v1837
    %vm1839 = vcmp.eq.f32.partialorder %v1417, inf
    %v1840 = vsel %vm1839, %v1417, %v1838
    %vm1841 = vcmp.eq.f32.partialorder %v1417, 0.0
    %v1842 = vand.u32 %v1417, 2147483648
    %v1843 = vsel %vm1841, %v1842, %v1840
    %v1844 = vrsqrt.pop %v1418
    %v1845 = vmul.f32 %v1418, %v1844
    %vm1846 = vcmp.eq.f32.partialorder %v1418, inf
    %v1847 = vsel %vm1846, %v1418, %v1845
    %vm1848 = vcmp.eq.f32.partialorder %v1418, 0.0
    %v1849 = vand.u32 %v1418, 2147483648
    %v1850 = vsel %vm1848, %v1849, %v1847
    %v1851 = vrsqrt.pop %v1419
    %v1852 = vmul.f32 %v1419, %v1851
    %vm1853 = vcmp.eq.f32.partialorder %v1419, inf
    %v1854 = vsel %vm1853, %v1419, %v1852
    %vm1855 = vcmp.eq.f32.partialorder %v1419, 0.0
    %v1856 = vand.u32 %v1419, 2147483648
    %v1857 = vsel %vm1855, %v1856, %v1854
    %v1858 = vrsqrt.pop %v1420
    %v1859 = vmul.f32 %v1420, %v1858
    %vm1860 = vcmp.eq.f32.partialorder %v1420, inf
    %v1861 = vsel %vm1860, %v1420, %v1859
    %vm1862 = vcmp.eq.f32.partialorder %v1420, 0.0
    %v1863 = vand.u32 %v1420, 2147483648
    %v1864 = vsel %vm1862, %v1863, %v1861
    %v1865 = vrsqrt.pop %v1421
    %v1866 = vmul.f32 %v1421, %v1865
    %vm1867 = vcmp.eq.f32.partialorder %v1421, inf
    %v1868 = vsel %vm1867, %v1421, %v1866
    %vm1869 = vcmp.eq.f32.partialorder %v1421, 0.0
    %v1870 = vand.u32 %v1421, 2147483648
    %v1871 = vsel %vm1869, %v1870, %v1868
    %v1872 = vrsqrt.pop %v1422
    %v1873 = vmul.f32 %v1422, %v1872
    %vm1874 = vcmp.eq.f32.partialorder %v1422, inf
    %v1875 = vsel %vm1874, %v1422, %v1873
    %vm1876 = vcmp.eq.f32.partialorder %v1422, 0.0
    %v1877 = vand.u32 %v1422, 2147483648
    %v1878 = vsel %vm1876, %v1877, %v1875
    %v1879 = vrsqrt.pop %v1423
    %v1880 = vmul.f32 %v1423, %v1879
    %vm1881 = vcmp.eq.f32.partialorder %v1423, inf
    %v1882 = vsel %vm1881, %v1423, %v1880
    %vm1883 = vcmp.eq.f32.partialorder %v1423, 0.0
    %v1884 = vand.u32 %v1423, 2147483648
    %v1885 = vsel %vm1883, %v1884, %v1882
    %v1886 = vrsqrt.pop %v1424
    %v1887 = vmul.f32 %v1424, %v1886
    %vm1888 = vcmp.eq.f32.partialorder %v1424, inf
    %v1889 = vsel %vm1888, %v1424, %v1887
    %vm1890 = vcmp.eq.f32.partialorder %v1424, 0.0
    %v1891 = vand.u32 %v1424, 2147483648
    %v1892 = vsel %vm1890, %v1891, %v1889
    %v1893 = vrsqrt.pop %v1425
    %v1894 = vmul.f32 %v1425, %v1893
    %vm1895 = vcmp.eq.f32.partialorder %v1425, inf
    %v1896 = vsel %vm1895, %v1425, %v1894
    %vm1897 = vcmp.eq.f32.partialorder %v1425, 0.0
    %v1898 = vand.u32 %v1425, 2147483648
    %v1899 = vsel %vm1897, %v1898, %v1896
    %v1900 = vrsqrt.pop %v1426
    %v1901 = vmul.f32 %v1426, %v1900
    %vm1902 = vcmp.eq.f32.partialorder %v1426, inf
    %v1903 = vsel %vm1902, %v1426, %v1901
    %vm1904 = vcmp.eq.f32.partialorder %v1426, 0.0
    %v1905 = vand.u32 %v1426, 2147483648
    %v1906 = vsel %vm1904, %v1905, %v1903
    %v1907 = vrsqrt.pop %v1427
    %v1908 = vmul.f32 %v1427, %v1907
    %vm1909 = vcmp.eq.f32.partialorder %v1427, inf
    %v1910 = vsel %vm1909, %v1427, %v1908
    %vm1911 = vcmp.eq.f32.partialorder %v1427, 0.0
    %v1912 = vand.u32 %v1427, 2147483648
    %v1913 = vsel %vm1911, %v1912, %v1910
    %v1914 = vrsqrt.pop %v1428
    %v1915 = vmul.f32 %v1428, %v1914
    %vm1916 = vcmp.eq.f32.partialorder %v1428, inf
    %v1917 = vsel %vm1916, %v1428, %v1915
    %vm1918 = vcmp.eq.f32.partialorder %v1428, 0.0
    %v1919 = vand.u32 %v1428, 2147483648
    %v1920 = vsel %vm1918, %v1919, %v1917
    %v1921 = vrsqrt.pop %v1429
    %v1922 = vmul.f32 %v1429, %v1921
    %vm1923 = vcmp.eq.f32.partialorder %v1429, inf
    %v1924 = vsel %vm1923, %v1429, %v1922
    %vm1925 = vcmp.eq.f32.partialorder %v1429, 0.0
    %v1926 = vand.u32 %v1429, 2147483648
    %v1927 = vsel %vm1925, %v1926, %v1924
    %v1928 = vrsqrt.pop %v1430
    %v1929 = vmul.f32 %v1430, %v1928
    %vm1930 = vcmp.eq.f32.partialorder %v1430, inf
    %v1931 = vsel %vm1930, %v1430, %v1929
    %vm1932 = vcmp.eq.f32.partialorder %v1430, 0.0
    %v1933 = vand.u32 %v1430, 2147483648
    %v1934 = vsel %vm1932, %v1933, %v1931
    %v1935 = vrsqrt.pop %v1431
    %v1936 = vmul.f32 %v1431, %v1935
    %vm1937 = vcmp.eq.f32.partialorder %v1431, inf
    %v1938 = vsel %vm1937, %v1431, %v1936
    %vm1939 = vcmp.eq.f32.partialorder %v1431, 0.0
    %v1940 = vand.u32 %v1431, 2147483648
    %v1941 = vsel %vm1939, %v1940, %v1938
    %v1942 = vrsqrt.pop %v1432
    %v1943 = vmul.f32 %v1432, %v1942
    %vm1944 = vcmp.eq.f32.partialorder %v1432, inf
    %v1945 = vsel %vm1944, %v1432, %v1943
    %vm1946 = vcmp.eq.f32.partialorder %v1432, 0.0
    %v1947 = vand.u32 %v1432, 2147483648
    %v1948 = vsel %vm1946, %v1947, %v1945
    %v1949 = vrsqrt.pop %v1433
    %v1950 = vmul.f32 %v1433, %v1949
    %vm1951 = vcmp.eq.f32.partialorder %v1433, inf
    %v1952 = vsel %vm1951, %v1433, %v1950
    %vm1953 = vcmp.eq.f32.partialorder %v1433, 0.0
    %v1954 = vand.u32 %v1433, 2147483648
    %v1955 = vsel %vm1953, %v1954, %v1952
    %v1956 = vrsqrt.pop %v1434
    %v1957 = vmul.f32 %v1434, %v1956
    %vm1958 = vcmp.eq.f32.partialorder %v1434, inf
    %v1959 = vsel %vm1958, %v1434, %v1957
    %vm1960 = vcmp.eq.f32.partialorder %v1434, 0.0
    %v1961 = vand.u32 %v1434, 2147483648
    %v1962 = vsel %vm1960, %v1961, %v1959
    %v1963 = vrsqrt.pop %v1435
    %v1964 = vmul.f32 %v1435, %v1963
    %vm1965 = vcmp.eq.f32.partialorder %v1435, inf
    %v1966 = vsel %vm1965, %v1435, %v1964
    %vm1967 = vcmp.eq.f32.partialorder %v1435, 0.0
    %v1968 = vand.u32 %v1435, 2147483648
    %v1969 = vsel %vm1967, %v1968, %v1966
    %v1970 = vrsqrt.pop %v1436
    %v1971 = vmul.f32 %v1436, %v1970
    %vm1972 = vcmp.eq.f32.partialorder %v1436, inf
    %v1973 = vsel %vm1972, %v1436, %v1971
    %vm1974 = vcmp.eq.f32.partialorder %v1436, 0.0
    %v1975 = vand.u32 %v1436, 2147483648
    %v1976 = vsel %vm1974, %v1975, %v1973
    %v1977 = vrsqrt.pop %v1437
    %v1978 = vmul.f32 %v1437, %v1977
    %vm1979 = vcmp.eq.f32.partialorder %v1437, inf
    %v1980 = vsel %vm1979, %v1437, %v1978
    %vm1981 = vcmp.eq.f32.partialorder %v1437, 0.0
    %v1982 = vand.u32 %v1437, 2147483648
    %v1983 = vsel %vm1981, %v1982, %v1980
    %v1984 = vrsqrt.pop %v1438
    %v1985 = vmul.f32 %v1438, %v1984
    %vm1986 = vcmp.eq.f32.partialorder %v1438, inf
    %v1987 = vsel %vm1986, %v1438, %v1985
    %vm1988 = vcmp.eq.f32.partialorder %v1438, 0.0
    %v1989 = vand.u32 %v1438, 2147483648
    %v1990 = vsel %vm1988, %v1989, %v1987
    %v1991 = vrsqrt.pop %v1439
    %v1992 = vmul.f32 %v1439, %v1991
    %vm1993 = vcmp.eq.f32.partialorder %v1439, inf
    %v1994 = vsel %vm1993, %v1439, %v1992
    %vm1995 = vcmp.eq.f32.partialorder %v1439, 0.0
    %v1996 = vand.u32 %v1439, 2147483648
    %v1997 = vsel %vm1995, %v1996, %v1994
    %v1998 = vrsqrt.pop %v1440
    %v1999 = vmul.f32 %v1440, %v1998
    %vm2000 = vcmp.eq.f32.partialorder %v1440, inf
    %v2001 = vsel %vm2000, %v1440, %v1999
    %vm2002 = vcmp.eq.f32.partialorder %v1440, 0.0
    %v2003 = vand.u32 %v1440, 2147483648
    %v2004 = vsel %vm2002, %v2003, %v2001
    %v2005 = vrsqrt.pop %v1441
    %v2006 = vmul.f32 %v1441, %v2005
    %vm2007 = vcmp.eq.f32.partialorder %v1441, inf
    %v2008 = vsel %vm2007, %v1441, %v2006
    %vm2009 = vcmp.eq.f32.partialorder %v1441, 0.0
    %v2010 = vand.u32 %v1441, 2147483648
    %v2011 = vsel %vm2009, %v2010, %v2008
    %v2012 = vrsqrt.pop %v1442
    %v2013 = vmul.f32 %v1442, %v2012
    %vm2014 = vcmp.eq.f32.partialorder %v1442, inf
    %v2015 = vsel %vm2014, %v1442, %v2013
    %vm2016 = vcmp.eq.f32.partialorder %v1442, 0.0
    %v2017 = vand.u32 %v1442, 2147483648
    %v2018 = vsel %vm2016, %v2017, %v2015
    %v2019 = vrsqrt.pop %v1443
    %v2020 = vmul.f32 %v1443, %v2019
    %vm2021 = vcmp.eq.f32.partialorder %v1443, inf
    %v2022 = vsel %vm2021, %v1443, %v2020
    %vm2023 = vcmp.eq.f32.partialorder %v1443, 0.0
    %v2024 = vand.u32 %v1443, 2147483648
    %v2025 = vsel %vm2023, %v2024, %v2022
    %v2026 = vrsqrt.pop %v1444
    %v2027 = vmul.f32 %v1444, %v2026
    %vm2028 = vcmp.eq.f32.partialorder %v1444, inf
    %v2029 = vsel %vm2028, %v1444, %v2027
    %vm2030 = vcmp.eq.f32.partialorder %v1444, 0.0
    %v2031 = vand.u32 %v1444, 2147483648
    %v2032 = vsel %vm2030, %v2031, %v2029
    %v2033 = vrsqrt.pop %v1445
    %v2034 = vmul.f32 %v1445, %v2033
    %vm2035 = vcmp.eq.f32.partialorder %v1445, inf
    %v2036 = vsel %vm2035, %v1445, %v2034
    %vm2037 = vcmp.eq.f32.partialorder %v1445, 0.0
    %v2038 = vand.u32 %v1445, 2147483648
    %v2039 = vsel %vm2037, %v2038, %v2036
    %v2040 = vrsqrt.pop %v1446
    %v2041 = vmul.f32 %v1446, %v2040
    %vm2042 = vcmp.eq.f32.partialorder %v1446, inf
    %v2043 = vsel %vm2042, %v1446, %v2041
    %vm2044 = vcmp.eq.f32.partialorder %v1446, 0.0
    %v2045 = vand.u32 %v1446, 2147483648
    %v2046 = vsel %vm2044, %v2045, %v2043
    %v2047 = vrsqrt.pop %v1447
    %v2048 = vmul.f32 %v1447, %v2047
    %vm2049 = vcmp.eq.f32.partialorder %v1447, inf
    %v2050 = vsel %vm2049, %v1447, %v2048
    %vm2051 = vcmp.eq.f32.partialorder %v1447, 0.0
    %v2052 = vand.u32 %v1447, 2147483648
    %v2053 = vsel %vm2051, %v2052, %v2050
    %v2054 = vrsqrt.pop %v1448
    %v2055 = vmul.f32 %v1448, %v2054
    %vm2056 = vcmp.eq.f32.partialorder %v1448, inf
    %v2057 = vsel %vm2056, %v1448, %v2055
    %vm2058 = vcmp.eq.f32.partialorder %v1448, 0.0
    %v2059 = vand.u32 %v1448, 2147483648
    %v2060 = vsel %vm2058, %v2059, %v2057
    %v2061 = vrsqrt.pop %v1449
    %v2062 = vmul.f32 %v1449, %v2061
    %vm2063 = vcmp.eq.f32.partialorder %v1449, inf
    %v2064 = vsel %vm2063, %v1449, %v2062
    %vm2065 = vcmp.eq.f32.partialorder %v1449, 0.0
    %v2066 = vand.u32 %v1449, 2147483648
    %v2067 = vsel %vm2065, %v2066, %v2064
    %v2068 = vrsqrt.pop %v1450
    %v2069 = vmul.f32 %v1450, %v2068
    %vm2070 = vcmp.eq.f32.partialorder %v1450, inf
    %v2071 = vsel %vm2070, %v1450, %v2069
    %vm2072 = vcmp.eq.f32.partialorder %v1450, 0.0
    %v2073 = vand.u32 %v1450, 2147483648
    %v2074 = vsel %vm2072, %v2073, %v2071
    %v2075 = vrsqrt.pop %v1451
    %v2076 = vmul.f32 %v1451, %v2075
    %vm2077 = vcmp.eq.f32.partialorder %v1451, inf
    %v2078 = vsel %vm2077, %v1451, %v2076
    %vm2079 = vcmp.eq.f32.partialorder %v1451, 0.0
    %v2080 = vand.u32 %v1451, 2147483648
    %v2081 = vsel %vm2079, %v2080, %v2078
    %v2082 = vrsqrt.pop %v1452
    %v2083 = vmul.f32 %v1452, %v2082
    %vm2084 = vcmp.eq.f32.partialorder %v1452, inf
    %v2085 = vsel %vm2084, %v1452, %v2083
    %vm2086 = vcmp.eq.f32.partialorder %v1452, 0.0
    %v2087 = vand.u32 %v1452, 2147483648
    %v2088 = vsel %vm2086, %v2087, %v2085
    %v2089 = vrsqrt.pop %v1453
    %v2090 = vmul.f32 %v1453, %v2089
    %vm2091 = vcmp.eq.f32.partialorder %v1453, inf
    %v2092 = vsel %vm2091, %v1453, %v2090
    %vm2093 = vcmp.eq.f32.partialorder %v1453, 0.0
    %v2094 = vand.u32 %v1453, 2147483648
    %v2095 = vsel %vm2093, %v2094, %v2092
    %v2096 = vrsqrt.pop %v1454
    %v2097 = vmul.f32 %v1454, %v2096
    %vm2098 = vcmp.eq.f32.partialorder %v1454, inf
    %v2099 = vsel %vm2098, %v1454, %v2097
    %vm2100 = vcmp.eq.f32.partialorder %v1454, 0.0
    %v2101 = vand.u32 %v1454, 2147483648
    %v2102 = vsel %vm2100, %v2101, %v2099
    %v2103 = vrsqrt.pop %v1455
    %v2104 = vmul.f32 %v1455, %v2103
    %vm2105 = vcmp.eq.f32.partialorder %v1455, inf
    %v2106 = vsel %vm2105, %v1455, %v2104
    %vm2107 = vcmp.eq.f32.partialorder %v1455, 0.0
    %v2108 = vand.u32 %v1455, 2147483648
    %v2109 = vsel %vm2107, %v2108, %v2106
    %v2110 = vrsqrt.pop %v1456
    %v2111 = vmul.f32 %v1456, %v2110
    %vm2112 = vcmp.eq.f32.partialorder %v1456, inf
    %v2113 = vsel %vm2112, %v1456, %v2111
    %vm2114 = vcmp.eq.f32.partialorder %v1456, 0.0
    %v2115 = vand.u32 %v1456, 2147483648
    %v2116 = vsel %vm2114, %v2115, %v2113
    %v2117 = vrsqrt.pop %v1457
    %v2118 = vmul.f32 %v1457, %v2117
    %vm2119 = vcmp.eq.f32.partialorder %v1457, inf
    %v2120 = vsel %vm2119, %v1457, %v2118
    %vm2121 = vcmp.eq.f32.partialorder %v1457, 0.0
    %v2122 = vand.u32 %v1457, 2147483648
    %v2123 = vsel %vm2121, %v2122, %v2120
    %v2124 = vrsqrt.pop %v1458
    %v2125 = vmul.f32 %v1458, %v2124
    %vm2126 = vcmp.eq.f32.partialorder %v1458, inf
    %v2127 = vsel %vm2126, %v1458, %v2125
    %vm2128 = vcmp.eq.f32.partialorder %v1458, 0.0
    %v2129 = vand.u32 %v1458, 2147483648
    %v2130 = vsel %vm2128, %v2129, %v2127
    %v2131 = vld [vmem:[%s1] sm:$0xff]
    %v2132 = vld [vmem:[%s1 + $0x8] sm:$0xff]
    %v2133 = vld [vmem:[%s1 + $0x10] sm:$0xff]
    %v2134 = vld [vmem:[%s1 + $0x18] sm:$0xff]
    %v2135 = vld [vmem:[%s1 + $0x20] sm:$0xff]
    %v2136 = vld [vmem:[%s1 + $0x28] sm:$0xff]
    %v2137 = vld [vmem:[%s1 + $0x30] sm:$0xff]
    %v2138 = vld [vmem:[%s1 + $0x38] sm:$0xff]
    %v2139 = vld [vmem:[%s1 + $0x40] sm:$0xff]
    %v2140 = vld [vmem:[%s1 + $0x48] sm:$0xff]
    %v2141 = vld [vmem:[%s1 + $0x50] sm:$0xff]
    %v2142 = vld [vmem:[%s1 + $0x58] sm:$0xff]
    %v2143 = vld [vmem:[%s1 + $0x60] sm:$0xff]
    %v2144 = vld [vmem:[%s1 + $0x68] sm:$0xff]
    %v2145 = vld [vmem:[%s1 + $0x70] sm:$0xff]
    %v2146 = vld [vmem:[%s1 + $0x78] sm:$0xff]
    %v2147 = vld [vmem:[%s1 + $0x80] sm:$0xff]
    %v2148 = vld [vmem:[%s1 + $0x88] sm:$0xff]
    %v2149 = vld [vmem:[%s1 + $0x90] sm:$0xff]
    %v2150 = vld [vmem:[%s1 + $0x98] sm:$0xff]
    %v2151 = vld [vmem:[%s1 + $0xa0] sm:$0xff]
    %v2152 = vld [vmem:[%s1 + $0xa8] sm:$0xff]
    %v2153 = vld [vmem:[%s1 + $0xb0] sm:$0xff]
    %v2154 = vld [vmem:[%s1 + $0xb8] sm:$0xff]
    %v2155 = vld [vmem:[%s1 + $0xc0] sm:$0xff]
    %v2156 = vld [vmem:[%s1 + $0xc8] sm:$0xff]
    %v2157 = vld [vmem:[%s1 + $0xd0] sm:$0xff]
    %v2158 = vld [vmem:[%s1 + $0xd8] sm:$0xff]
    %v2159 = vld [vmem:[%s1 + $0xe0] sm:$0xff]
    %v2160 = vld [vmem:[%s1 + $0xe8] sm:$0xff]
    %v2161 = vld [vmem:[%s1 + $0xf0] sm:$0xff]
    %v2162 = vld [vmem:[%s1 + $0xf8] sm:$0xff]
    %v2163 = vld [vmem:[%s1 + $0x100] sm:$0xff]
    %v2164 = vld [vmem:[%s1 + $0x108] sm:$0xff]
    %v2165 = vld [vmem:[%s1 + $0x110] sm:$0xff]
    %v2166 = vld [vmem:[%s1 + $0x118] sm:$0xff]
    %v2167 = vld [vmem:[%s1 + $0x120] sm:$0xff]
    %v2168 = vld [vmem:[%s1 + $0x128] sm:$0xff]
    %v2169 = vld [vmem:[%s1 + $0x130] sm:$0xff]
    %v2170 = vld [vmem:[%s1 + $0x138] sm:$0xff]
    %v2171 = vld [vmem:[%s1 + $0x140] sm:$0xff]
    %v2172 = vld [vmem:[%s1 + $0x148] sm:$0xff]
    %v2173 = vld [vmem:[%s1 + $0x150] sm:$0xff]
    %v2174 = vld [vmem:[%s1 + $0x158] sm:$0xff]
    %v2175 = vld [vmem:[%s1 + $0x160] sm:$0xff]
    %v2176 = vld [vmem:[%s1 + $0x168] sm:$0xff]
    %v2177 = vld [vmem:[%s1 + $0x170] sm:$0xff]
    %v2178 = vld [vmem:[%s1 + $0x178] sm:$0xff]
    %v2179 = vld [vmem:[%s1 + $0x180] sm:$0xff]
    %v2180 = vld [vmem:[%s1 + $0x188] sm:$0xff]
    %v2181 = vld [vmem:[%s1 + $0x190] sm:$0xff]
    %v2182 = vld [vmem:[%s1 + $0x198] sm:$0xff]
    %v2183 = vld [vmem:[%s1 + $0x1a0] sm:$0xff]
    %v2184 = vld [vmem:[%s1 + $0x1a8] sm:$0xff]
    %v2185 = vld [vmem:[%s1 + $0x1b0] sm:$0xff]
    %v2186 = vld [vmem:[%s1 + $0x1b8] sm:$0xff]
    %v2187 = vld [vmem:[%s1 + $0x1c0] sm:$0xff]
    %v2188 = vld [vmem:[%s1 + $0x1c8] sm:$0xff]
    %v2189 = vld [vmem:[%s1 + $0x1d0] sm:$0xff]
    %v2190 = vld [vmem:[%s1 + $0x1d8] sm:$0xff]
    %v2191 = vld [vmem:[%s1 + $0x1e0] sm:$0xff]
    %v2192 = vld [vmem:[%s1 + $0x1e8] sm:$0xff]
    %v2193 = vld [vmem:[%s1 + $0x1f0] sm:$0xff]
    %v2194 = vld [vmem:[%s1 + $0x1f8] sm:$0xff]
    %v2195 = vld [vmem:[%s1 + $0x200] sm:$0xff]
    %v2196 = vld [vmem:[%s1 + $0x208] sm:$0xff]
    %v2197 = vld [vmem:[%s1 + $0x210] sm:$0xff]
    %v2198 = vld [vmem:[%s1 + $0x218] sm:$0xff]
    %v2199 = vld [vmem:[%s1 + $0x220] sm:$0xff]
    %v2200 = vld [vmem:[%s1 + $0x228] sm:$0xff]
    %v2201 = vld [vmem:[%s1 + $0x230] sm:$0xff]
    %v2202 = vld [vmem:[%s1 + $0x238] sm:$0xff]
    %v2203 = vld [vmem:[%s1 + $0x240] sm:$0xff]
    %v2204 = vld [vmem:[%s1 + $0x248] sm:$0xff]
    %v2205 = vld [vmem:[%s1 + $0x250] sm:$0xff]
    %v2206 = vld [vmem:[%s1 + $0x258] sm:$0xff]
    %v2207 = vld [vmem:[%s1 + $0x260] sm:$0xff]
    %v2208 = vld [vmem:[%s1 + $0x268] sm:$0xff]
    %v2209 = vld [vmem:[%s1 + $0x270] sm:$0xff]
    %v2210 = vld [vmem:[%s1 + $0x278] sm:$0xff]
    %v2211 = vld [vmem:[%s1 + $0x280] sm:$0xff]
    %v2212 = vld [vmem:[%s1 + $0x288] sm:$0xff]
    %v2213 = vld [vmem:[%s1 + $0x290] sm:$0xff]
    %v2214 = vld [vmem:[%s1 + $0x298] sm:$0xff]
    %v2215 = vld [vmem:[%s1 + $0x2a0] sm:$0xff]
    %v2216 = vld [vmem:[%s1 + $0x2a8] sm:$0xff]
    %v2217 = vld [vmem:[%s1 + $0x2b0] sm:$0xff]
    %v2218 = vld [vmem:[%s1 + $0x2b8] sm:$0xff]
    %v2219 = vld [vmem:[%s1 + $0x2c0] sm:$0xff]
    %v2220 = vld [vmem:[%s1 + $0x2c8] sm:$0xff]
    %v2221 = vld [vmem:[%s1 + $0x2d0] sm:$0xff]
    %v2222 = vld [vmem:[%s1 + $0x2d8] sm:$0xff]
    %v2223 = vld [vmem:[%s1 + $0x2e0] sm:$0xff]
    %v2224 = vld [vmem:[%s1 + $0x2e8] sm:$0xff]
    %v2225 = vld [vmem:[%s1 + $0x2f0] sm:$0xff]
    %v2226 = vld [vmem:[%s1 + $0x2f8] sm:$0xff]
    %v2227 = vrcp.pop %v1465
    %v2228 = vmul.f32 %v2131, %v2227
    %v2229 = vrcp.pop %v1472
    %v2230 = vmul.f32 %v2132, %v2229
    %v2231 = vrcp.pop %v1479
    %v2232 = vmul.f32 %v2133, %v2231
    %v2233 = vrcp.pop %v1486
    %v2234 = vmul.f32 %v2134, %v2233
    %v2235 = vrcp.pop %v1493
    %v2236 = vmul.f32 %v2135, %v2235
    %v2237 = vrcp.pop %v1500
    %v2238 = vmul.f32 %v2136, %v2237
    %v2239 = vrcp.pop %v1507
    %v2240 = vmul.f32 %v2137, %v2239
    %v2241 = vrcp.pop %v1514
    %v2242 = vmul.f32 %v2138, %v2241
    %v2243 = vrcp.pop %v1521
    %v2244 = vmul.f32 %v2139, %v2243
    %v2245 = vrcp.pop %v1528
    %v2246 = vmul.f32 %v2140, %v2245
    %v2247 = vrcp.pop %v1535
    %v2248 = vmul.f32 %v2141, %v2247
    %v2249 = vrcp.pop %v1542
    %v2250 = vmul.f32 %v2142, %v2249
    %v2251 = vrcp.pop %v1549
    %v2252 = vmul.f32 %v2143, %v2251
    %v2253 = vrcp.pop %v1556
    %v2254 = vmul.f32 %v2144, %v2253
    %v2255 = vrcp.pop %v1563
    %v2256 = vmul.f32 %v2145, %v2255
    %v2257 = vrcp.pop %v1570
    %v2258 = vmul.f32 %v2146, %v2257
    %v2259 = vrcp.pop %v1577
    %v2260 = vmul.f32 %v2147, %v2259
    %v2261 = vrcp.pop %v1584
    %v2262 = vmul.f32 %v2148, %v2261
    %v2263 = vrcp.pop %v1591
    %v2264 = vmul.f32 %v2149, %v2263
    %v2265 = vrcp.pop %v1598
    %v2266 = vmul.f32 %v2150, %v2265
    %v2267 = vrcp.pop %v1605
    %v2268 = vmul.f32 %v2151, %v2267
    %v2269 = vrcp.pop %v1612
    %v2270 = vmul.f32 %v2152, %v2269
    %v2271 = vrcp.pop %v1619
    %v2272 = vmul.f32 %v2153, %v2271
    %v2273 = vrcp.pop %v1626
    %v2274 = vmul.f32 %v2154, %v2273
    %v2275 = vrcp.pop %v1633
    %v2276 = vmul.f32 %v2155, %v2275
    %v2277 = vrcp.pop %v1640
    %v2278 = vmul.f32 %v2156, %v2277
    %v2279 = vrcp.pop %v1647
    %v2280 = vmul.f32 %v2157, %v2279
    %v2281 = vrcp.pop %v1654
    %v2282 = vmul.f32 %v2158, %v2281
    %v2283 = vrcp.pop %v1661
    %v2284 = vmul.f32 %v2159, %v2283
    %v2285 = vrcp.pop %v1668
    %v2286 = vmul.f32 %v2160, %v2285
    %v2287 = vrcp.pop %v1675
    %v2288 = vmul.f32 %v2161, %v2287
    %v2289 = vrcp.pop %v1682
    %v2290 = vmul.f32 %v2162, %v2289
    %v2291 = vrcp.pop %v1689
    %v2292 = vmul.f32 %v2163, %v2291
    %v2293 = vrcp.pop %v1696
    %v2294 = vmul.f32 %v2164, %v2293
    %v2295 = vrcp.pop %v1703
    %v2296 = vmul.f32 %v2165, %v2295
    %v2297 = vrcp.pop %v1710
    %v2298 = vmul.f32 %v2166, %v2297
    %v2299 = vrcp.pop %v1717
    %v2300 = vmul.f32 %v2167, %v2299
    %v2301 = vrcp.pop %v1724
    %v2302 = vmul.f32 %v2168, %v2301
    %v2303 = vrcp.pop %v1731
    %v2304 = vmul.f32 %v2169, %v2303
    %v2305 = vrcp.pop %v1738
    %v2306 = vmul.f32 %v2170, %v2305
    %v2307 = vrcp.pop %v1745
    %v2308 = vmul.f32 %v2171, %v2307
    %v2309 = vrcp.pop %v1752
    %v2310 = vmul.f32 %v2172, %v2309
    %v2311 = vrcp.pop %v1759
    %v2312 = vmul.f32 %v2173, %v2311
    %v2313 = vrcp.pop %v1766
    %v2314 = vmul.f32 %v2174, %v2313
    %v2315 = vrcp.pop %v1773
    %v2316 = vmul.f32 %v2175, %v2315
    %v2317 = vrcp.pop %v1780
    %v2318 = vmul.f32 %v2176, %v2317
    %v2319 = vrcp.pop %v1787
    %v2320 = vmul.f32 %v2177, %v2319
    %v2321 = vrcp.pop %v1794
    %v2322 = vmul.f32 %v2178, %v2321
    %v2323 = vrcp.pop %v1801
    %v2324 = vmul.f32 %v2179, %v2323
    %v2325 = vrcp.pop %v1808
    %v2326 = vmul.f32 %v2180, %v2325
    %v2327 = vrcp.pop %v1815
    %v2328 = vmul.f32 %v2181, %v2327
    %v2329 = vrcp.pop %v1822
    %v2330 = vmul.f32 %v2182, %v2329
    %v2331 = vrcp.pop %v1829
    %v2332 = vmul.f32 %v2183, %v2331
    %v2333 = vrcp.pop %v1836
    %v2334 = vmul.f32 %v2184, %v2333
    %v2335 = vrcp.pop %v1843
    %v2336 = vmul.f32 %v2185, %v2335
    %v2337 = vrcp.pop %v1850
    %v2338 = vmul.f32 %v2186, %v2337
    %v2339 = vrcp.pop %v1857
    %v2340 = vmul.f32 %v2187, %v2339
    %v2341 = vrcp.pop %v1864
    %v2342 = vmul.f32 %v2188, %v2341
    %v2343 = vrcp.pop %v1871
    %v2344 = vmul.f32 %v2189, %v2343
    %v2345 = vrcp.pop %v1878
    %v2346 = vmul.f32 %v2190, %v2345
    %v2347 = vrcp.pop %v1885
    %v2348 = vmul.f32 %v2191, %v2347
    %v2349 = vrcp.pop %v1892
    %v2350 = vmul.f32 %v2192, %v2349
    %v2351 = vrcp.pop %v1899
    %v2352 = vmul.f32 %v2193, %v2351
    %v2353 = vrcp.pop %v1906
    %v2354 = vmul.f32 %v2194, %v2353
    %v2355 = vrcp.pop %v1913
    %v2356 = vmul.f32 %v2195, %v2355
    %v2357 = vrcp.pop %v1920
    %v2358 = vmul.f32 %v2196, %v2357
    %v2359 = vrcp.pop %v1927
    %v2360 = vmul.f32 %v2197, %v2359
    %v2361 = vrcp.pop %v1934
    %v2362 = vmul.f32 %v2198, %v2361
    %v2363 = vrcp.pop %v1941
    %v2364 = vmul.f32 %v2199, %v2363
    %v2365 = vrcp.pop %v1948
    %v2366 = vmul.f32 %v2200, %v2365
    %v2367 = vrcp.pop %v1955
    %v2368 = vmul.f32 %v2201, %v2367
    %v2369 = vrcp.pop %v1962
    %v2370 = vmul.f32 %v2202, %v2369
    %v2371 = vrcp.pop %v1969
    %v2372 = vmul.f32 %v2203, %v2371
    %v2373 = vrcp.pop %v1976
    %v2374 = vmul.f32 %v2204, %v2373
    %v2375 = vrcp.pop %v1983
    %v2376 = vmul.f32 %v2205, %v2375
    %v2377 = vrcp.pop %v1990
    %v2378 = vmul.f32 %v2206, %v2377
    %v2379 = vrcp.pop %v1997
    %v2380 = vmul.f32 %v2207, %v2379
    %v2381 = vrcp.pop %v2004
    %v2382 = vmul.f32 %v2208, %v2381
    %v2383 = vrcp.pop %v2011
    %v2384 = vmul.f32 %v2209, %v2383
    %v2385 = vrcp.pop %v2018
    %v2386 = vmul.f32 %v2210, %v2385
    %v2387 = vrcp.pop %v2025
    %v2388 = vmul.f32 %v2211, %v2387
    %v2389 = vrcp.pop %v2032
    %v2390 = vmul.f32 %v2212, %v2389
    %v2391 = vrcp.pop %v2039
    %v2392 = vmul.f32 %v2213, %v2391
    %v2393 = vrcp.pop %v2046
    %v2394 = vmul.f32 %v2214, %v2393
    %v2395 = vrcp.pop %v2053
    %v2396 = vmul.f32 %v2215, %v2395
    %v2397 = vrcp.pop %v2060
    %v2398 = vmul.f32 %v2216, %v2397
    %v2399 = vrcp.pop %v2067
    %v2400 = vmul.f32 %v2217, %v2399
    %v2401 = vrcp.pop %v2074
    %v2402 = vmul.f32 %v2218, %v2401
    %v2403 = vrcp.pop %v2081
    %v2404 = vmul.f32 %v2219, %v2403
    %v2405 = vrcp.pop %v2088
    %v2406 = vmul.f32 %v2220, %v2405
    %v2407 = vrcp.pop %v2095
    %v2408 = vmul.f32 %v2221, %v2407
    %v2409 = vrcp.pop %v2102
    %v2410 = vmul.f32 %v2222, %v2409
    %v2411 = vrcp.pop %v2109
    %v2412 = vmul.f32 %v2223, %v2411
    %v2413 = vrcp.pop %v2116
    %v2414 = vmul.f32 %v2224, %v2413
    %v2415 = vrcp.pop %v2123
    %v2416 = vmul.f32 %v2225, %v2415
    %v2417 = vrcp.pop %v2130
    %v2418 = vmul.f32 %v2226, %v2417
    %2420 = vset.pattern.permute.xlu0 0
    %2421 = vperm.xlu0 %2420, %v2228
    %v2422 = vpop.permute.xlu0 %2421
    %2425 = vset.pattern.permute.xlu0 0
    %2426 = vperm.xlu0 %2425, %v2230
    %v2427 = vpop.permute.xlu0 %2426
    %2430 = vset.pattern.permute.xlu0 0
    %2431 = vperm.xlu0 %2430, %v2232
    %v2432 = vpop.permute.xlu0 %2431
    %2435 = vset.pattern.permute.xlu0 0
    %2436 = vperm.xlu0 %2435, %v2234
    %v2437 = vpop.permute.xlu0 %2436
    %2440 = vset.pattern.permute.xlu0 0
    %2441 = vperm.xlu0 %2440, %v2236
    %v2442 = vpop.permute.xlu0 %2441
    %2445 = vset.pattern.permute.xlu0 0
    %2446 = vperm.xlu0 %2445, %v2238
    %v2447 = vpop.permute.xlu0 %2446
    %2450 = vset.pattern.permute.xlu0 0
    %2451 = vperm.xlu0 %2450, %v2240
    %v2452 = vpop.permute.xlu0 %2451
    %2455 = vset.pattern.permute.xlu0 0
    %2456 = vperm.xlu0 %2455, %v2242
    %v2457 = vpop.permute.xlu0 %2456
    %2460 = vset.pattern.permute.xlu0 0
    %2461 = vperm.xlu0 %2460, %v2244
    %v2462 = vpop.permute.xlu0 %2461
    %2465 = vset.pattern.permute.xlu0 0
    %2466 = vperm.xlu0 %2465, %v2246
    %v2467 = vpop.permute.xlu0 %2466
    %2470 = vset.pattern.permute.xlu0 0
    %2471 = vperm.xlu0 %2470, %v2248
    %v2472 = vpop.permute.xlu0 %2471
    %2475 = vset.pattern.permute.xlu0 0
    %2476 = vperm.xlu0 %2475, %v2250
    %v2477 = vpop.permute.xlu0 %2476
    %2480 = vset.pattern.permute.xlu0 0
    %2481 = vperm.xlu0 %2480, %v2252
    %v2482 = vpop.permute.xlu0 %2481
    %2485 = vset.pattern.permute.xlu0 0
    %2486 = vperm.xlu0 %2485, %v2254
    %v2487 = vpop.permute.xlu0 %2486
    %2490 = vset.pattern.permute.xlu0 0
    %2491 = vperm.xlu0 %2490, %v2256
    %v2492 = vpop.permute.xlu0 %2491
    %2495 = vset.pattern.permute.xlu0 0
    %2496 = vperm.xlu0 %2495, %v2258
    %v2497 = vpop.permute.xlu0 %2496
    %2500 = vset.pattern.permute.xlu0 0
    %2501 = vperm.xlu0 %2500, %v2260
    %v2502 = vpop.permute.xlu0 %2501
    %2505 = vset.pattern.permute.xlu0 0
    %2506 = vperm.xlu0 %2505, %v2262
    %v2507 = vpop.permute.xlu0 %2506
    %2510 = vset.pattern.permute.xlu0 0
    %2511 = vperm.xlu0 %2510, %v2264
    %v2512 = vpop.permute.xlu0 %2511
    %2515 = vset.pattern.permute.xlu0 0
    %2516 = vperm.xlu0 %2515, %v2266
    %v2517 = vpop.permute.xlu0 %2516
    %2520 = vset.pattern.permute.xlu0 0
    %2521 = vperm.xlu0 %2520, %v2268
    %v2522 = vpop.permute.xlu0 %2521
    %2525 = vset.pattern.permute.xlu0 0
    %2526 = vperm.xlu0 %2525, %v2270
    %v2527 = vpop.permute.xlu0 %2526
    %2530 = vset.pattern.permute.xlu0 0
    %2531 = vperm.xlu0 %2530, %v2272
    %v2532 = vpop.permute.xlu0 %2531
    %2535 = vset.pattern.permute.xlu0 0
    %2536 = vperm.xlu0 %2535, %v2274
    %v2537 = vpop.permute.xlu0 %2536
    %2540 = vset.pattern.permute.xlu0 0
    %2541 = vperm.xlu0 %2540, %v2276
    %v2542 = vpop.permute.xlu0 %2541
    %2545 = vset.pattern.permute.xlu0 0
    %2546 = vperm.xlu0 %2545, %v2278
    %v2547 = vpop.permute.xlu0 %2546
    %2550 = vset.pattern.permute.xlu0 0
    %2551 = vperm.xlu0 %2550, %v2280
    %v2552 = vpop.permute.xlu0 %2551
    %2555 = vset.pattern.permute.xlu0 0
    %2556 = vperm.xlu0 %2555, %v2282
    %v2557 = vpop.permute.xlu0 %2556
    %2560 = vset.pattern.permute.xlu0 0
    %2561 = vperm.xlu0 %2560, %v2284
    %v2562 = vpop.permute.xlu0 %2561
    %2565 = vset.pattern.permute.xlu0 0
    %2566 = vperm.xlu0 %2565, %v2286
    %v2567 = vpop.permute.xlu0 %2566
    %2570 = vset.pattern.permute.xlu0 0
    %2571 = vperm.xlu0 %2570, %v2288
    %v2572 = vpop.permute.xlu0 %2571
    %2575 = vset.pattern.permute.xlu0 0
    %2576 = vperm.xlu0 %2575, %v2290
    %v2577 = vpop.permute.xlu0 %2576
    %2580 = vset.pattern.permute.xlu0 0
    %2581 = vperm.xlu0 %2580, %v2292
    %v2582 = vpop.permute.xlu0 %2581
    %2585 = vset.pattern.permute.xlu0 0
    %2586 = vperm.xlu0 %2585, %v2294
    %v2587 = vpop.permute.xlu0 %2586
    %2590 = vset.pattern.permute.xlu0 0
    %2591 = vperm.xlu0 %2590, %v2296
    %v2592 = vpop.permute.xlu0 %2591
    %2595 = vset.pattern.permute.xlu0 0
    %2596 = vperm.xlu0 %2595, %v2298
    %v2597 = vpop.permute.xlu0 %2596
    %2600 = vset.pattern.permute.xlu0 0
    %2601 = vperm.xlu0 %2600, %v2300
    %v2602 = vpop.permute.xlu0 %2601
    %2605 = vset.pattern.permute.xlu0 0
    %2606 = vperm.xlu0 %2605, %v2302
    %v2607 = vpop.permute.xlu0 %2606
    %2610 = vset.pattern.permute.xlu0 0
    %2611 = vperm.xlu0 %2610, %v2304
    %v2612 = vpop.permute.xlu0 %2611
    %2615 = vset.pattern.permute.xlu0 0
    %2616 = vperm.xlu0 %2615, %v2306
    %v2617 = vpop.permute.xlu0 %2616
    %2620 = vset.pattern.permute.xlu0 0
    %2621 = vperm.xlu0 %2620, %v2308
    %v2622 = vpop.permute.xlu0 %2621
    %2625 = vset.pattern.permute.xlu0 0
    %2626 = vperm.xlu0 %2625, %v2310
    %v2627 = vpop.permute.xlu0 %2626
    %2630 = vset.pattern.permute.xlu0 0
    %2631 = vperm.xlu0 %2630, %v2312
    %v2632 = vpop.permute.xlu0 %2631
    %2635 = vset.pattern.permute.xlu0 0
    %2636 = vperm.xlu0 %2635, %v2314
    %v2637 = vpop.permute.xlu0 %2636
    %2640 = vset.pattern.permute.xlu0 0
    %2641 = vperm.xlu0 %2640, %v2316
    %v2642 = vpop.permute.xlu0 %2641
    %2645 = vset.pattern.permute.xlu0 0
    %2646 = vperm.xlu0 %2645, %v2318
    %v2647 = vpop.permute.xlu0 %2646
    %2650 = vset.pattern.permute.xlu0 0
    %2651 = vperm.xlu0 %2650, %v2320
    %v2652 = vpop.permute.xlu0 %2651
    %2655 = vset.pattern.permute.xlu0 0
    %2656 = vperm.xlu0 %2655, %v2322
    %v2657 = vpop.permute.xlu0 %2656
    %2660 = vset.pattern.permute.xlu0 0
    %2661 = vperm.xlu0 %2660, %v2324
    %v2662 = vpop.permute.xlu0 %2661
    %2665 = vset.pattern.permute.xlu0 0
    %2666 = vperm.xlu0 %2665, %v2326
    %v2667 = vpop.permute.xlu0 %2666
    %2670 = vset.pattern.permute.xlu0 0
    %2671 = vperm.xlu0 %2670, %v2328
    %v2672 = vpop.permute.xlu0 %2671
    %2675 = vset.pattern.permute.xlu0 0
    %2676 = vperm.xlu0 %2675, %v2330
    %v2677 = vpop.permute.xlu0 %2676
    %2680 = vset.pattern.permute.xlu0 0
    %2681 = vperm.xlu0 %2680, %v2332
    %v2682 = vpop.permute.xlu0 %2681
    %2685 = vset.pattern.permute.xlu0 0
    %2686 = vperm.xlu0 %2685, %v2334
    %v2687 = vpop.permute.xlu0 %2686
    %2690 = vset.pattern.permute.xlu0 0
    %2691 = vperm.xlu0 %2690, %v2336
    %v2692 = vpop.permute.xlu0 %2691
    %2695 = vset.pattern.permute.xlu0 0
    %2696 = vperm.xlu0 %2695, %v2338
    %v2697 = vpop.permute.xlu0 %2696
    %2700 = vset.pattern.permute.xlu0 0
    %2701 = vperm.xlu0 %2700, %v2340
    %v2702 = vpop.permute.xlu0 %2701
    %2705 = vset.pattern.permute.xlu0 0
    %2706 = vperm.xlu0 %2705, %v2342
    %v2707 = vpop.permute.xlu0 %2706
    %2710 = vset.pattern.permute.xlu0 0
    %2711 = vperm.xlu0 %2710, %v2344
    %v2712 = vpop.permute.xlu0 %2711
    %2715 = vset.pattern.permute.xlu0 0
    %2716 = vperm.xlu0 %2715, %v2346
    %v2717 = vpop.permute.xlu0 %2716
    %2720 = vset.pattern.permute.xlu0 0
    %2721 = vperm.xlu0 %2720, %v2348
    %v2722 = vpop.permute.xlu0 %2721
    %2725 = vset.pattern.permute.xlu0 0
    %2726 = vperm.xlu0 %2725, %v2350
    %v2727 = vpop.permute.xlu0 %2726
    %2730 = vset.pattern.permute.xlu0 0
    %2731 = vperm.xlu0 %2730, %v2352
    %v2732 = vpop.permute.xlu0 %2731
    %2735 = vset.pattern.permute.xlu0 0
    %2736 = vperm.xlu0 %2735, %v2354
    %v2737 = vpop.permute.xlu0 %2736
    %2740 = vset.pattern.permute.xlu0 0
    %2741 = vperm.xlu0 %2740, %v2356
    %v2742 = vpop.permute.xlu0 %2741
    %2745 = vset.pattern.permute.xlu0 0
    %2746 = vperm.xlu0 %2745, %v2358
    %v2747 = vpop.permute.xlu0 %2746
    %2750 = vset.pattern.permute.xlu0 0
    %2751 = vperm.xlu0 %2750, %v2360
    %v2752 = vpop.permute.xlu0 %2751
    %2755 = vset.pattern.permute.xlu0 0
    %2756 = vperm.xlu0 %2755, %v2362
    %v2757 = vpop.permute.xlu0 %2756
    %2760 = vset.pattern.permute.xlu0 0
    %2761 = vperm.xlu0 %2760, %v2364
    %v2762 = vpop.permute.xlu0 %2761
    %2765 = vset.pattern.permute.xlu0 0
    %2766 = vperm.xlu0 %2765, %v2366
    %v2767 = vpop.permute.xlu0 %2766
    %2770 = vset.pattern.permute.xlu0 0
    %2771 = vperm.xlu0 %2770, %v2368
    %v2772 = vpop.permute.xlu0 %2771
    %2775 = vset.pattern.permute.xlu0 0
    %2776 = vperm.xlu0 %2775, %v2370
    %v2777 = vpop.permute.xlu0 %2776
    %2780 = vset.pattern.permute.xlu0 0
    %2781 = vperm.xlu0 %2780, %v2372
    %v2782 = vpop.permute.xlu0 %2781
    %2785 = vset.pattern.permute.xlu0 0
    %2786 = vperm.xlu0 %2785, %v2374
    %v2787 = vpop.permute.xlu0 %2786
    %2790 = vset.pattern.permute.xlu0 0
    %2791 = vperm.xlu0 %2790, %v2376
    %v2792 = vpop.permute.xlu0 %2791
    %2795 = vset.pattern.permute.xlu0 0
    %2796 = vperm.xlu0 %2795, %v2378
    %v2797 = vpop.permute.xlu0 %2796
    %2800 = vset.pattern.permute.xlu0 0
    %2801 = vperm.xlu0 %2800, %v2380
    %v2802 = vpop.permute.xlu0 %2801
    %2805 = vset.pattern.permute.xlu0 0
    %2806 = vperm.xlu0 %2805, %v2382
    %v2807 = vpop.permute.xlu0 %2806
    %2810 = vset.pattern.permute.xlu0 0
    %2811 = vperm.xlu0 %2810, %v2384
    %v2812 = vpop.permute.xlu0 %2811
    %2815 = vset.pattern.permute.xlu0 0
    %2816 = vperm.xlu0 %2815, %v2386
    %v2817 = vpop.permute.xlu0 %2816
    %2820 = vset.pattern.permute.xlu0 0
    %2821 = vperm.xlu0 %2820, %v2388
    %v2822 = vpop.permute.xlu0 %2821
    %2825 = vset.pattern.permute.xlu0 0
    %2826 = vperm.xlu0 %2825, %v2390
    %v2827 = vpop.permute.xlu0 %2826
    %2830 = vset.pattern.permute.xlu0 0
    %2831 = vperm.xlu0 %2830, %v2392
    %v2832 = vpop.permute.xlu0 %2831
    %2835 = vset.pattern.permute.xlu0 0
    %2836 = vperm.xlu0 %2835, %v2394
    %v2837 = vpop.permute.xlu0 %2836
    %2840 = vset.pattern.permute.xlu0 0
    %2841 = vperm.xlu0 %2840, %v2396
    %v2842 = vpop.permute.xlu0 %2841
    %2845 = vset.pattern.permute.xlu0 0
    %2846 = vperm.xlu0 %2845, %v2398
    %v2847 = vpop.permute.xlu0 %2846
    %2850 = vset.pattern.permute.xlu0 0
    %2851 = vperm.xlu0 %2850, %v2400
    %v2852 = vpop.permute.xlu0 %2851
    %2855 = vset.pattern.permute.xlu0 0
    %2856 = vperm.xlu0 %2855, %v2402
    %v2857 = vpop.permute.xlu0 %2856
    %2860 = vset.pattern.permute.xlu0 0
    %2861 = vperm.xlu0 %2860, %v2404
    %v2862 = vpop.permute.xlu0 %2861
    %2865 = vset.pattern.permute.xlu0 0
    %2866 = vperm.xlu0 %2865, %v2406
    %v2867 = vpop.permute.xlu0 %2866
    %2870 = vset.pattern.permute.xlu0 0
    %2871 = vperm.xlu0 %2870, %v2408
    %v2872 = vpop.permute.xlu0 %2871
    %2875 = vset.pattern.permute.xlu0 0
    %2876 = vperm.xlu0 %2875, %v2410
    %v2877 = vpop.permute.xlu0 %2876
    %2880 = vset.pattern.permute.xlu0 0
    %2881 = vperm.xlu0 %2880, %v2412
    %v2882 = vpop.permute.xlu0 %2881
    %2885 = vset.pattern.permute.xlu0 0
    %2886 = vperm.xlu0 %2885, %v2414
    %v2887 = vpop.permute.xlu0 %2886
    %2890 = vset.pattern.permute.xlu0 0
    %2891 = vperm.xlu0 %2890, %v2416
    %v2892 = vpop.permute.xlu0 %2891
    %2895 = vset.pattern.permute.xlu0 0
    %2896 = vperm.xlu0 %2895, %v2418
    %v2897 = vpop.permute.xlu0 %2896
    %v2899 = vmul.f32 %v595, %v2422
    %v2900 = vmul.f32 %v596, %v2422
    %v2901 = vmul.f32 %v597, %v2427
    %v2902 = vmul.f32 %v598, %v2427
    %v2903 = vmul.f32 %v599, %v2432
    %v2904 = vmul.f32 %v600, %v2432
    %v2905 = vmul.f32 %v601, %v2437
    %v2906 = vmul.f32 %v602, %v2437
    %v2907 = vmul.f32 %v603, %v2442
    %v2908 = vmul.f32 %v604, %v2442
    %v2909 = vmul.f32 %v605, %v2447
    %v2910 = vmul.f32 %v606, %v2447
    %v2911 = vmul.f32 %v607, %v2452
    %v2912 = vmul.f32 %v608, %v2452
    %v2913 = vmul.f32 %v609, %v2457
    %v2914 = vmul.f32 %v610, %v2457
    %v2915 = vmul.f32 %v611, %v2462
    %v2916 = vmul.f32 %v612, %v2462
    %v2917 = vmul.f32 %v613, %v2467
    %v2918 = vmul.f32 %v614, %v2467
    %v2919 = vmul.f32 %v615, %v2472
    %v2920 = vmul.f32 %v616, %v2472
    %v2921 = vmul.f32 %v617, %v2477
    %v2922 = vmul.f32 %v618, %v2477
    %v2923 = vmul.f32 %v619, %v2482
    %v2924 = vmul.f32 %v620, %v2482
    %v2925 = vmul.f32 %v621, %v2487
    %v2926 = vmul.f32 %v622, %v2487
    %v2927 = vmul.f32 %v623, %v2492
    %v2928 = vmul.f32 %v624, %v2492
    %v2929 = vmul.f32 %v625, %v2497
    %v2930 = vmul.f32 %v626, %v2497
    %v2931 = vmul.f32 %v627, %v2502
    %v2932 = vmul.f32 %v628, %v2502
    %v2933 = vmul.f32 %v629, %v2507
    %v2934 = vmul.f32 %v630, %v2507
    %v2935 = vmul.f32 %v631, %v2512
    %v2936 = vmul.f32 %v632, %v2512
    %v2937 = vmul.f32 %v633, %v2517
    %v2938 = vmul.f32 %v634, %v2517
    %v2939 = vmul.f32 %v635, %v2522
    %v2940 = vmul.f32 %v636, %v2522
    %v2941 = vmul.f32 %v637, %v2527
    %v2942 = vmul.f32 %v638, %v2527
    %v2943 = vmul.f32 %v639, %v2532
    %v2944 = vmul.f32 %v640, %v2532
    %v2945 = vmul.f32 %v641, %v2537
    %v2946 = vmul.f32 %v642, %v2537
    %v2947 = vmul.f32 %v643, %v2542
    %v2948 = vmul.f32 %v644, %v2542
    %v2949 = vmul.f32 %v645, %v2547
    %v2950 = vmul.f32 %v646, %v2547
    %v2951 = vmul.f32 %v647, %v2552
    %v2952 = vmul.f32 %v648, %v2552
    %v2953 = vmul.f32 %v649, %v2557
    %v2954 = vmul.f32 %v650, %v2557
    %v2955 = vmul.f32 %v651, %v2562
    %v2956 = vmul.f32 %v652, %v2562
    %v2957 = vmul.f32 %v653, %v2567
    %v2958 = vmul.f32 %v654, %v2567
    %v2959 = vmul.f32 %v655, %v2572
    %v2960 = vmul.f32 %v656, %v2572
    %v2961 = vmul.f32 %v657, %v2577
    %v2962 = vmul.f32 %v658, %v2577
    %v2963 = vmul.f32 %v659, %v2582
    %v2964 = vmul.f32 %v660, %v2582
    %v2965 = vmul.f32 %v661, %v2587
    %v2966 = vmul.f32 %v662, %v2587
    %v2967 = vmul.f32 %v663, %v2592
    %v2968 = vmul.f32 %v664, %v2592
    %v2969 = vmul.f32 %v665, %v2597
    %v2970 = vmul.f32 %v666, %v2597
    %v2971 = vmul.f32 %v667, %v2602
    %v2972 = vmul.f32 %v668, %v2602
    %v2973 = vmul.f32 %v669, %v2607
    %v2974 = vmul.f32 %v670, %v2607
    %v2975 = vmul.f32 %v671, %v2612
    %v2976 = vmul.f32 %v672, %v2612
    %v2977 = vmul.f32 %v673, %v2617
    %v2978 = vmul.f32 %v674, %v2617
    %v2979 = vmul.f32 %v675, %v2622
    %v2980 = vmul.f32 %v676, %v2622
    %v2981 = vmul.f32 %v677, %v2627
    %v2982 = vmul.f32 %v678, %v2627
    %v2983 = vmul.f32 %v679, %v2632
    %v2984 = vmul.f32 %v680, %v2632
    %v2985 = vmul.f32 %v681, %v2637
    %v2986 = vmul.f32 %v682, %v2637
    %v2987 = vmul.f32 %v683, %v2642
    %v2988 = vmul.f32 %v684, %v2642
    %v2989 = vmul.f32 %v685, %v2647
    %v2990 = vmul.f32 %v686, %v2647
    %v2991 = vmul.f32 %v687, %v2652
    %v2992 = vmul.f32 %v688, %v2652
    %v2993 = vmul.f32 %v689, %v2657
    %v2994 = vmul.f32 %v690, %v2657
    %v2995 = vmul.f32 %v691, %v2662
    %v2996 = vmul.f32 %v692, %v2662
    %v2997 = vmul.f32 %v693, %v2667
    %v2998 = vmul.f32 %v694, %v2667
    %v2999 = vmul.f32 %v695, %v2672
    %v3000 = vmul.f32 %v696, %v2672
    %v3001 = vmul.f32 %v697, %v2677
    %v3002 = vmul.f32 %v698, %v2677
    %v3003 = vmul.f32 %v699, %v2682
    %v3004 = vmul.f32 %v700, %v2682
    %v3005 = vmul.f32 %v701, %v2687
    %v3006 = vmul.f32 %v702, %v2687
    %v3007 = vmul.f32 %v703, %v2692
    %v3008 = vmul.f32 %v704, %v2692
    %v3009 = vmul.f32 %v705, %v2697
    %v3010 = vmul.f32 %v706, %v2697
    %v3011 = vmul.f32 %v707, %v2702
    %v3012 = vmul.f32 %v708, %v2702
    %v3013 = vmul.f32 %v709, %v2707
    %v3014 = vmul.f32 %v710, %v2707
    %v3015 = vmul.f32 %v711, %v2712
    %v3016 = vmul.f32 %v712, %v2712
    %v3017 = vmul.f32 %v713, %v2717
    %v3018 = vmul.f32 %v714, %v2717
    %v3019 = vmul.f32 %v715, %v2722
    %v3020 = vmul.f32 %v716, %v2722
    %v3021 = vmul.f32 %v717, %v2727
    %v3022 = vmul.f32 %v718, %v2727
    %v3023 = vmul.f32 %v719, %v2732
    %v3024 = vmul.f32 %v720, %v2732
    %v3025 = vmul.f32 %v721, %v2737
    %v3026 = vmul.f32 %v722, %v2737
    %v3027 = vmul.f32 %v723, %v2742
    %v3028 = vmul.f32 %v724, %v2742
    %v3029 = vmul.f32 %v725, %v2747
    %v3030 = vmul.f32 %v726, %v2747
    %v3031 = vmul.f32 %v727, %v2752
    %v3032 = vmul.f32 %v728, %v2752
    %v3033 = vmul.f32 %v729, %v2757
    %v3034 = vmul.f32 %v730, %v2757
    %v3035 = vmul.f32 %v731, %v2762
    %v3036 = vmul.f32 %v732, %v2762
    %v3037 = vmul.f32 %v733, %v2767
    %v3038 = vmul.f32 %v734, %v2767
    %v3039 = vmul.f32 %v735, %v2772
    %v3040 = vmul.f32 %v736, %v2772
    %v3041 = vmul.f32 %v737, %v2777
    %v3042 = vmul.f32 %v738, %v2777
    %v3043 = vmul.f32 %v739, %v2782
    %v3044 = vmul.f32 %v740, %v2782
    %v3045 = vmul.f32 %v741, %v2787
    %v3046 = vmul.f32 %v742, %v2787
    %v3047 = vmul.f32 %v743, %v2792
    %v3048 = vmul.f32 %v744, %v2792
    %v3049 = vmul.f32 %v745, %v2797
    %v3050 = vmul.f32 %v746, %v2797
    %v3051 = vmul.f32 %v747, %v2802
    %v3052 = vmul.f32 %v748, %v2802
    %v3053 = vmul.f32 %v749, %v2807
    %v3054 = vmul.f32 %v750, %v2807
    %v3055 = vmul.f32 %v751, %v2812
    %v3056 = vmul.f32 %v752, %v2812
    %v3057 = vmul.f32 %v753, %v2817
    %v3058 = vmul.f32 %v754, %v2817
    %v3059 = vmul.f32 %v755, %v2822
    %v3060 = vmul.f32 %v756, %v2822
    %v3061 = vmul.f32 %v757, %v2827
    %v3062 = vmul.f32 %v758, %v2827
    %v3063 = vmul.f32 %v759, %v2832
    %v3064 = vmul.f32 %v760, %v2832
    %v3065 = vmul.f32 %v761, %v2837
    %v3066 = vmul.f32 %v762, %v2837
    %v3067 = vmul.f32 %v763, %v2842
    %v3068 = vmul.f32 %v764, %v2842
    %v3069 = vmul.f32 %v765, %v2847
    %v3070 = vmul.f32 %v766, %v2847
    %v3071 = vmul.f32 %v767, %v2852
    %v3072 = vmul.f32 %v768, %v2852
    %v3073 = vmul.f32 %v769, %v2857
    %v3074 = vmul.f32 %v770, %v2857
    %v3075 = vmul.f32 %v771, %v2862
    %v3076 = vmul.f32 %v772, %v2862
    %v3077 = vmul.f32 %v773, %v2867
    %v3078 = vmul.f32 %v774, %v2867
    %v3079 = vmul.f32 %v775, %v2872
    %v3080 = vmul.f32 %v776, %v2872
    %v3081 = vmul.f32 %v777, %v2877
    %v3082 = vmul.f32 %v778, %v2877
    %v3083 = vmul.f32 %v779, %v2882
    %v3084 = vmul.f32 %v780, %v2882
    %v3085 = vmul.f32 %v781, %v2887
    %v3086 = vmul.f32 %v782, %v2887
    %v3087 = vmul.f32 %v783, %v2892
    %v3088 = vmul.f32 %v784, %v2892
    %v3089 = vmul.f32 %v785, %v2897
    %v3090 = vmul.f32 %v786, %v2897
    %v3091 = vld [vmem:[%s2] sm:$0xff]
    %v3092 = vld [vmem:[%s2 + $0x8] sm:$0xff]
    %v3093 = vld [vmem:[%s2 + $0x10] sm:$0xff]
    %v3094 = vld [vmem:[%s2 + $0x18] sm:$0xff]
    %v3095 = vld [vmem:[%s2 + $0x20] sm:$0xff]
    %v3096 = vld [vmem:[%s2 + $0x28] sm:$0xff]
    %v3097 = vld [vmem:[%s2 + $0x30] sm:$0xff]
    %v3098 = vld [vmem:[%s2 + $0x38] sm:$0xff]
    %v3099 = vld [vmem:[%s2 + $0x40] sm:$0xff]
    %v3100 = vld [vmem:[%s2 + $0x48] sm:$0xff]
    %v3101 = vld [vmem:[%s2 + $0x50] sm:$0xff]
    %v3102 = vld [vmem:[%s2 + $0x58] sm:$0xff]
    %v3103 = vld [vmem:[%s2 + $0x60] sm:$0xff]
    %v3104 = vld [vmem:[%s2 + $0x68] sm:$0xff]
    %v3105 = vld [vmem:[%s2 + $0x70] sm:$0xff]
    %v3106 = vld [vmem:[%s2 + $0x78] sm:$0xff]
    %v3107 = vld [vmem:[%s2 + $0x80] sm:$0xff]
    %v3108 = vld [vmem:[%s2 + $0x88] sm:$0xff]
    %v3109 = vld [vmem:[%s2 + $0x90] sm:$0xff]
    %v3110 = vld [vmem:[%s2 + $0x98] sm:$0xff]
    %v3111 = vld [vmem:[%s2 + $0xa0] sm:$0xff]
    %v3112 = vld [vmem:[%s2 + $0xa8] sm:$0xff]
    %v3113 = vld [vmem:[%s2 + $0xb0] sm:$0xff]
    %v3114 = vld [vmem:[%s2 + $0xb8] sm:$0xff]
    %v3115 = vld [vmem:[%s2 + $0xc0] sm:$0xff]
    %v3116 = vld [vmem:[%s2 + $0xc8] sm:$0xff]
    %v3117 = vld [vmem:[%s2 + $0xd0] sm:$0xff]
    %v3118 = vld [vmem:[%s2 + $0xd8] sm:$0xff]
    %v3119 = vld [vmem:[%s2 + $0xe0] sm:$0xff]
    %v3120 = vld [vmem:[%s2 + $0xe8] sm:$0xff]
    %v3121 = vld [vmem:[%s2 + $0xf0] sm:$0xff]
    %v3122 = vld [vmem:[%s2 + $0xf8] sm:$0xff]
    %v3123 = vld [vmem:[%s2 + $0x100] sm:$0xff]
    %v3124 = vld [vmem:[%s2 + $0x108] sm:$0xff]
    %v3125 = vld [vmem:[%s2 + $0x110] sm:$0xff]
    %v3126 = vld [vmem:[%s2 + $0x118] sm:$0xff]
    %v3127 = vld [vmem:[%s2 + $0x120] sm:$0xff]
    %v3128 = vld [vmem:[%s2 + $0x128] sm:$0xff]
    %v3129 = vld [vmem:[%s2 + $0x130] sm:$0xff]
    %v3130 = vld [vmem:[%s2 + $0x138] sm:$0xff]
    %v3131 = vld [vmem:[%s2 + $0x140] sm:$0xff]
    %v3132 = vld [vmem:[%s2 + $0x148] sm:$0xff]
    %v3133 = vld [vmem:[%s2 + $0x150] sm:$0xff]
    %v3134 = vld [vmem:[%s2 + $0x158] sm:$0xff]
    %v3135 = vld [vmem:[%s2 + $0x160] sm:$0xff]
    %v3136 = vld [vmem:[%s2 + $0x168] sm:$0xff]
    %v3137 = vld [vmem:[%s2 + $0x170] sm:$0xff]
    %v3138 = vld [vmem:[%s2 + $0x178] sm:$0xff]
    %v3139 = vld [vmem:[%s2 + $0x180] sm:$0xff]
    %v3140 = vld [vmem:[%s2 + $0x188] sm:$0xff]
    %v3141 = vld [vmem:[%s2 + $0x190] sm:$0xff]
    %v3142 = vld [vmem:[%s2 + $0x198] sm:$0xff]
    %v3143 = vld [vmem:[%s2 + $0x1a0] sm:$0xff]
    %v3144 = vld [vmem:[%s2 + $0x1a8] sm:$0xff]
    %v3145 = vld [vmem:[%s2 + $0x1b0] sm:$0xff]
    %v3146 = vld [vmem:[%s2 + $0x1b8] sm:$0xff]
    %v3147 = vld [vmem:[%s2 + $0x1c0] sm:$0xff]
    %v3148 = vld [vmem:[%s2 + $0x1c8] sm:$0xff]
    %v3149 = vld [vmem:[%s2 + $0x1d0] sm:$0xff]
    %v3150 = vld [vmem:[%s2 + $0x1d8] sm:$0xff]
    %v3151 = vld [vmem:[%s2 + $0x1e0] sm:$0xff]
    %v3152 = vld [vmem:[%s2 + $0x1e8] sm:$0xff]
    %v3153 = vld [vmem:[%s2 + $0x1f0] sm:$0xff]
    %v3154 = vld [vmem:[%s2 + $0x1f8] sm:$0xff]
    %v3155 = vld [vmem:[%s2 + $0x200] sm:$0xff]
    %v3156 = vld [vmem:[%s2 + $0x208] sm:$0xff]
    %v3157 = vld [vmem:[%s2 + $0x210] sm:$0xff]
    %v3158 = vld [vmem:[%s2 + $0x218] sm:$0xff]
    %v3159 = vld [vmem:[%s2 + $0x220] sm:$0xff]
    %v3160 = vld [vmem:[%s2 + $0x228] sm:$0xff]
    %v3161 = vld [vmem:[%s2 + $0x230] sm:$0xff]
    %v3162 = vld [vmem:[%s2 + $0x238] sm:$0xff]
    %v3163 = vld [vmem:[%s2 + $0x240] sm:$0xff]
    %v3164 = vld [vmem:[%s2 + $0x248] sm:$0xff]
    %v3165 = vld [vmem:[%s2 + $0x250] sm:$0xff]
    %v3166 = vld [vmem:[%s2 + $0x258] sm:$0xff]
    %v3167 = vld [vmem:[%s2 + $0x260] sm:$0xff]
    %v3168 = vld [vmem:[%s2 + $0x268] sm:$0xff]
    %v3169 = vld [vmem:[%s2 + $0x270] sm:$0xff]
    %v3170 = vld [vmem:[%s2 + $0x278] sm:$0xff]
    %v3171 = vld [vmem:[%s2 + $0x280] sm:$0xff]
    %v3172 = vld [vmem:[%s2 + $0x288] sm:$0xff]
    %v3173 = vld [vmem:[%s2 + $0x290] sm:$0xff]
    %v3174 = vld [vmem:[%s2 + $0x298] sm:$0xff]
    %v3175 = vld [vmem:[%s2 + $0x2a0] sm:$0xff]
    %v3176 = vld [vmem:[%s2 + $0x2a8] sm:$0xff]
    %v3177 = vld [vmem:[%s2 + $0x2b0] sm:$0xff]
    %v3178 = vld [vmem:[%s2 + $0x2b8] sm:$0xff]
    %v3179 = vld [vmem:[%s2 + $0x2c0] sm:$0xff]
    %v3180 = vld [vmem:[%s2 + $0x2c8] sm:$0xff]
    %v3181 = vld [vmem:[%s2 + $0x2d0] sm:$0xff]
    %v3182 = vld [vmem:[%s2 + $0x2d8] sm:$0xff]
    %v3183 = vld [vmem:[%s2 + $0x2e0] sm:$0xff]
    %v3184 = vld [vmem:[%s2 + $0x2e8] sm:$0xff]
    %v3185 = vld [vmem:[%s2 + $0x2f0] sm:$0xff]
    %v3186 = vld [vmem:[%s2 + $0x2f8] sm:$0xff]
    %3188 = vset.pattern.permute.xlu0 0
    %3189 = vperm.xlu0 %3188, %v3091
    %v3190 = vpop.permute.xlu0 %3189
    %3193 = vset.pattern.permute.xlu0 0
    %3194 = vperm.xlu0 %3193, %v3092
    %v3195 = vpop.permute.xlu0 %3194
    %3198 = vset.pattern.permute.xlu0 0
    %3199 = vperm.xlu0 %3198, %v3093
    %v3200 = vpop.permute.xlu0 %3199
    %3203 = vset.pattern.permute.xlu0 0
    %3204 = vperm.xlu0 %3203, %v3094
    %v3205 = vpop.permute.xlu0 %3204
    %3208 = vset.pattern.permute.xlu0 0
    %3209 = vperm.xlu0 %3208, %v3095
    %v3210 = vpop.permute.xlu0 %3209
    %3213 = vset.pattern.permute.xlu0 0
    %3214 = vperm.xlu0 %3213, %v3096
    %v3215 = vpop.permute.xlu0 %3214
    %3218 = vset.pattern.permute.xlu0 0
    %3219 = vperm.xlu0 %3218, %v3097
    %v3220 = vpop.permute.xlu0 %3219
    %3223 = vset.pattern.permute.xlu0 0
    %3224 = vperm.xlu0 %3223, %v3098
    %v3225 = vpop.permute.xlu0 %3224
    %3228 = vset.pattern.permute.xlu0 0
    %3229 = vperm.xlu0 %3228, %v3099
    %v3230 = vpop.permute.xlu0 %3229
    %3233 = vset.pattern.permute.xlu0 0
    %3234 = vperm.xlu0 %3233, %v3100
    %v3235 = vpop.permute.xlu0 %3234
    %3238 = vset.pattern.permute.xlu0 0
    %3239 = vperm.xlu0 %3238, %v3101
    %v3240 = vpop.permute.xlu0 %3239
    %3243 = vset.pattern.permute.xlu0 0
    %3244 = vperm.xlu0 %3243, %v3102
    %v3245 = vpop.permute.xlu0 %3244
    %3248 = vset.pattern.permute.xlu0 0
    %3249 = vperm.xlu0 %3248, %v3103
    %v3250 = vpop.permute.xlu0 %3249
    %3253 = vset.pattern.permute.xlu0 0
    %3254 = vperm.xlu0 %3253, %v3104
    %v3255 = vpop.permute.xlu0 %3254
    %3258 = vset.pattern.permute.xlu0 0
    %3259 = vperm.xlu0 %3258, %v3105
    %v3260 = vpop.permute.xlu0 %3259
    %3263 = vset.pattern.permute.xlu0 0
    %3264 = vperm.xlu0 %3263, %v3106
    %v3265 = vpop.permute.xlu0 %3264
    %3268 = vset.pattern.permute.xlu0 0
    %3269 = vperm.xlu0 %3268, %v3107
    %v3270 = vpop.permute.xlu0 %3269
    %3273 = vset.pattern.permute.xlu0 0
    %3274 = vperm.xlu0 %3273, %v3108
    %v3275 = vpop.permute.xlu0 %3274
    %3278 = vset.pattern.permute.xlu0 0
    %3279 = vperm.xlu0 %3278, %v3109
    %v3280 = vpop.permute.xlu0 %3279
    %3283 = vset.pattern.permute.xlu0 0
    %3284 = vperm.xlu0 %3283, %v3110
    %v3285 = vpop.permute.xlu0 %3284
    %3288 = vset.pattern.permute.xlu0 0
    %3289 = vperm.xlu0 %3288, %v3111
    %v3290 = vpop.permute.xlu0 %3289
    %3293 = vset.pattern.permute.xlu0 0
    %3294 = vperm.xlu0 %3293, %v3112
    %v3295 = vpop.permute.xlu0 %3294
    %3298 = vset.pattern.permute.xlu0 0
    %3299 = vperm.xlu0 %3298, %v3113
    %v3300 = vpop.permute.xlu0 %3299
    %3303 = vset.pattern.permute.xlu0 0
    %3304 = vperm.xlu0 %3303, %v3114
    %v3305 = vpop.permute.xlu0 %3304
    %3308 = vset.pattern.permute.xlu0 0
    %3309 = vperm.xlu0 %3308, %v3115
    %v3310 = vpop.permute.xlu0 %3309
    %3313 = vset.pattern.permute.xlu0 0
    %3314 = vperm.xlu0 %3313, %v3116
    %v3315 = vpop.permute.xlu0 %3314
    %3318 = vset.pattern.permute.xlu0 0
    %3319 = vperm.xlu0 %3318, %v3117
    %v3320 = vpop.permute.xlu0 %3319
    %3323 = vset.pattern.permute.xlu0 0
    %3324 = vperm.xlu0 %3323, %v3118
    %v3325 = vpop.permute.xlu0 %3324
    %3328 = vset.pattern.permute.xlu0 0
    %3329 = vperm.xlu0 %3328, %v3119
    %v3330 = vpop.permute.xlu0 %3329
    %3333 = vset.pattern.permute.xlu0 0
    %3334 = vperm.xlu0 %3333, %v3120
    %v3335 = vpop.permute.xlu0 %3334
    %3338 = vset.pattern.permute.xlu0 0
    %3339 = vperm.xlu0 %3338, %v3121
    %v3340 = vpop.permute.xlu0 %3339
    %3343 = vset.pattern.permute.xlu0 0
    %3344 = vperm.xlu0 %3343, %v3122
    %v3345 = vpop.permute.xlu0 %3344
    %3348 = vset.pattern.permute.xlu0 0
    %3349 = vperm.xlu0 %3348, %v3123
    %v3350 = vpop.permute.xlu0 %3349
    %3353 = vset.pattern.permute.xlu0 0
    %3354 = vperm.xlu0 %3353, %v3124
    %v3355 = vpop.permute.xlu0 %3354
    %3358 = vset.pattern.permute.xlu0 0
    %3359 = vperm.xlu0 %3358, %v3125
    %v3360 = vpop.permute.xlu0 %3359
    %3363 = vset.pattern.permute.xlu0 0
    %3364 = vperm.xlu0 %3363, %v3126
    %v3365 = vpop.permute.xlu0 %3364
    %3368 = vset.pattern.permute.xlu0 0
    %3369 = vperm.xlu0 %3368, %v3127
    %v3370 = vpop.permute.xlu0 %3369
    %3373 = vset.pattern.permute.xlu0 0
    %3374 = vperm.xlu0 %3373, %v3128
    %v3375 = vpop.permute.xlu0 %3374
    %3378 = vset.pattern.permute.xlu0 0
    %3379 = vperm.xlu0 %3378, %v3129
    %v3380 = vpop.permute.xlu0 %3379
    %3383 = vset.pattern.permute.xlu0 0
    %3384 = vperm.xlu0 %3383, %v3130
    %v3385 = vpop.permute.xlu0 %3384
    %3388 = vset.pattern.permute.xlu0 0
    %3389 = vperm.xlu0 %3388, %v3131
    %v3390 = vpop.permute.xlu0 %3389
    %3393 = vset.pattern.permute.xlu0 0
    %3394 = vperm.xlu0 %3393, %v3132
    %v3395 = vpop.permute.xlu0 %3394
    %3398 = vset.pattern.permute.xlu0 0
    %3399 = vperm.xlu0 %3398, %v3133
    %v3400 = vpop.permute.xlu0 %3399
    %3403 = vset.pattern.permute.xlu0 0
    %3404 = vperm.xlu0 %3403, %v3134
    %v3405 = vpop.permute.xlu0 %3404
    %3408 = vset.pattern.permute.xlu0 0
    %3409 = vperm.xlu0 %3408, %v3135
    %v3410 = vpop.permute.xlu0 %3409
    %3413 = vset.pattern.permute.xlu0 0
    %3414 = vperm.xlu0 %3413, %v3136
    %v3415 = vpop.permute.xlu0 %3414
    %3418 = vset.pattern.permute.xlu0 0
    %3419 = vperm.xlu0 %3418, %v3137
    %v3420 = vpop.permute.xlu0 %3419
    %3423 = vset.pattern.permute.xlu0 0
    %3424 = vperm.xlu0 %3423, %v3138
    %v3425 = vpop.permute.xlu0 %3424
    %3428 = vset.pattern.permute.xlu0 0
    %3429 = vperm.xlu0 %3428, %v3139
    %v3430 = vpop.permute.xlu0 %3429
    %3433 = vset.pattern.permute.xlu0 0
    %3434 = vperm.xlu0 %3433, %v3140
    %v3435 = vpop.permute.xlu0 %3434
    %3438 = vset.pattern.permute.xlu0 0
    %3439 = vperm.xlu0 %3438, %v3141
    %v3440 = vpop.permute.xlu0 %3439
    %3443 = vset.pattern.permute.xlu0 0
    %3444 = vperm.xlu0 %3443, %v3142
    %v3445 = vpop.permute.xlu0 %3444
    %3448 = vset.pattern.permute.xlu0 0
    %3449 = vperm.xlu0 %3448, %v3143
    %v3450 = vpop.permute.xlu0 %3449
    %3453 = vset.pattern.permute.xlu0 0
    %3454 = vperm.xlu0 %3453, %v3144
    %v3455 = vpop.permute.xlu0 %3454
    %3458 = vset.pattern.permute.xlu0 0
    %3459 = vperm.xlu0 %3458, %v3145
    %v3460 = vpop.permute.xlu0 %3459
    %3463 = vset.pattern.permute.xlu0 0
    %3464 = vperm.xlu0 %3463, %v3146
    %v3465 = vpop.permute.xlu0 %3464
    %3468 = vset.pattern.permute.xlu0 0
    %3469 = vperm.xlu0 %3468, %v3147
    %v3470 = vpop.permute.xlu0 %3469
    %3473 = vset.pattern.permute.xlu0 0
    %3474 = vperm.xlu0 %3473, %v3148
    %v3475 = vpop.permute.xlu0 %3474
    %3478 = vset.pattern.permute.xlu0 0
    %3479 = vperm.xlu0 %3478, %v3149
    %v3480 = vpop.permute.xlu0 %3479
    %3483 = vset.pattern.permute.xlu0 0
    %3484 = vperm.xlu0 %3483, %v3150
    %v3485 = vpop.permute.xlu0 %3484
    %3488 = vset.pattern.permute.xlu0 0
    %3489 = vperm.xlu0 %3488, %v3151
    %v3490 = vpop.permute.xlu0 %3489
    %3493 = vset.pattern.permute.xlu0 0
    %3494 = vperm.xlu0 %3493, %v3152
    %v3495 = vpop.permute.xlu0 %3494
    %3498 = vset.pattern.permute.xlu0 0
    %3499 = vperm.xlu0 %3498, %v3153
    %v3500 = vpop.permute.xlu0 %3499
    %3503 = vset.pattern.permute.xlu0 0
    %3504 = vperm.xlu0 %3503, %v3154
    %v3505 = vpop.permute.xlu0 %3504
    %3508 = vset.pattern.permute.xlu0 0
    %3509 = vperm.xlu0 %3508, %v3155
    %v3510 = vpop.permute.xlu0 %3509
    %3513 = vset.pattern.permute.xlu0 0
    %3514 = vperm.xlu0 %3513, %v3156
    %v3515 = vpop.permute.xlu0 %3514
    %3518 = vset.pattern.permute.xlu0 0
    %3519 = vperm.xlu0 %3518, %v3157
    %v3520 = vpop.permute.xlu0 %3519
    %3523 = vset.pattern.permute.xlu0 0
    %3524 = vperm.xlu0 %3523, %v3158
    %v3525 = vpop.permute.xlu0 %3524
    %3528 = vset.pattern.permute.xlu0 0
    %3529 = vperm.xlu0 %3528, %v3159
    %v3530 = vpop.permute.xlu0 %3529
    %3533 = vset.pattern.permute.xlu0 0
    %3534 = vperm.xlu0 %3533, %v3160
    %v3535 = vpop.permute.xlu0 %3534
    %3538 = vset.pattern.permute.xlu0 0
    %3539 = vperm.xlu0 %3538, %v3161
    %v3540 = vpop.permute.xlu0 %3539
    %3543 = vset.pattern.permute.xlu0 0
    %3544 = vperm.xlu0 %3543, %v3162
    %v3545 = vpop.permute.xlu0 %3544
    %3548 = vset.pattern.permute.xlu0 0
    %3549 = vperm.xlu0 %3548, %v3163
    %v3550 = vpop.permute.xlu0 %3549
    %3553 = vset.pattern.permute.xlu0 0
    %3554 = vperm.xlu0 %3553, %v3164
    %v3555 = vpop.permute.xlu0 %3554
    %3558 = vset.pattern.permute.xlu0 0
    %3559 = vperm.xlu0 %3558, %v3165
    %v3560 = vpop.permute.xlu0 %3559
    %3563 = vset.pattern.permute.xlu0 0
    %3564 = vperm.xlu0 %3563, %v3166
    %v3565 = vpop.permute.xlu0 %3564
    %3568 = vset.pattern.permute.xlu0 0
    %3569 = vperm.xlu0 %3568, %v3167
    %v3570 = vpop.permute.xlu0 %3569
    %3573 = vset.pattern.permute.xlu0 0
    %3574 = vperm.xlu0 %3573, %v3168
    %v3575 = vpop.permute.xlu0 %3574
    %3578 = vset.pattern.permute.xlu0 0
    %3579 = vperm.xlu0 %3578, %v3169
    %v3580 = vpop.permute.xlu0 %3579
    %3583 = vset.pattern.permute.xlu0 0
    %3584 = vperm.xlu0 %3583, %v3170
    %v3585 = vpop.permute.xlu0 %3584
    %3588 = vset.pattern.permute.xlu0 0
    %3589 = vperm.xlu0 %3588, %v3171
    %v3590 = vpop.permute.xlu0 %3589
    %3593 = vset.pattern.permute.xlu0 0
    %3594 = vperm.xlu0 %3593, %v3172
    %v3595 = vpop.permute.xlu0 %3594
    %3598 = vset.pattern.permute.xlu0 0
    %3599 = vperm.xlu0 %3598, %v3173
    %v3600 = vpop.permute.xlu0 %3599
    %3603 = vset.pattern.permute.xlu0 0
    %3604 = vperm.xlu0 %3603, %v3174
    %v3605 = vpop.permute.xlu0 %3604
    %3608 = vset.pattern.permute.xlu0 0
    %3609 = vperm.xlu0 %3608, %v3175
    %v3610 = vpop.permute.xlu0 %3609
    %3613 = vset.pattern.permute.xlu0 0
    %3614 = vperm.xlu0 %3613, %v3176
    %v3615 = vpop.permute.xlu0 %3614
    %3618 = vset.pattern.permute.xlu0 0
    %3619 = vperm.xlu0 %3618, %v3177
    %v3620 = vpop.permute.xlu0 %3619
    %3623 = vset.pattern.permute.xlu0 0
    %3624 = vperm.xlu0 %3623, %v3178
    %v3625 = vpop.permute.xlu0 %3624
    %3628 = vset.pattern.permute.xlu0 0
    %3629 = vperm.xlu0 %3628, %v3179
    %v3630 = vpop.permute.xlu0 %3629
    %3633 = vset.pattern.permute.xlu0 0
    %3634 = vperm.xlu0 %3633, %v3180
    %v3635 = vpop.permute.xlu0 %3634
    %3638 = vset.pattern.permute.xlu0 0
    %3639 = vperm.xlu0 %3638, %v3181
    %v3640 = vpop.permute.xlu0 %3639
    %3643 = vset.pattern.permute.xlu0 0
    %3644 = vperm.xlu0 %3643, %v3182
    %v3645 = vpop.permute.xlu0 %3644
    %3648 = vset.pattern.permute.xlu0 0
    %3649 = vperm.xlu0 %3648, %v3183
    %v3650 = vpop.permute.xlu0 %3649
    %3653 = vset.pattern.permute.xlu0 0
    %3654 = vperm.xlu0 %3653, %v3184
    %v3655 = vpop.permute.xlu0 %3654
    %3658 = vset.pattern.permute.xlu0 0
    %3659 = vperm.xlu0 %3658, %v3185
    %v3660 = vpop.permute.xlu0 %3659
    %3663 = vset.pattern.permute.xlu0 0
    %3664 = vperm.xlu0 %3663, %v3186
    %v3665 = vpop.permute.xlu0 %3664
    %v3667 = vadd.f32 %v2899, %v3190
    %v3668 = vadd.f32 %v2900, %v3190
    %v3669 = vadd.f32 %v2901, %v3195
    %v3670 = vadd.f32 %v2902, %v3195
    %v3671 = vadd.f32 %v2903, %v3200
    %v3672 = vadd.f32 %v2904, %v3200
    %v3673 = vadd.f32 %v2905, %v3205
    %v3674 = vadd.f32 %v2906, %v3205
    %v3675 = vadd.f32 %v2907, %v3210
    %v3676 = vadd.f32 %v2908, %v3210
    %v3677 = vadd.f32 %v2909, %v3215
    %v3678 = vadd.f32 %v2910, %v3215
    %v3679 = vadd.f32 %v2911, %v3220
    %v3680 = vadd.f32 %v2912, %v3220
    %v3681 = vadd.f32 %v2913, %v3225
    %v3682 = vadd.f32 %v2914, %v3225
    %v3683 = vadd.f32 %v2915, %v3230
    %v3684 = vadd.f32 %v2916, %v3230
    %v3685 = vadd.f32 %v2917, %v3235
    %v3686 = vadd.f32 %v2918, %v3235
    %v3687 = vadd.f32 %v2919, %v3240
    %v3688 = vadd.f32 %v2920, %v3240
    %v3689 = vadd.f32 %v2921, %v3245
    %v3690 = vadd.f32 %v2922, %v3245
    %v3691 = vadd.f32 %v2923, %v3250
    %v3692 = vadd.f32 %v2924, %v3250
    %v3693 = vadd.f32 %v2925, %v3255
    %v3694 = vadd.f32 %v2926, %v3255
    %v3695 = vadd.f32 %v2927, %v3260
    %v3696 = vadd.f32 %v2928, %v3260
    %v3697 = vadd.f32 %v2929, %v3265
    %v3698 = vadd.f32 %v2930, %v3265
    %v3699 = vadd.f32 %v2931, %v3270
    %v3700 = vadd.f32 %v2932, %v3270
    %v3701 = vadd.f32 %v2933, %v3275
    %v3702 = vadd.f32 %v2934, %v3275
    %v3703 = vadd.f32 %v2935, %v3280
    %v3704 = vadd.f32 %v2936, %v3280
    %v3705 = vadd.f32 %v2937, %v3285
    %v3706 = vadd.f32 %v2938, %v3285
    %v3707 = vadd.f32 %v2939, %v3290
    %v3708 = vadd.f32 %v2940, %v3290
    %v3709 = vadd.f32 %v2941, %v3295
    %v3710 = vadd.f32 %v2942, %v3295
    %v3711 = vadd.f32 %v2943, %v3300
    %v3712 = vadd.f32 %v2944, %v3300
    %v3713 = vadd.f32 %v2945, %v3305
    %v3714 = vadd.f32 %v2946, %v3305
    %v3715 = vadd.f32 %v2947, %v3310
    %v3716 = vadd.f32 %v2948, %v3310
    %v3717 = vadd.f32 %v2949, %v3315
    %v3718 = vadd.f32 %v2950, %v3315
    %v3719 = vadd.f32 %v2951, %v3320
    %v3720 = vadd.f32 %v2952, %v3320
    %v3721 = vadd.f32 %v2953, %v3325
    %v3722 = vadd.f32 %v2954, %v3325
    %v3723 = vadd.f32 %v2955, %v3330
    %v3724 = vadd.f32 %v2956, %v3330
    %v3725 = vadd.f32 %v2957, %v3335
    %v3726 = vadd.f32 %v2958, %v3335
    %v3727 = vadd.f32 %v2959, %v3340
    %v3728 = vadd.f32 %v2960, %v3340
    %v3729 = vadd.f32 %v2961, %v3345
    %v3730 = vadd.f32 %v2962, %v3345
    %v3731 = vadd.f32 %v2963, %v3350
    %v3732 = vadd.f32 %v2964, %v3350
    %v3733 = vadd.f32 %v2965, %v3355
    %v3734 = vadd.f32 %v2966, %v3355
    %v3735 = vadd.f32 %v2967, %v3360
    %v3736 = vadd.f32 %v2968, %v3360
    %v3737 = vadd.f32 %v2969, %v3365
    %v3738 = vadd.f32 %v2970, %v3365
    %v3739 = vadd.f32 %v2971, %v3370
    %v3740 = vadd.f32 %v2972, %v3370
    %v3741 = vadd.f32 %v2973, %v3375
    %v3742 = vadd.f32 %v2974, %v3375
    %v3743 = vadd.f32 %v2975, %v3380
    %v3744 = vadd.f32 %v2976, %v3380
    %v3745 = vadd.f32 %v2977, %v3385
    %v3746 = vadd.f32 %v2978, %v3385
    %v3747 = vadd.f32 %v2979, %v3390
    %v3748 = vadd.f32 %v2980, %v3390
    %v3749 = vadd.f32 %v2981, %v3395
    %v3750 = vadd.f32 %v2982, %v3395
    %v3751 = vadd.f32 %v2983, %v3400
    %v3752 = vadd.f32 %v2984, %v3400
    %v3753 = vadd.f32 %v2985, %v3405
    %v3754 = vadd.f32 %v2986, %v3405
    %v3755 = vadd.f32 %v2987, %v3410
    %v3756 = vadd.f32 %v2988, %v3410
    %v3757 = vadd.f32 %v2989, %v3415
    %v3758 = vadd.f32 %v2990, %v3415
    %v3759 = vadd.f32 %v2991, %v3420
    %v3760 = vadd.f32 %v2992, %v3420
    %v3761 = vadd.f32 %v2993, %v3425
    %v3762 = vadd.f32 %v2994, %v3425
    %v3763 = vadd.f32 %v2995, %v3430
    %v3764 = vadd.f32 %v2996, %v3430
    %v3765 = vadd.f32 %v2997, %v3435
    %v3766 = vadd.f32 %v2998, %v3435
    %v3767 = vadd.f32 %v2999, %v3440
    %v3768 = vadd.f32 %v3000, %v3440
    %v3769 = vadd.f32 %v3001, %v3445
    %v3770 = vadd.f32 %v3002, %v3445
    %v3771 = vadd.f32 %v3003, %v3450
    %v3772 = vadd.f32 %v3004, %v3450
    %v3773 = vadd.f32 %v3005, %v3455
    %v3774 = vadd.f32 %v3006, %v3455
    %v3775 = vadd.f32 %v3007, %v3460
    %v3776 = vadd.f32 %v3008, %v3460
    %v3777 = vadd.f32 %v3009, %v3465
    %v3778 = vadd.f32 %v3010, %v3465
    %v3779 = vadd.f32 %v3011, %v3470
    %v3780 = vadd.f32 %v3012, %v3470
    %v3781 = vadd.f32 %v3013, %v3475
    %v3782 = vadd.f32 %v3014, %v3475
    %v3783 = vadd.f32 %v3015, %v3480
    %v3784 = vadd.f32 %v3016, %v3480
    %v3785 = vadd.f32 %v3017, %v3485
    %v3786 = vadd.f32 %v3018, %v3485
    %v3787 = vadd.f32 %v3019, %v3490
    %v3788 = vadd.f32 %v3020, %v3490
    %v3789 = vadd.f32 %v3021, %v3495
    %v3790 = vadd.f32 %v3022, %v3495
    %v3791 = vadd.f32 %v3023, %v3500
    %v3792 = vadd.f32 %v3024, %v3500
    %v3793 = vadd.f32 %v3025, %v3505
    %v3794 = vadd.f32 %v3026, %v3505
    %v3795 = vadd.f32 %v3027, %v3510
    %v3796 = vadd.f32 %v3028, %v3510
    %v3797 = vadd.f32 %v3029, %v3515
    %v3798 = vadd.f32 %v3030, %v3515
    %v3799 = vadd.f32 %v3031, %v3520
    %v3800 = vadd.f32 %v3032, %v3520
    %v3801 = vadd.f32 %v3033, %v3525
    %v3802 = vadd.f32 %v3034, %v3525
    %v3803 = vadd.f32 %v3035, %v3530
    %v3804 = vadd.f32 %v3036, %v3530
    %v3805 = vadd.f32 %v3037, %v3535
    %v3806 = vadd.f32 %v3038, %v3535
    %v3807 = vadd.f32 %v3039, %v3540
    %v3808 = vadd.f32 %v3040, %v3540
    %v3809 = vadd.f32 %v3041, %v3545
    %v3810 = vadd.f32 %v3042, %v3545
    %v3811 = vadd.f32 %v3043, %v3550
    %v3812 = vadd.f32 %v3044, %v3550
    %v3813 = vadd.f32 %v3045, %v3555
    %v3814 = vadd.f32 %v3046, %v3555
    %v3815 = vadd.f32 %v3047, %v3560
    %v3816 = vadd.f32 %v3048, %v3560
    %v3817 = vadd.f32 %v3049, %v3565
    %v3818 = vadd.f32 %v3050, %v3565
    %v3819 = vadd.f32 %v3051, %v3570
    %v3820 = vadd.f32 %v3052, %v3570
    %v3821 = vadd.f32 %v3053, %v3575
    %v3822 = vadd.f32 %v3054, %v3575
    %v3823 = vadd.f32 %v3055, %v3580
    %v3824 = vadd.f32 %v3056, %v3580
    %v3825 = vadd.f32 %v3057, %v3585
    %v3826 = vadd.f32 %v3058, %v3585
    %v3827 = vadd.f32 %v3059, %v3590
    %v3828 = vadd.f32 %v3060, %v3590
    %v3829 = vadd.f32 %v3061, %v3595
    %v3830 = vadd.f32 %v3062, %v3595
    %v3831 = vadd.f32 %v3063, %v3600
    %v3832 = vadd.f32 %v3064, %v3600
    %v3833 = vadd.f32 %v3065, %v3605
    %v3834 = vadd.f32 %v3066, %v3605
    %v3835 = vadd.f32 %v3067, %v3610
    %v3836 = vadd.f32 %v3068, %v3610
    %v3837 = vadd.f32 %v3069, %v3615
    %v3838 = vadd.f32 %v3070, %v3615
    %v3839 = vadd.f32 %v3071, %v3620
    %v3840 = vadd.f32 %v3072, %v3620
    %v3841 = vadd.f32 %v3073, %v3625
    %v3842 = vadd.f32 %v3074, %v3625
    %v3843 = vadd.f32 %v3075, %v3630
    %v3844 = vadd.f32 %v3076, %v3630
    %v3845 = vadd.f32 %v3077, %v3635
    %v3846 = vadd.f32 %v3078, %v3635
    %v3847 = vadd.f32 %v3079, %v3640
    %v3848 = vadd.f32 %v3080, %v3640
    %v3849 = vadd.f32 %v3081, %v3645
    %v3850 = vadd.f32 %v3082, %v3645
    %v3851 = vadd.f32 %v3083, %v3650
    %v3852 = vadd.f32 %v3084, %v3650
    %v3853 = vadd.f32 %v3085, %v3655
    %v3854 = vadd.f32 %v3086, %v3655
    %v3855 = vadd.f32 %v3087, %v3660
    %v3856 = vadd.f32 %v3088, %v3660
    %v3857 = vadd.f32 %v3089, %v3665
    %v3858 = vadd.f32 %v3090, %v3665
    %v3859 = vmax.f32 %v3667, 0.0
    %v3860 = vmax.f32 %v3668, 0.0
    %v3861 = vmax.f32 %v3669, 0.0
    %v3862 = vmax.f32 %v3670, 0.0
    %v3863 = vmax.f32 %v3671, 0.0
    %v3864 = vmax.f32 %v3672, 0.0
    %v3865 = vmax.f32 %v3673, 0.0
    %v3866 = vmax.f32 %v3674, 0.0
    %v3867 = vmax.f32 %v3675, 0.0
    %v3868 = vmax.f32 %v3676, 0.0
    %v3869 = vmax.f32 %v3677, 0.0
    %v3870 = vmax.f32 %v3678, 0.0
    %v3871 = vmax.f32 %v3679, 0.0
    %v3872 = vmax.f32 %v3680, 0.0
    %v3873 = vmax.f32 %v3681, 0.0
    %v3874 = vmax.f32 %v3682, 0.0
    %v3875 = vmax.f32 %v3683, 0.0
    %v3876 = vmax.f32 %v3684, 0.0
    %v3877 = vmax.f32 %v3685, 0.0
    %v3878 = vmax.f32 %v3686, 0.0
    %v3879 = vmax.f32 %v3687, 0.0
    %v3880 = vmax.f32 %v3688, 0.0
    %v3881 = vmax.f32 %v3689, 0.0
    %v3882 = vmax.f32 %v3690, 0.0
    %v3883 = vmax.f32 %v3691, 0.0
    %v3884 = vmax.f32 %v3692, 0.0
    %v3885 = vmax.f32 %v3693, 0.0
    %v3886 = vmax.f32 %v3694, 0.0
    %v3887 = vmax.f32 %v3695, 0.0
    %v3888 = vmax.f32 %v3696, 0.0
    %v3889 = vmax.f32 %v3697, 0.0
    %v3890 = vmax.f32 %v3698, 0.0
    %v3891 = vmax.f32 %v3699, 0.0
    %v3892 = vmax.f32 %v3700, 0.0
    %v3893 = vmax.f32 %v3701, 0.0
    %v3894 = vmax.f32 %v3702, 0.0
    %v3895 = vmax.f32 %v3703, 0.0
    %v3896 = vmax.f32 %v3704, 0.0
    %v3897 = vmax.f32 %v3705, 0.0
    %v3898 = vmax.f32 %v3706, 0.0
    %v3899 = vmax.f32 %v3707, 0.0
    %v3900 = vmax.f32 %v3708, 0.0
    %v3901 = vmax.f32 %v3709, 0.0
    %v3902 = vmax.f32 %v3710, 0.0
    %v3903 = vmax.f32 %v3711, 0.0
    %v3904 = vmax.f32 %v3712, 0.0
    %v3905 = vmax.f32 %v3713, 0.0
    %v3906 = vmax.f32 %v3714, 0.0
    %v3907 = vmax.f32 %v3715, 0.0
    %v3908 = vmax.f32 %v3716, 0.0
    %v3909 = vmax.f32 %v3717, 0.0
    %v3910 = vmax.f32 %v3718, 0.0
    %v3911 = vmax.f32 %v3719, 0.0
    %v3912 = vmax.f32 %v3720, 0.0
    %v3913 = vmax.f32 %v3721, 0.0
    %v3914 = vmax.f32 %v3722, 0.0
    %v3915 = vmax.f32 %v3723, 0.0
    %v3916 = vmax.f32 %v3724, 0.0
    %v3917 = vmax.f32 %v3725, 0.0
    %v3918 = vmax.f32 %v3726, 0.0
    %v3919 = vmax.f32 %v3727, 0.0
    %v3920 = vmax.f32 %v3728, 0.0
    %v3921 = vmax.f32 %v3729, 0.0
    %v3922 = vmax.f32 %v3730, 0.0
    %v3923 = vmax.f32 %v3731, 0.0
    %v3924 = vmax.f32 %v3732, 0.0
    %v3925 = vmax.f32 %v3733, 0.0
    %v3926 = vmax.f32 %v3734, 0.0
    %v3927 = vmax.f32 %v3735, 0.0
    %v3928 = vmax.f32 %v3736, 0.0
    %v3929 = vmax.f32 %v3737, 0.0
    %v3930 = vmax.f32 %v3738, 0.0
    %v3931 = vmax.f32 %v3739, 0.0
    %v3932 = vmax.f32 %v3740, 0.0
    %v3933 = vmax.f32 %v3741, 0.0
    %v3934 = vmax.f32 %v3742, 0.0
    %v3935 = vmax.f32 %v3743, 0.0
    %v3936 = vmax.f32 %v3744, 0.0
    %v3937 = vmax.f32 %v3745, 0.0
    %v3938 = vmax.f32 %v3746, 0.0
    %v3939 = vmax.f32 %v3747, 0.0
    %v3940 = vmax.f32 %v3748, 0.0
    %v3941 = vmax.f32 %v3749, 0.0
    %v3942 = vmax.f32 %v3750, 0.0
    %v3943 = vmax.f32 %v3751, 0.0
    %v3944 = vmax.f32 %v3752, 0.0
    %v3945 = vmax.f32 %v3753, 0.0
    %v3946 = vmax.f32 %v3754, 0.0
    %v3947 = vmax.f32 %v3755, 0.0
    %v3948 = vmax.f32 %v3756, 0.0
    %v3949 = vmax.f32 %v3757, 0.0
    %v3950 = vmax.f32 %v3758, 0.0
    %v3951 = vmax.f32 %v3759, 0.0
    %v3952 = vmax.f32 %v3760, 0.0
    %v3953 = vmax.f32 %v3761, 0.0
    %v3954 = vmax.f32 %v3762, 0.0
    %v3955 = vmax.f32 %v3763, 0.0
    %v3956 = vmax.f32 %v3764, 0.0
    %v3957 = vmax.f32 %v3765, 0.0
    %v3958 = vmax.f32 %v3766, 0.0
    %v3959 = vmax.f32 %v3767, 0.0
    %v3960 = vmax.f32 %v3768, 0.0
    %v3961 = vmax.f32 %v3769, 0.0
    %v3962 = vmax.f32 %v3770, 0.0
    %v3963 = vmax.f32 %v3771, 0.0
    %v3964 = vmax.f32 %v3772, 0.0
    %v3965 = vmax.f32 %v3773, 0.0
    %v3966 = vmax.f32 %v3774, 0.0
    %v3967 = vmax.f32 %v3775, 0.0
    %v3968 = vmax.f32 %v3776, 0.0
    %v3969 = vmax.f32 %v3777, 0.0
    %v3970 = vmax.f32 %v3778, 0.0
    %v3971 = vmax.f32 %v3779, 0.0
    %v3972 = vmax.f32 %v3780, 0.0
    %v3973 = vmax.f32 %v3781, 0.0
    %v3974 = vmax.f32 %v3782, 0.0
    %v3975 = vmax.f32 %v3783, 0.0
    %v3976 = vmax.f32 %v3784, 0.0
    %v3977 = vmax.f32 %v3785, 0.0
    %v3978 = vmax.f32 %v3786, 0.0
    %v3979 = vmax.f32 %v3787, 0.0
    %v3980 = vmax.f32 %v3788, 0.0
    %v3981 = vmax.f32 %v3789, 0.0
    %v3982 = vmax.f32 %v3790, 0.0
    %v3983 = vmax.f32 %v3791, 0.0
    %v3984 = vmax.f32 %v3792, 0.0
    %v3985 = vmax.f32 %v3793, 0.0
    %v3986 = vmax.f32 %v3794, 0.0
    %v3987 = vmax.f32 %v3795, 0.0
    %v3988 = vmax.f32 %v3796, 0.0
    %v3989 = vmax.f32 %v3797, 0.0
    %v3990 = vmax.f32 %v3798, 0.0
    %v3991 = vmax.f32 %v3799, 0.0
    %v3992 = vmax.f32 %v3800, 0.0
    %v3993 = vmax.f32 %v3801, 0.0
    %v3994 = vmax.f32 %v3802, 0.0
    %v3995 = vmax.f32 %v3803, 0.0
    %v3996 = vmax.f32 %v3804, 0.0
    %v3997 = vmax.f32 %v3805, 0.0
    %v3998 = vmax.f32 %v3806, 0.0
    %v3999 = vmax.f32 %v3807, 0.0
    %v4000 = vmax.f32 %v3808, 0.0
    %v4001 = vmax.f32 %v3809, 0.0
    %v4002 = vmax.f32 %v3810, 0.0
    %v4003 = vmax.f32 %v3811, 0.0
    %v4004 = vmax.f32 %v3812, 0.0
    %v4005 = vmax.f32 %v3813, 0.0
    %v4006 = vmax.f32 %v3814, 0.0
    %v4007 = vmax.f32 %v3815, 0.0
    %v4008 = vmax.f32 %v3816, 0.0
    %v4009 = vmax.f32 %v3817, 0.0
    %v4010 = vmax.f32 %v3818, 0.0
    %v4011 = vmax.f32 %v3819, 0.0
    %v4012 = vmax.f32 %v3820, 0.0
    %v4013 = vmax.f32 %v3821, 0.0
    %v4014 = vmax.f32 %v3822, 0.0
    %v4015 = vmax.f32 %v3823, 0.0
    %v4016 = vmax.f32 %v3824, 0.0
    %v4017 = vmax.f32 %v3825, 0.0
    %v4018 = vmax.f32 %v3826, 0.0
    %v4019 = vmax.f32 %v3827, 0.0
    %v4020 = vmax.f32 %v3828, 0.0
    %v4021 = vmax.f32 %v3829, 0.0
    %v4022 = vmax.f32 %v3830, 0.0
    %v4023 = vmax.f32 %v3831, 0.0
    %v4024 = vmax.f32 %v3832, 0.0
    %v4025 = vmax.f32 %v3833, 0.0
    %v4026 = vmax.f32 %v3834, 0.0
    %v4027 = vmax.f32 %v3835, 0.0
    %v4028 = vmax.f32 %v3836, 0.0
    %v4029 = vmax.f32 %v3837, 0.0
    %v4030 = vmax.f32 %v3838, 0.0
    %v4031 = vmax.f32 %v3839, 0.0
    %v4032 = vmax.f32 %v3840, 0.0
    %v4033 = vmax.f32 %v3841, 0.0
    %v4034 = vmax.f32 %v3842, 0.0
    %v4035 = vmax.f32 %v3843, 0.0
    %v4036 = vmax.f32 %v3844, 0.0
    %v4037 = vmax.f32 %v3845, 0.0
    %v4038 = vmax.f32 %v3846, 0.0
    %v4039 = vmax.f32 %v3847, 0.0
    %v4040 = vmax.f32 %v3848, 0.0
    %v4041 = vmax.f32 %v3849, 0.0
    %v4042 = vmax.f32 %v3850, 0.0
    %v4043 = vmax.f32 %v3851, 0.0
    %v4044 = vmax.f32 %v3852, 0.0
    %v4045 = vmax.f32 %v3853, 0.0
    %v4046 = vmax.f32 %v3854, 0.0
    %v4047 = vmax.f32 %v3855, 0.0
    %v4048 = vmax.f32 %v3856, 0.0
    %v4049 = vmax.f32 %v3857, 0.0
    %v4050 = vmax.f32 %v3858, 0.0
    %4051 = vst [vmem:[#allocation2] sm:$0xff] %v3859
    %4052 = vst [vmem:[#allocation2 + $0x8] sm:$0xff] %v3860
    %4053 = vst [vmem:[#allocation2 + $0x10] sm:$0xff] %v3861
    %4054 = vst [vmem:[#allocation2 + $0x18] sm:$0xff] %v3862
    %4055 = vst [vmem:[#allocation2 + $0x20] sm:$0xff] %v3863
    %4056 = vst [vmem:[#allocation2 + $0x28] sm:$0xff] %v3864
    %4057 = vst [vmem:[#allocation2 + $0x30] sm:$0xff] %v3865
    %4058 = vst [vmem:[#allocation2 + $0x38] sm:$0xff] %v3866
    %4059 = vst [vmem:[#allocation2 + $0x40] sm:$0xff] %v3867
    %4060 = vst [vmem:[#allocation2 + $0x48] sm:$0xff] %v3868
    %4061 = vst [vmem:[#allocation2 + $0x50] sm:$0xff] %v3869
    %4062 = vst [vmem:[#allocation2 + $0x58] sm:$0xff] %v3870
    %4063 = vst [vmem:[#allocation2 + $0x60] sm:$0xff] %v3871
    %4064 = vst [vmem:[#allocation2 + $0x68] sm:$0xff] %v3872
    %4065 = vst [vmem:[#allocation2 + $0x70] sm:$0xff] %v3873
    %4066 = vst [vmem:[#allocation2 + $0x78] sm:$0xff] %v3874
    %4067 = vst [vmem:[#allocation2 + $0x80] sm:$0xff] %v3875
    %4068 = vst [vmem:[#allocation2 + $0x88] sm:$0xff] %v3876
    %4069 = vst [vmem:[#allocation2 + $0x90] sm:$0xff] %v3877
    %4070 = vst [vmem:[#allocation2 + $0x98] sm:$0xff] %v3878
    %4071 = vst [vmem:[#allocation2 + $0xa0] sm:$0xff] %v3879
    %4072 = vst [vmem:[#allocation2 + $0xa8] sm:$0xff] %v3880
    %4073 = vst [vmem:[#allocation2 + $0xb0] sm:$0xff] %v3881
    %4074 = vst [vmem:[#allocation2 + $0xb8] sm:$0xff] %v3882
    %4075 = vst [vmem:[#allocation2 + $0xc0] sm:$0xff] %v3883
    %4076 = vst [vmem:[#allocation2 + $0xc8] sm:$0xff] %v3884
    %4077 = vst [vmem:[#allocation2 + $0xd0] sm:$0xff] %v3885
    %4078 = vst [vmem:[#allocation2 + $0xd8] sm:$0xff] %v3886
    %4079 = vst [vmem:[#allocation2 + $0xe0] sm:$0xff] %v3887
    %4080 = vst [vmem:[#allocation2 + $0xe8] sm:$0xff] %v3888
    %4081 = vst [vmem:[#allocation2 + $0xf0] sm:$0xff] %v3889
    %4082 = vst [vmem:[#allocation2 + $0xf8] sm:$0xff] %v3890
    %4083 = vst [vmem:[#allocation2 + $0x100] sm:$0xff] %v3891
    %4084 = vst [vmem:[#allocation2 + $0x108] sm:$0xff] %v3892
    %4085 = vst [vmem:[#allocation2 + $0x110] sm:$0xff] %v3893
    %4086 = vst [vmem:[#allocation2 + $0x118] sm:$0xff] %v3894
    %4087 = vst [vmem:[#allocation2 + $0x120] sm:$0xff] %v3895
    %4088 = vst [vmem:[#allocation2 + $0x128] sm:$0xff] %v3896
    %4089 = vst [vmem:[#allocation2 + $0x130] sm:$0xff] %v3897
    %4090 = vst [vmem:[#allocation2 + $0x138] sm:$0xff] %v3898
    %4091 = vst [vmem:[#allocation2 + $0x140] sm:$0xff] %v3899
    %4092 = vst [vmem:[#allocation2 + $0x148] sm:$0xff] %v3900
    %4093 = vst [vmem:[#allocation2 + $0x150] sm:$0xff] %v3901
    %4094 = vst [vmem:[#allocation2 + $0x158] sm:$0xff] %v3902
    %4095 = vst [vmem:[#allocation2 + $0x160] sm:$0xff] %v3903
    %4096 = vst [vmem:[#allocation2 + $0x168] sm:$0xff] %v3904
    %4097 = vst [vmem:[#allocation2 + $0x170] sm:$0xff] %v3905
    %4098 = vst [vmem:[#allocation2 + $0x178] sm:$0xff] %v3906
    %4099 = vst [vmem:[#allocation2 + $0x180] sm:$0xff] %v3907
    %4100 = vst [vmem:[#allocation2 + $0x188] sm:$0xff] %v3908
    %4101 = vst [vmem:[#allocation2 + $0x190] sm:$0xff] %v3909
    %4102 = vst [vmem:[#allocation2 + $0x198] sm:$0xff] %v3910
    %4103 = vst [vmem:[#allocation2 + $0x1a0] sm:$0xff] %v3911
    %4104 = vst [vmem:[#allocation2 + $0x1a8] sm:$0xff] %v3912
    %4105 = vst [vmem:[#allocation2 + $0x1b0] sm:$0xff] %v3913
    %4106 = vst [vmem:[#allocation2 + $0x1b8] sm:$0xff] %v3914
    %4107 = vst [vmem:[#allocation2 + $0x1c0] sm:$0xff] %v3915
    %4108 = vst [vmem:[#allocation2 + $0x1c8] sm:$0xff] %v3916
    %4109 = vst [vmem:[#allocation2 + $0x1d0] sm:$0xff] %v3917
    %4110 = vst [vmem:[#allocation2 + $0x1d8] sm:$0xff] %v3918
    %4111 = vst [vmem:[#allocation2 + $0x1e0] sm:$0xff] %v3919
    %4112 = vst [vmem:[#allocation2 + $0x1e8] sm:$0xff] %v3920
    %4113 = vst [vmem:[#allocation2 + $0x1f0] sm:$0xff] %v3921
    %4114 = vst [vmem:[#allocation2 + $0x1f8] sm:$0xff] %v3922
    %4115 = vst [vmem:[#allocation2 + $0x200] sm:$0xff] %v3923
    %4116 = vst [vmem:[#allocation2 + $0x208] sm:$0xff] %v3924
    %4117 = vst [vmem:[#allocation2 + $0x210] sm:$0xff] %v3925
    %4118 = vst [vmem:[#allocation2 + $0x218] sm:$0xff] %v3926
    %4119 = vst [vmem:[#allocation2 + $0x220] sm:$0xff] %v3927
    %4120 = vst [vmem:[#allocation2 + $0x228] sm:$0xff] %v3928
    %4121 = vst [vmem:[#allocation2 + $0x230] sm:$0xff] %v3929
    %4122 = vst [vmem:[#allocation2 + $0x238] sm:$0xff] %v3930
    %4123 = vst [vmem:[#allocation2 + $0x240] sm:$0xff] %v3931
    %4124 = vst [vmem:[#allocation2 + $0x248] sm:$0xff] %v3932
    %4125 = vst [vmem:[#allocation2 + $0x250] sm:$0xff] %v3933
    %4126 = vst [vmem:[#allocation2 + $0x258] sm:$0xff] %v3934
    %4127 = vst [vmem:[#allocation2 + $0x260] sm:$0xff] %v3935
    %4128 = vst [vmem:[#allocation2 + $0x268] sm:$0xff] %v3936
    %4129 = vst [vmem:[#allocation2 + $0x270] sm:$0xff] %v3937
    %4130 = vst [vmem:[#allocation2 + $0x278] sm:$0xff] %v3938
    %4131 = vst [vmem:[#allocation2 + $0x280] sm:$0xff] %v3939
    %4132 = vst [vmem:[#allocation2 + $0x288] sm:$0xff] %v3940
    %4133 = vst [vmem:[#allocation2 + $0x290] sm:$0xff] %v3941
    %4134 = vst [vmem:[#allocation2 + $0x298] sm:$0xff] %v3942
    %4135 = vst [vmem:[#allocation2 + $0x2a0] sm:$0xff] %v3943
    %4136 = vst [vmem:[#allocation2 + $0x2a8] sm:$0xff] %v3944
    %4137 = vst [vmem:[#allocation2 + $0x2b0] sm:$0xff] %v3945
    %4138 = vst [vmem:[#allocation2 + $0x2b8] sm:$0xff] %v3946
    %4139 = vst [vmem:[#allocation2 + $0x2c0] sm:$0xff] %v3947
    %4140 = vst [vmem:[#allocation2 + $0x2c8] sm:$0xff] %v3948
    %4141 = vst [vmem:[#allocation2 + $0x2d0] sm:$0xff] %v3949
    %4142 = vst [vmem:[#allocation2 + $0x2d8] sm:$0xff] %v3950
    %4143 = vst [vmem:[#allocation2 + $0x2e0] sm:$0xff] %v3951
    %4144 = vst [vmem:[#allocation2 + $0x2e8] sm:$0xff] %v3952
    %4145 = vst [vmem:[#allocation2 + $0x2f0] sm:$0xff] %v3953
    %4146 = vst [vmem:[#allocation2 + $0x2f8] sm:$0xff] %v3954
    %4147 = vst [vmem:[#allocation2 + $0x300] sm:$0xff] %v3955
    %4148 = vst [vmem:[#allocation2 + $0x308] sm:$0xff] %v3956
    %4149 = vst [vmem:[#allocation2 + $0x310] sm:$0xff] %v3957
    %4150 = vst [vmem:[#allocation2 + $0x318] sm:$0xff] %v3958
    %4151 = vst [vmem:[#allocation2 + $0x320] sm:$0xff] %v3959
    %4152 = vst [vmem:[#allocation2 + $0x328] sm:$0xff] %v3960
    %4153 = vst [vmem:[#allocation2 + $0x330] sm:$0xff] %v3961
    %4154 = vst [vmem:[#allocation2 + $0x338] sm:$0xff] %v3962
    %4155 = vst [vmem:[#allocation2 + $0x340] sm:$0xff] %v3963
    %4156 = vst [vmem:[#allocation2 + $0x348] sm:$0xff] %v3964
    %4157 = vst [vmem:[#allocation2 + $0x350] sm:$0xff] %v3965
    %4158 = vst [vmem:[#allocation2 + $0x358] sm:$0xff] %v3966
    %4159 = vst [vmem:[#allocation2 + $0x360] sm:$0xff] %v3967
    %4160 = vst [vmem:[#allocation2 + $0x368] sm:$0xff] %v3968
    %4161 = vst [vmem:[#allocation2 + $0x370] sm:$0xff] %v3969
    %4162 = vst [vmem:[#allocation2 + $0x378] sm:$0xff] %v3970
    %4163 = vst [vmem:[#allocation2 + $0x380] sm:$0xff] %v3971
    %4164 = vst [vmem:[#allocation2 + $0x388] sm:$0xff] %v3972
    %4165 = vst [vmem:[#allocation2 + $0x390] sm:$0xff] %v3973
    %4166 = vst [vmem:[#allocation2 + $0x398] sm:$0xff] %v3974
    %4167 = vst [vmem:[#allocation2 + $0x3a0] sm:$0xff] %v3975
    %4168 = vst [vmem:[#allocation2 + $0x3a8] sm:$0xff] %v3976
    %4169 = vst [vmem:[#allocation2 + $0x3b0] sm:$0xff] %v3977
    %4170 = vst [vmem:[#allocation2 + $0x3b8] sm:$0xff] %v3978
    %4171 = vst [vmem:[#allocation2 + $0x3c0] sm:$0xff] %v3979
    %4172 = vst [vmem:[#allocation2 + $0x3c8] sm:$0xff] %v3980
    %4173 = vst [vmem:[#allocation2 + $0x3d0] sm:$0xff] %v3981
    %4174 = vst [vmem:[#allocation2 + $0x3d8] sm:$0xff] %v3982
    %4175 = vst [vmem:[#allocation2 + $0x3e0] sm:$0xff] %v3983
    %4176 = vst [vmem:[#allocation2 + $0x3e8] sm:$0xff] %v3984
    %4177 = vst [vmem:[#allocation2 + $0x3f0] sm:$0xff] %v3985
    %4178 = vst [vmem:[#allocation2 + $0x3f8] sm:$0xff] %v3986
    %4179 = vst [vmem:[#allocation2 + $0x400] sm:$0xff] %v3987
    %4180 = vst [vmem:[#allocation2 + $0x408] sm:$0xff] %v3988
    %4181 = vst [vmem:[#allocation2 + $0x410] sm:$0xff] %v3989
    %4182 = vst [vmem:[#allocation2 + $0x418] sm:$0xff] %v3990
    %4183 = vst [vmem:[#allocation2 + $0x420] sm:$0xff] %v3991
    %4184 = vst [vmem:[#allocation2 + $0x428] sm:$0xff] %v3992
    %4185 = vst [vmem:[#allocation2 + $0x430] sm:$0xff] %v3993
    %4186 = vst [vmem:[#allocation2 + $0x438] sm:$0xff] %v3994
    %4187 = vst [vmem:[#allocation2 + $0x440] sm:$0xff] %v3995
    %4188 = vst [vmem:[#allocation2 + $0x448] sm:$0xff] %v3996
    %4189 = vst [vmem:[#allocation2 + $0x450] sm:$0xff] %v3997
    %4190 = vst [vmem:[#allocation2 + $0x458] sm:$0xff] %v3998
    %4191 = vst [vmem:[#allocation2 + $0x460] sm:$0xff] %v3999
    %4192 = vst [vmem:[#allocation2 + $0x468] sm:$0xff] %v4000
    %4193 = vst [vmem:[#allocation2 + $0x470] sm:$0xff] %v4001
    %4194 = vst [vmem:[#allocation2 + $0x478] sm:$0xff] %v4002
    %4195 = vst [vmem:[#allocation2 + $0x480] sm:$0xff] %v4003
    %4196 = vst [vmem:[#allocation2 + $0x488] sm:$0xff] %v4004
    %4197 = vst [vmem:[#allocation2 + $0x490] sm:$0xff] %v4005
    %4198 = vst [vmem:[#allocation2 + $0x498] sm:$0xff] %v4006
    %4199 = vst [vmem:[#allocation2 + $0x4a0] sm:$0xff] %v4007
    %4200 = vst [vmem:[#allocation2 + $0x4a8] sm:$0xff] %v4008
    %4201 = vst [vmem:[#allocation2 + $0x4b0] sm:$0xff] %v4009
    %4202 = vst [vmem:[#allocation2 + $0x4b8] sm:$0xff] %v4010
    %4203 = vst [vmem:[#allocation2 + $0x4c0] sm:$0xff] %v4011
    %4204 = vst [vmem:[#allocation2 + $0x4c8] sm:$0xff] %v4012
    %4205 = vst [vmem:[#allocation2 + $0x4d0] sm:$0xff] %v4013
    %4206 = vst [vmem:[#allocation2 + $0x4d8] sm:$0xff] %v4014
    %4207 = vst [vmem:[#allocation2 + $0x4e0] sm:$0xff] %v4015
    %4208 = vst [vmem:[#allocation2 + $0x4e8] sm:$0xff] %v4016
    %4209 = vst [vmem:[#allocation2 + $0x4f0] sm:$0xff] %v4017
    %4210 = vst [vmem:[#allocation2 + $0x4f8] sm:$0xff] %v4018
    %4211 = vst [vmem:[#allocation2 + $0x500] sm:$0xff] %v4019
    %4212 = vst [vmem:[#allocation2 + $0x508] sm:$0xff] %v4020
    %4213 = vst [vmem:[#allocation2 + $0x510] sm:$0xff] %v4021
    %4214 = vst [vmem:[#allocation2 + $0x518] sm:$0xff] %v4022
    %4215 = vst [vmem:[#allocation2 + $0x520] sm:$0xff] %v4023
    %4216 = vst [vmem:[#allocation2 + $0x528] sm:$0xff] %v4024
    %4217 = vst [vmem:[#allocation2 + $0x530] sm:$0xff] %v4025
    %4218 = vst [vmem:[#allocation2 + $0x538] sm:$0xff] %v4026
    %4219 = vst [vmem:[#allocation2 + $0x540] sm:$0xff] %v4027
    %4220 = vst [vmem:[#allocation2 + $0x548] sm:$0xff] %v4028
    %4221 = vst [vmem:[#allocation2 + $0x550] sm:$0xff] %v4029
    %4222 = vst [vmem:[#allocation2 + $0x558] sm:$0xff] %v4030
    %4223 = vst [vmem:[#allocation2 + $0x560] sm:$0xff] %v4031
    %4224 = vst [vmem:[#allocation2 + $0x568] sm:$0xff] %v4032
    %4225 = vst [vmem:[#allocation2 + $0x570] sm:$0xff] %v4033
    %4226 = vst [vmem:[#allocation2 + $0x578] sm:$0xff] %v4034
    %4227 = vst [vmem:[#allocation2 + $0x580] sm:$0xff] %v4035
    %4228 = vst [vmem:[#allocation2 + $0x588] sm:$0xff] %v4036
    %4229 = vst [vmem:[#allocation2 + $0x590] sm:$0xff] %v4037
    %4230 = vst [vmem:[#allocation2 + $0x598] sm:$0xff] %v4038
    %4231 = vst [vmem:[#allocation2 + $0x5a0] sm:$0xff] %v4039
    %4232 = vst [vmem:[#allocation2 + $0x5a8] sm:$0xff] %v4040
    %4233 = vst [vmem:[#allocation2 + $0x5b0] sm:$0xff] %v4041
    %4234 = vst [vmem:[#allocation2 + $0x5b8] sm:$0xff] %v4042
    %4235 = vst [vmem:[#allocation2 + $0x5c0] sm:$0xff] %v4043
    %4236 = vst [vmem:[#allocation2 + $0x5c8] sm:$0xff] %v4044
    %4237 = vst [vmem:[#allocation2 + $0x5d0] sm:$0xff] %v4045
    %4238 = vst [vmem:[#allocation2 + $0x5d8] sm:$0xff] %v4046
    %4239 = vst [vmem:[#allocation2 + $0x5e0] sm:$0xff] %v4047
    %4240 = vst [vmem:[#allocation2 + $0x5e8] sm:$0xff] %v4048
    %4241 = vst [vmem:[#allocation2 + $0x5f0] sm:$0xff] %v4049
    %4242 = vst [vmem:[#allocation2 + $0x5f8] sm:$0xff] %v4050
    %vm4243 = vcmask 7168
    %4244 = vst.msk [vmem:[%s4] sm:$0xff] %vm4243, %v499
    %4245 = vst.msk [vmem:[%s4 + $0x8] sm:$0xff] %vm4243, %v500
    %4246 = vst.msk [vmem:[%s4 + $0x10] sm:$0xff] %vm4243, %v501
    %4247 = vst.msk [vmem:[%s4 + $0x18] sm:$0xff] %vm4243, %v502
    %4248 = vst.msk [vmem:[%s4 + $0x20] sm:$0xff] %vm4243, %v503
    %4249 = vst.msk [vmem:[%s4 + $0x28] sm:$0xff] %vm4243, %v504
    %4250 = vst.msk [vmem:[%s4 + $0x30] sm:$0xff] %vm4243, %v505
    %4251 = vst.msk [vmem:[%s4 + $0x38] sm:$0xff] %vm4243, %v506
    %4252 = vst.msk [vmem:[%s4 + $0x40] sm:$0xff] %vm4243, %v507
    %4253 = vst.msk [vmem:[%s4 + $0x48] sm:$0xff] %vm4243, %v508
    %4254 = vst.msk [vmem:[%s4 + $0x50] sm:$0xff] %vm4243, %v509
    %4255 = vst.msk [vmem:[%s4 + $0x58] sm:$0xff] %vm4243, %v510
    %4256 = vst.msk [vmem:[%s4 + $0x60] sm:$0xff] %vm4243, %v511
    %4257 = vst.msk [vmem:[%s4 + $0x68] sm:$0xff] %vm4243, %v512
    %4258 = vst.msk [vmem:[%s4 + $0x70] sm:$0xff] %vm4243, %v513
    %4259 = vst.msk [vmem:[%s4 + $0x78] sm:$0xff] %vm4243, %v514
    %4260 = vst.msk [vmem:[%s4 + $0x80] sm:$0xff] %vm4243, %v515
    %4261 = vst.msk [vmem:[%s4 + $0x88] sm:$0xff] %vm4243, %v516
    %4262 = vst.msk [vmem:[%s4 + $0x90] sm:$0xff] %vm4243, %v517
    %4263 = vst.msk [vmem:[%s4 + $0x98] sm:$0xff] %vm4243, %v518
    %4264 = vst.msk [vmem:[%s4 + $0xa0] sm:$0xff] %vm4243, %v519
    %4265 = vst.msk [vmem:[%s4 + $0xa8] sm:$0xff] %vm4243, %v520
    %4266 = vst.msk [vmem:[%s4 + $0xb0] sm:$0xff] %vm4243, %v521
    %4267 = vst.msk [vmem:[%s4 + $0xb8] sm:$0xff] %vm4243, %v522
    %4268 = vst.msk [vmem:[%s4 + $0xc0] sm:$0xff] %vm4243, %v523
    %4269 = vst.msk [vmem:[%s4 + $0xc8] sm:$0xff] %vm4243, %v524
    %4270 = vst.msk [vmem:[%s4 + $0xd0] sm:$0xff] %vm4243, %v525
    %4271 = vst.msk [vmem:[%s4 + $0xd8] sm:$0xff] %vm4243, %v526
    %4272 = vst.msk [vmem:[%s4 + $0xe0] sm:$0xff] %vm4243, %v527
    %4273 = vst.msk [vmem:[%s4 + $0xe8] sm:$0xff] %vm4243, %v528
    %4274 = vst.msk [vmem:[%s4 + $0xf0] sm:$0xff] %vm4243, %v529
    %4275 = vst.msk [vmem:[%s4 + $0xf8] sm:$0xff] %vm4243, %v530
    %4276 = vst.msk [vmem:[%s4 + $0x100] sm:$0xff] %vm4243, %v531
    %4277 = vst.msk [vmem:[%s4 + $0x108] sm:$0xff] %vm4243, %v532
    %4278 = vst.msk [vmem:[%s4 + $0x110] sm:$0xff] %vm4243, %v533
    %4279 = vst.msk [vmem:[%s4 + $0x118] sm:$0xff] %vm4243, %v534
    %4280 = vst.msk [vmem:[%s4 + $0x120] sm:$0xff] %vm4243, %v535
    %4281 = vst.msk [vmem:[%s4 + $0x128] sm:$0xff] %vm4243, %v536
    %4282 = vst.msk [vmem:[%s4 + $0x130] sm:$0xff] %vm4243, %v537
    %4283 = vst.msk [vmem:[%s4 + $0x138] sm:$0xff] %vm4243, %v538
    %4284 = vst.msk [vmem:[%s4 + $0x140] sm:$0xff] %vm4243, %v539
    %4285 = vst.msk [vmem:[%s4 + $0x148] sm:$0xff] %vm4243, %v540
    %4286 = vst.msk [vmem:[%s4 + $0x150] sm:$0xff] %vm4243, %v541
    %4287 = vst.msk [vmem:[%s4 + $0x158] sm:$0xff] %vm4243, %v542
    %4288 = vst.msk [vmem:[%s4 + $0x160] sm:$0xff] %vm4243, %v543
    %4289 = vst.msk [vmem:[%s4 + $0x168] sm:$0xff] %vm4243, %v544
    %4290 = vst.msk [vmem:[%s4 + $0x170] sm:$0xff] %vm4243, %v545
    %4291 = vst.msk [vmem:[%s4 + $0x178] sm:$0xff] %vm4243, %v546
    %4292 = vst.msk [vmem:[%s4 + $0x180] sm:$0xff] %vm4243, %v547
    %4293 = vst.msk [vmem:[%s4 + $0x188] sm:$0xff] %vm4243, %v548
    %4294 = vst.msk [vmem:[%s4 + $0x190] sm:$0xff] %vm4243, %v549
    %4295 = vst.msk [vmem:[%s4 + $0x198] sm:$0xff] %vm4243, %v550
    %4296 = vst.msk [vmem:[%s4 + $0x1a0] sm:$0xff] %vm4243, %v551
    %4297 = vst.msk [vmem:[%s4 + $0x1a8] sm:$0xff] %vm4243, %v552
    %4298 = vst.msk [vmem:[%s4 + $0x1b0] sm:$0xff] %vm4243, %v553
    %4299 = vst.msk [vmem:[%s4 + $0x1b8] sm:$0xff] %vm4243, %v554
    %4300 = vst.msk [vmem:[%s4 + $0x1c0] sm:$0xff] %vm4243, %v555
    %4301 = vst.msk [vmem:[%s4 + $0x1c8] sm:$0xff] %vm4243, %v556
    %4302 = vst.msk [vmem:[%s4 + $0x1d0] sm:$0xff] %vm4243, %v557
    %4303 = vst.msk [vmem:[%s4 + $0x1d8] sm:$0xff] %vm4243, %v558
    %4304 = vst.msk [vmem:[%s4 + $0x1e0] sm:$0xff] %vm4243, %v559
    %4305 = vst.msk [vmem:[%s4 + $0x1e8] sm:$0xff] %vm4243, %v560
    %4306 = vst.msk [vmem:[%s4 + $0x1f0] sm:$0xff] %vm4243, %v561
    %4307 = vst.msk [vmem:[%s4 + $0x1f8] sm:$0xff] %vm4243, %v562
    %4308 = vst.msk [vmem:[%s4 + $0x200] sm:$0xff] %vm4243, %v563
    %4309 = vst.msk [vmem:[%s4 + $0x208] sm:$0xff] %vm4243, %v564
    %4310 = vst.msk [vmem:[%s4 + $0x210] sm:$0xff] %vm4243, %v565
    %4311 = vst.msk [vmem:[%s4 + $0x218] sm:$0xff] %vm4243, %v566
    %4312 = vst.msk [vmem:[%s4 + $0x220] sm:$0xff] %vm4243, %v567
    %4313 = vst.msk [vmem:[%s4 + $0x228] sm:$0xff] %vm4243, %v568
    %4314 = vst.msk [vmem:[%s4 + $0x230] sm:$0xff] %vm4243, %v569
    %4315 = vst.msk [vmem:[%s4 + $0x238] sm:$0xff] %vm4243, %v570
    %4316 = vst.msk [vmem:[%s4 + $0x240] sm:$0xff] %vm4243, %v571
    %4317 = vst.msk [vmem:[%s4 + $0x248] sm:$0xff] %vm4243, %v572
    %4318 = vst.msk [vmem:[%s4 + $0x250] sm:$0xff] %vm4243, %v573
    %4319 = vst.msk [vmem:[%s4 + $0x258] sm:$0xff] %vm4243, %v574
    %4320 = vst.msk [vmem:[%s4 + $0x260] sm:$0xff] %vm4243, %v575
    %4321 = vst.msk [vmem:[%s4 + $0x268] sm:$0xff] %vm4243, %v576
    %4322 = vst.msk [vmem:[%s4 + $0x270] sm:$0xff] %vm4243, %v577
    %4323 = vst.msk [vmem:[%s4 + $0x278] sm:$0xff] %vm4243, %v578
    %4324 = vst.msk [vmem:[%s4 + $0x280] sm:$0xff] %vm4243, %v579
    %4325 = vst.msk [vmem:[%s4 + $0x288] sm:$0xff] %vm4243, %v580
    %4326 = vst.msk [vmem:[%s4 + $0x290] sm:$0xff] %vm4243, %v581
    %4327 = vst.msk [vmem:[%s4 + $0x298] sm:$0xff] %vm4243, %v582
    %4328 = vst.msk [vmem:[%s4 + $0x2a0] sm:$0xff] %vm4243, %v583
    %4329 = vst.msk [vmem:[%s4 + $0x2a8] sm:$0xff] %vm4243, %v584
    %4330 = vst.msk [vmem:[%s4 + $0x2b0] sm:$0xff] %vm4243, %v585
    %4331 = vst.msk [vmem:[%s4 + $0x2b8] sm:$0xff] %vm4243, %v586
    %4332 = vst.msk [vmem:[%s4 + $0x2c0] sm:$0xff] %vm4243, %v587
    %4333 = vst.msk [vmem:[%s4 + $0x2c8] sm:$0xff] %vm4243, %v588
    %4334 = vst.msk [vmem:[%s4 + $0x2d0] sm:$0xff] %vm4243, %v589
    %4335 = vst.msk [vmem:[%s4 + $0x2d8] sm:$0xff] %vm4243, %v590
    %4336 = vst.msk [vmem:[%s4 + $0x2e0] sm:$0xff] %vm4243, %v591
    %4337 = vst.msk [vmem:[%s4 + $0x2e8] sm:$0xff] %vm4243, %v592
    %4338 = vst.msk [vmem:[%s4 + $0x2f0] sm:$0xff] %vm4243, %v593
    %4339 = vst.msk [vmem:[%s4 + $0x2f8] sm:$0xff] %vm4243, %v594
    %4340 = vst.msk [vmem:[%s5] sm:$0xff] %vm4243, %v1465
    %4341 = vst.msk [vmem:[%s5 + $0x8] sm:$0xff] %vm4243, %v1472
    %4342 = vst.msk [vmem:[%s5 + $0x10] sm:$0xff] %vm4243, %v1479
    %4343 = vst.msk [vmem:[%s5 + $0x18] sm:$0xff] %vm4243, %v1486
    %4344 = vst.msk [vmem:[%s5 + $0x20] sm:$0xff] %vm4243, %v1493
    %4345 = vst.msk [vmem:[%s5 + $0x28] sm:$0xff] %vm4243, %v1500
    %4346 = vst.msk [vmem:[%s5 + $0x30] sm:$0xff] %vm4243, %v1507
    %4347 = vst.msk [vmem:[%s5 + $0x38] sm:$0xff] %vm4243, %v1514
    %4348 = vst.msk [vmem:[%s5 + $0x40] sm:$0xff] %vm4243, %v1521
    %4349 = vst.msk [vmem:[%s5 + $0x48] sm:$0xff] %vm4243, %v1528
    %4350 = vst.msk [vmem:[%s5 + $0x50] sm:$0xff] %vm4243, %v1535
    %4351 = vst.msk [vmem:[%s5 + $0x58] sm:$0xff] %vm4243, %v1542
    %4352 = vst.msk [vmem:[%s5 + $0x60] sm:$0xff] %vm4243, %v1549
    %4353 = vst.msk [vmem:[%s5 + $0x68] sm:$0xff] %vm4243, %v1556
    %4354 = vst.msk [vmem:[%s5 + $0x70] sm:$0xff] %vm4243, %v1563
    %4355 = vst.msk [vmem:[%s5 + $0x78] sm:$0xff] %vm4243, %v1570
    %4356 = vst.msk [vmem:[%s5 + $0x80] sm:$0xff] %vm4243, %v1577
    %4357 = vst.msk [vmem:[%s5 + $0x88] sm:$0xff] %vm4243, %v1584
    %4358 = vst.msk [vmem:[%s5 + $0x90] sm:$0xff] %vm4243, %v1591
    %4359 = vst.msk [vmem:[%s5 + $0x98] sm:$0xff] %vm4243, %v1598
    %4360 = vst.msk [vmem:[%s5 + $0xa0] sm:$0xff] %vm4243, %v1605
    %4361 = vst.msk [vmem:[%s5 + $0xa8] sm:$0xff] %vm4243, %v1612
    %4362 = vst.msk [vmem:[%s5 + $0xb0] sm:$0xff] %vm4243, %v1619
    %4363 = vst.msk [vmem:[%s5 + $0xb8] sm:$0xff] %vm4243, %v1626
    %4364 = vst.msk [vmem:[%s5 + $0xc0] sm:$0xff] %vm4243, %v1633
    %4365 = vst.msk [vmem:[%s5 + $0xc8] sm:$0xff] %vm4243, %v1640
    %4366 = vst.msk [vmem:[%s5 + $0xd0] sm:$0xff] %vm4243, %v1647
    %4367 = vst.msk [vmem:[%s5 + $0xd8] sm:$0xff] %vm4243, %v1654
    %4368 = vst.msk [vmem:[%s5 + $0xe0] sm:$0xff] %vm4243, %v1661
    %4369 = vst.msk [vmem:[%s5 + $0xe8] sm:$0xff] %vm4243, %v1668
    %4370 = vst.msk [vmem:[%s5 + $0xf0] sm:$0xff] %vm4243, %v1675
    %4371 = vst.msk [vmem:[%s5 + $0xf8] sm:$0xff] %vm4243, %v1682
    %4372 = vst.msk [vmem:[%s5 + $0x100] sm:$0xff] %vm4243, %v1689
    %4373 = vst.msk [vmem:[%s5 + $0x108] sm:$0xff] %vm4243, %v1696
    %4374 = vst.msk [vmem:[%s5 + $0x110] sm:$0xff] %vm4243, %v1703
    %4375 = vst.msk [vmem:[%s5 + $0x118] sm:$0xff] %vm4243, %v1710
    %4376 = vst.msk [vmem:[%s5 + $0x120] sm:$0xff] %vm4243, %v1717
    %4377 = vst.msk [vmem:[%s5 + $0x128] sm:$0xff] %vm4243, %v1724
    %4378 = vst.msk [vmem:[%s5 + $0x130] sm:$0xff] %vm4243, %v1731
    %4379 = vst.msk [vmem:[%s5 + $0x138] sm:$0xff] %vm4243, %v1738
    %4380 = vst.msk [vmem:[%s5 + $0x140] sm:$0xff] %vm4243, %v1745
    %4381 = vst.msk [vmem:[%s5 + $0x148] sm:$0xff] %vm4243, %v1752
    %4382 = vst.msk [vmem:[%s5 + $0x150] sm:$0xff] %vm4243, %v1759
    %4383 = vst.msk [vmem:[%s5 + $0x158] sm:$0xff] %vm4243, %v1766
    %4384 = vst.msk [vmem:[%s5 + $0x160] sm:$0xff] %vm4243, %v1773
    %4385 = vst.msk [vmem:[%s5 + $0x168] sm:$0xff] %vm4243, %v1780
    %4386 = vst.msk [vmem:[%s5 + $0x170] sm:$0xff] %vm4243, %v1787
    %4387 = vst.msk [vmem:[%s5 + $0x178] sm:$0xff] %vm4243, %v1794
    %4388 = vst.msk [vmem:[%s5 + $0x180] sm:$0xff] %vm4243, %v1801
    %4389 = vst.msk [vmem:[%s5 + $0x188] sm:$0xff] %vm4243, %v1808
    %4390 = vst.msk [vmem:[%s5 + $0x190] sm:$0xff] %vm4243, %v1815
    %4391 = vst.msk [vmem:[%s5 + $0x198] sm:$0xff] %vm4243, %v1822
    %4392 = vst.msk [vmem:[%s5 + $0x1a0] sm:$0xff] %vm4243, %v1829
    %4393 = vst.msk [vmem:[%s5 + $0x1a8] sm:$0xff] %vm4243, %v1836
    %4394 = vst.msk [vmem:[%s5 + $0x1b0] sm:$0xff] %vm4243, %v1843
    %4395 = vst.msk [vmem:[%s5 + $0x1b8] sm:$0xff] %vm4243, %v1850
    %4396 = vst.msk [vmem:[%s5 + $0x1c0] sm:$0xff] %vm4243, %v1857
    %4397 = vst.msk [vmem:[%s5 + $0x1c8] sm:$0xff] %vm4243, %v1864
    %4398 = vst.msk [vmem:[%s5 + $0x1d0] sm:$0xff] %vm4243, %v1871
    %4399 = vst.msk [vmem:[%s5 + $0x1d8] sm:$0xff] %vm4243, %v1878
    %4400 = vst.msk [vmem:[%s5 + $0x1e0] sm:$0xff] %vm4243, %v1885
    %4401 = vst.msk [vmem:[%s5 + $0x1e8] sm:$0xff] %vm4243, %v1892
    %4402 = vst.msk [vmem:[%s5 + $0x1f0] sm:$0xff] %vm4243, %v1899
    %4403 = vst.msk [vmem:[%s5 + $0x1f8] sm:$0xff] %vm4243, %v1906
    %4404 = vst.msk [vmem:[%s5 + $0x200] sm:$0xff] %vm4243, %v1913
    %4405 = vst.msk [vmem:[%s5 + $0x208] sm:$0xff] %vm4243, %v1920
    %4406 = vst.msk [vmem:[%s5 + $0x210] sm:$0xff] %vm4243, %v1927
    %4407 = vst.msk [vmem:[%s5 + $0x218] sm:$0xff] %vm4243, %v1934
    %4408 = vst.msk [vmem:[%s5 + $0x220] sm:$0xff] %vm4243, %v1941
    %4409 = vst.msk [vmem:[%s5 + $0x228] sm:$0xff] %vm4243, %v1948
    %4410 = vst.msk [vmem:[%s5 + $0x230] sm:$0xff] %vm4243, %v1955
    %4411 = vst.msk [vmem:[%s5 + $0x238] sm:$0xff] %vm4243, %v1962
    %4412 = vst.msk [vmem:[%s5 + $0x240] sm:$0xff] %vm4243, %v1969
    %4413 = vst.msk [vmem:[%s5 + $0x248] sm:$0xff] %vm4243, %v1976
    %4414 = vst.msk [vmem:[%s5 + $0x250] sm:$0xff] %vm4243, %v1983
    %4415 = vst.msk [vmem:[%s5 + $0x258] sm:$0xff] %vm4243, %v1990
    %4416 = vst.msk [vmem:[%s5 + $0x260] sm:$0xff] %vm4243, %v1997
    %4417 = vst.msk [vmem:[%s5 + $0x268] sm:$0xff] %vm4243, %v2004
    %4418 = vst.msk [vmem:[%s5 + $0x270] sm:$0xff] %vm4243, %v2011
    %4419 = vst.msk [vmem:[%s5 + $0x278] sm:$0xff] %vm4243, %v2018
    %4420 = vst.msk [vmem:[%s5 + $0x280] sm:$0xff] %vm4243, %v2025
    %4421 = vst.msk [vmem:[%s5 + $0x288] sm:$0xff] %vm4243, %v2032
    %4422 = vst.msk [vmem:[%s5 + $0x290] sm:$0xff] %vm4243, %v2039
    %4423 = vst.msk [vmem:[%s5 + $0x298] sm:$0xff] %vm4243, %v2046
    %4424 = vst.msk [vmem:[%s5 + $0x2a0] sm:$0xff] %vm4243, %v2053
    %4425 = vst.msk [vmem:[%s5 + $0x2a8] sm:$0xff] %vm4243, %v2060
    %4426 = vst.msk [vmem:[%s5 + $0x2b0] sm:$0xff] %vm4243, %v2067
    %4427 = vst.msk [vmem:[%s5 + $0x2b8] sm:$0xff] %vm4243, %v2074
    %4428 = vst.msk [vmem:[%s5 + $0x2c0] sm:$0xff] %vm4243, %v2081
    %4429 = vst.msk [vmem:[%s5 + $0x2c8] sm:$0xff] %vm4243, %v2088
    %4430 = vst.msk [vmem:[%s5 + $0x2d0] sm:$0xff] %vm4243, %v2095
    %4431 = vst.msk [vmem:[%s5 + $0x2d8] sm:$0xff] %vm4243, %v2102
    %4432 = vst.msk [vmem:[%s5 + $0x2e0] sm:$0xff] %vm4243, %v2109
    %4433 = vst.msk [vmem:[%s5 + $0x2e8] sm:$0xff] %vm4243, %v2116
    %4434 = vst.msk [vmem:[%s5 + $0x2f0] sm:$0xff] %vm4243, %v2123
    %4435 = vst.msk [vmem:[%s5 + $0x2f8] sm:$0xff] %vm4243, %v2130
    // Predicated region
    $region14: #{tpu_custom_call.1} parent=1 // pred_check
      _
    $region15: #{tpu_custom_call.1} parent=1 // pred_check_branch
      %4437 = sbr.rel (0) target = $region17
    $region16: #{tpu_custom_call.1} parent=1 // pred_region
      %s4439 = ssub.s32 24576, 24576
      %4440 = vsyncadd [#allocation3], %s4439
      %s4441 = sshll.u32 [#allocation2], 4
      %s4442 = int_to_ptr.vmem [resolvable:$true] %s4441
      %4447 = dma.vmem_to_hbm [thread:$0]  %s4442, 24576, %s3, [#allocation3], 256, 256, 16
    $region17: #{tpu_custom_call.1} parent=1 // pred_fallthru
      _
    // Predicated region
    $region18: #{tpu_custom_call.1} parent=1 // pred_check
      _
    $region19: #{tpu_custom_call.1} parent=1 // pred_check_branch
      %4449 = sbr.rel (0) target = $region21
    $region20: #{tpu_custom_call.1} parent=1 // pred_region
      _
    $region21: #{tpu_custom_call.1} parent=1 // pred_fallthru
      _
    // Predicated region
    $region22: #{tpu_custom_call.1} parent=1 // pred_check
      _
    $region23: #{tpu_custom_call.1} parent=1 // pred_check_branch
      %4451 = sbr.rel (0) target = $region25
    $region24: #{tpu_custom_call.1} parent=1 // pred_region
      _
    $region25: #{tpu_custom_call.1} parent=1 // pred_fallthru
      _
    // Predicated region
    $region26: #{tpu_custom_call.1} parent=1 // pred_check
      _
    $region27: #{tpu_custom_call.1} parent=1 // pred_check_branch
      %4453 = sbr.rel (0) target = $region29
    $region28: #{tpu_custom_call.1} parent=1 // pred_region
      %4454 = dma.done [#allocation3], 24576
    $region29: #{tpu_custom_call.1} parent=1 // pred_fallthru
      _
    // Predicated region
    $region30: #{tpu_custom_call.1} parent=1 // pred_check
      _
    $region31: #{tpu_custom_call.1} parent=1 // pred_check_branch
      %4456 = sbr.rel (0) target = $region33
    $region32: #{tpu_custom_call.1} parent=1 // pred_region
      _
    $region33: #{tpu_custom_call.1} parent=1 // pred_fallthru
      _
    // Predicated region
    $region34: #{tpu_custom_call.1} parent=1 // pred_check
      _
    $region35: #{tpu_custom_call.1} parent=1 // pred_check_branch
      %4458 = sbr.rel (0) target = $region37
    $region36: #{tpu_custom_call.1} parent=1 // pred_region
      _
    $region37: #{tpu_custom_call.1} parent=1 // pred_fallthru
      _
    %4459 = vsyncpa [#allocation3], 1

</llo_original>
